<compile_context>
chip_gen: v5e
topology: v5e:2x2
jax: 0.10.0
libtpu: 0.0.40
codegen_flags: <defaults>
</compile_context>

<pallas_src>
import math
from functools import partial

import jax
import jax.numpy as jnp
from jax.experimental import pallas as pl
from jax.experimental.pallas import tpu as pltpu


def _round_up(v, m):
    return (v + m - 1) // m * m


def _num_lane_splits():
    """2 on chips with two TensorCores per chip (v7x / v4 / v5p) so a
    'parallel' lane split keeps both cores busy; 1 on single-core chips
    (v5e / v6e) so the whole problem is a single grid step."""
    try:
        kind = jax.devices()[0].device_kind.lower()
    except Exception:
        return 1
    return 2 if ("v7" in kind or "v4" in kind or "v5p" in kind) else 1


def conv_transpose2d_forward(x, w, b, kernel_size=(3, 3), stride=1,
                             num_lane_splits=None):
    """Forward pass of the module's ConvTranspose2d.

    x: (B, C_in, H, W) float32   w: (C_out, C_in, kh, kw)   b: (C_out,)
    returns (B, C_out, H_out, W_out), H_out = 1 + stride*(H-1) + (kh-1).
    """
    x = x.astype(jnp.float32)                     # module does input.float()
    B, C_in, H, W = x.shape
    C_out = b.shape[0]
    kh, kw = kernel_size
    s = stride
    P = kh * kw
    NS = _num_lane_splits() if num_lane_splits is None else num_lane_splits

    # Geometry of the equivalent correlation: dilate by s, pad by (k-1).
    H_out = 1 + s * (H - 1) + (kh - 1)
    W_out = 1 + s * (W - 1) + (kw - 1)
    Hd, Wd = s * (H - 1) + 1, s * (W - 1) + 1
    Hp, Wp = Hd + 2 * (kh - 1), Wd + 2 * (kw - 1)

    COUT_PAD = _round_up(C_out, 8)                # f32 sublane tile for output
    Lc = _round_up(H_out * Wp, 128 * NS)          # lane-dense output width
    Lc_blk = Lc // NS                             # output lanes per grid step
    max_shift = (kh - 1) * Wp + (kw - 1)
    Lxb = _round_up(Lc_blk + max_shift, 128)      # input lanes per grid step
    L_total = (NS - 1) * Lc_blk + Lxb             # always >= Hp*Wp

    # --- weight: faithful reproduction of the module's raw reshape, then a
    #     spatial flip so the transposed conv becomes a plain correlation. ----
    w = w.astype(jnp.float32)
    w_eff = w.reshape(C_in, C_out * kh * kw).T.reshape(C_out, kh, kw, C_in)
    wflip = w_eff[:, ::-1, ::-1, :]                          # (C_out, kh, kw, C_in)
    wk = jnp.transpose(wflip, (1, 2, 0, 3)).reshape(P, C_out, C_in)
    wk = jnp.pad(wk, ((0, 0), (0, COUT_PAD - C_out), (0, 0)))
    wk = wk.astype(jnp.bfloat16)                             # (P, COUT_PAD, C_in)

    bvec = jnp.pad(b.astype(jnp.float32).reshape(C_out, 1),
                   ((0, COUT_PAD - C_out), (0, 0)))          # (COUT_PAD, 1)

    # --- input: dilate + pad + flatten directly in bf16, C_in channels only --
    x_pad = jnp.zeros((B, C_in, Hp, Wp), jnp.bfloat16)
    x_pad = x_pad.at[:, :, kh - 1:kh - 1 + Hd:s, kw - 1:kw - 1 + Wd:s].set(
        x.astype(jnp.bfloat16))
    xflat = jnp.pad(x_pad.reshape(B, C_in, Hp * Wp),
                    ((0, 0), (0, 0), (0, L_total - Hp * Wp)))
    # Per-split overlapping input windows (keeps kernel indexing static and
    # lets each grid step / TensorCore DMA only the lanes it needs).
    if NS == 1:
        xsplit = xflat[:, None]                              # (B, 1, C_in, Lxb)
    else:
        xsplit = jnp.stack(
            [xflat[:, :, h * Lc_blk:h * Lc_blk + Lxb] for h in range(NS)],
            axis=1)                                          # (B, NS, C_in, Lxb)

    def kernel(x_ref, w_ref, b_ref, o_ref):
        # x_ref: (B, 1, C_in, Lxb) bf16   w_ref: (P, COUT_PAD, C_in) bf16
        # b_ref: (COUT_PAD, 1) f32        o_ref: (B, COUT_PAD, Lc_blk) f32
        for bb in range(B):                      # static unroll over batch
            acc = None
            for p in range(P):                   # static unroll over kh*kw
                shift = (p // kw) * Wp + (p % kw)
                xs = x_ref[bb, 0, :, shift:shift + Lc_blk]   # (C_in, Lc_blk)
                d = jnp.dot(w_ref[p], xs,
                            preferred_element_type=jnp.float32)
                acc = d if acc is None else acc + d
            o_ref[bb] = acc + b_ref[...]         # bias broadcasts over lanes

    flops = 2 * B * P * C_out * C_in * H_out * W_out
    bytes_accessed = (B * NS * C_in * Lxb * 2 + P * COUT_PAD * C_in * 2
                      + COUT_PAD * 4 + B * COUT_PAD * Lc * 4)

    out_flat = pl.pallas_call(
        kernel,
        out_shape=jax.ShapeDtypeStruct((B, COUT_PAD, Lc), jnp.float32),
        grid=(NS,),
        in_specs=[
            pl.BlockSpec((B, 1, C_in, Lxb), lambda h: (0, h, 0, 0)),
            pl.BlockSpec((P, COUT_PAD, C_in), lambda h: (0, 0, 0)),
            pl.BlockSpec((COUT_PAD, 1), lambda h: (0, 0)),
        ],
        out_specs=pl.BlockSpec((B, COUT_PAD, Lc_blk), lambda h: (0, 0, h)),
        compiler_params=pltpu.CompilerParams(
            dimension_semantics=("parallel",)),
        cost_estimate=pl.CostEstimate(flops=flops, transcendentals=0,
                                      bytes_accessed=bytes_accessed),
    )(xsplit, wk, bvec)

    # Crop channel / lane padding and un-flatten (pure data movement).
    out = out_flat[:, :C_out, :H_out * Wp]
    out = out.reshape(B, C_out, H_out, Wp)[:, :, :, :W_out]
    return out


def ref_forward(x, w, b, kernel_size=(3, 3), stride=1):
    """Pure-JAX reference reproducing the module's matmul + fold semantics."""
    x = x.astype(jnp.float32)
    B, C_in, H, W = x.shape
    C_out = b.shape[0]
    kh, kw = kernel_size
    s = stride
    H_out = 1 + s * (H - 1) + (kh - 1)
    W_out = 1 + s * (W - 1) + (kw - 1)
    w_eff = w.reshape(C_in, C_out * kh * kw).T.reshape(C_out, kh, kw, C_in)
    out = jnp.zeros((B, C_out, H_out, W_out), dtype=jnp.float32)
    for ki in range(kh):
        for kj in range(kw):
            contrib = jnp.einsum("bchw,oc->bohw", x, w_eff[:, ki, kj, :])
            out = out.at[:, :, ki:ki + s * (H - 1) + 1:s,
                               kj:kj + s * (W - 1) + 1:s].add(contrib)
    return out + b[None, :, None, None]


if __name__ == "__main__":
    # Module config: ConvTranspose2d(in_channels=4, out_channels=6,
    #                                kernel_size=(3, 3), stride=2)
    in_channels, out_channels = 4, 6
    kernel_size = (3, 3)
    stride = 2

    key = jax.random.PRNGKey(0)
    kx, kw_key, kb_key = jax.random.split(key, 3)

    # Deterministic init matching the module's uniform(-sqrt(k), sqrt(k)).
    kval = 1.0 / (out_channels * kernel_size[0] * kernel_size[1])
    bound = math.sqrt(kval)
    w = jax.random.uniform(
        kw_key, (out_channels, in_channels, kernel_size[0], kernel_size[1]),
        jnp.float32, -bound, bound)
    b = jax.random.uniform(kb_key, (out_channels,), jnp.float32, -bound, bound)

    # Example input (NCHW).
    x = jax.random.normal(kx, (2, in_channels, 16, 16), dtype=jnp.float32)

    fwd = jax.jit(partial(conv_transpose2d_forward,
                          kernel_size=kernel_size, stride=stride))
    out = jax.block_until_ready(fwd(x, w, b))

    ref = jax.block_until_ready(ref_forward(x, w, b, kernel_size, stride))
    assert out.shape == ref.shape == (2, out_channels,
                                      1 + stride * 15 + 2, 1 + stride * 15 + 2)
    max_err = float(jnp.max(jnp.abs(out - ref)))
    assert jnp.allclose(out, ref, atol=3e-2, rtol=3e-2), max_err

    print("KERNEL_OK")
</pallas_src>

<mosaic_0001>
module attributes {stable_mosaic.version = 11 : i64} {
  func.func @kernel(%arg0: i32, %arg1: memref<2x1x4x1408xbf16, #tpu.memory_space<vmem>>, %arg2: memref<9x8x4xbf16, #tpu.memory_space<vmem>>, %arg3: memref<8x1xf32, #tpu.memory_space<vmem>>, %arg4: memref<2x8x1280xf32, #tpu.memory_space<vmem>>) attributes {dimension_semantics = [#tpu.dimension_semantics<parallel>], iteration_bounds = array<i64: 1>, scalar_prefetch = 0 : i64, scratch_operands = 0 : i64, tpu.core_type = #tpu.core_type<tc>, window_params = [{transform_indices = @transform_0, window_bounds = array<i64: 2, 1, 4, 1408>}, {pipeline_mode = #tpu.pipeline_mode<synchronous>, transform_indices = @transform_1, window_bounds = array<i64: 9, 8, 4>}, {pipeline_mode = #tpu.pipeline_mode<synchronous>, transform_indices = @transform_2, window_bounds = array<i64: 8, 1>}, {transform_indices = @transform_3, window_bounds = array<i64: 2, 8, 1280>}]} {
    %c0 = arith.constant 0 : index
    %c0_0 = arith.constant 0 : index
    %c0_1 = arith.constant 0 : index
    %c0_2 = arith.constant 0 : index
    %0 = vector.load %arg1[%c0, %c0_0, %c0_1, %c0_2] : memref<2x1x4x1408xbf16, #tpu.memory_space<vmem>>, vector<1x1x4x1280xbf16>
    %1 = vector.shape_cast %0 : vector<1x1x4x1280xbf16> to vector<4x1280xbf16>
    %c0_3 = arith.constant 0 : index
    %c0_4 = arith.constant 0 : index
    %c0_5 = arith.constant 0 : index
    %2 = vector.load %arg2[%c0_3, %c0_4, %c0_5] : memref<9x8x4xbf16, #tpu.memory_space<vmem>>, vector<1x8x4xbf16>
    %3 = vector.shape_cast %2 : vector<1x8x4xbf16> to vector<8x4xbf16>
    %cst = arith.constant dense<0.000000e+00> : vector<8x1280xf32>
    %4 = tpu.matmul %3, %1, %cst {dimension_numbers = #tpu.dot_dimension_numbers<[1], [0], [0], [1], [0, 0, 1, 1], [], []>} : vector<8x4xbf16>, vector<4x1280xbf16>, vector<8x1280xf32> -> vector<8x1280xf32>
    %c0_6 = arith.constant 0 : index
    %c0_7 = arith.constant 0 : index
    %c0_8 = arith.constant 0 : index
    %c1 = arith.constant 1 : index
    %5 = vector.load %arg1[%c0_6, %c0_7, %c0_8, %c1] : memref<2x1x4x1408xbf16, #tpu.memory_space<vmem>>, vector<1x1x4x1280xbf16>
    %6 = vector.shape_cast %5 : vector<1x1x4x1280xbf16> to vector<4x1280xbf16>
    %c1_9 = arith.constant 1 : index
    %c0_10 = arith.constant 0 : index
    %c0_11 = arith.constant 0 : index
    %7 = vector.load %arg2[%c1_9, %c0_10, %c0_11] : memref<9x8x4xbf16, #tpu.memory_space<vmem>>, vector<1x8x4xbf16>
    %8 = vector.shape_cast %7 : vector<1x8x4xbf16> to vector<8x4xbf16>
    %cst_12 = arith.constant dense<0.000000e+00> : vector<8x1280xf32>
    %9 = tpu.matmul %8, %6, %cst_12 {dimension_numbers = #tpu.dot_dimension_numbers<[1], [0], [0], [1], [0, 0, 1, 1], [], []>} : vector<8x4xbf16>, vector<4x1280xbf16>, vector<8x1280xf32> -> vector<8x1280xf32>
    %10 = arith.addf %4, %9 : vector<8x1280xf32>
    %c0_13 = arith.constant 0 : index
    %c0_14 = arith.constant 0 : index
    %c0_15 = arith.constant 0 : index
    %c2 = arith.constant 2 : index
    %11 = vector.load %arg1[%c0_13, %c0_14, %c0_15, %c2] : memref<2x1x4x1408xbf16, #tpu.memory_space<vmem>>, vector<1x1x4x1280xbf16>
    %12 = vector.shape_cast %11 : vector<1x1x4x1280xbf16> to vector<4x1280xbf16>
    %c2_16 = arith.constant 2 : index
    %c0_17 = arith.constant 0 : index
    %c0_18 = arith.constant 0 : index
    %13 = vector.load %arg2[%c2_16, %c0_17, %c0_18] : memref<9x8x4xbf16, #tpu.memory_space<vmem>>, vector<1x8x4xbf16>
    %14 = vector.shape_cast %13 : vector<1x8x4xbf16> to vector<8x4xbf16>
    %cst_19 = arith.constant dense<0.000000e+00> : vector<8x1280xf32>
    %15 = tpu.matmul %14, %12, %cst_19 {dimension_numbers = #tpu.dot_dimension_numbers<[1], [0], [0], [1], [0, 0, 1, 1], [], []>} : vector<8x4xbf16>, vector<4x1280xbf16>, vector<8x1280xf32> -> vector<8x1280xf32>
    %16 = arith.addf %10, %15 : vector<8x1280xf32>
    %c0_20 = arith.constant 0 : index
    %c0_21 = arith.constant 0 : index
    %c0_22 = arith.constant 0 : index
    %c35 = arith.constant 35 : index
    %17 = vector.load %arg1[%c0_20, %c0_21, %c0_22, %c35] : memref<2x1x4x1408xbf16, #tpu.memory_space<vmem>>, vector<1x1x4x1280xbf16>
    %18 = vector.shape_cast %17 : vector<1x1x4x1280xbf16> to vector<4x1280xbf16>
    %c3 = arith.constant 3 : index
    %c0_23 = arith.constant 0 : index
    %c0_24 = arith.constant 0 : index
    %19 = vector.load %arg2[%c3, %c0_23, %c0_24] : memref<9x8x4xbf16, #tpu.memory_space<vmem>>, vector<1x8x4xbf16>
    %20 = vector.shape_cast %19 : vector<1x8x4xbf16> to vector<8x4xbf16>
    %cst_25 = arith.constant dense<0.000000e+00> : vector<8x1280xf32>
    %21 = tpu.matmul %20, %18, %cst_25 {dimension_numbers = #tpu.dot_dimension_numbers<[1], [0], [0], [1], [0, 0, 1, 1], [], []>} : vector<8x4xbf16>, vector<4x1280xbf16>, vector<8x1280xf32> -> vector<8x1280xf32>
    %22 = arith.addf %16, %21 : vector<8x1280xf32>
    %c0_26 = arith.constant 0 : index
    %c0_27 = arith.constant 0 : index
    %c0_28 = arith.constant 0 : index
    %c36 = arith.constant 36 : index
    %23 = vector.load %arg1[%c0_26, %c0_27, %c0_28, %c36] : memref<2x1x4x1408xbf16, #tpu.memory_space<vmem>>, vector<1x1x4x1280xbf16>
    %24 = vector.shape_cast %23 : vector<1x1x4x1280xbf16> to vector<4x1280xbf16>
    %c4 = arith.constant 4 : index
    %c0_29 = arith.constant 0 : index
    %c0_30 = arith.constant 0 : index
    %25 = vector.load %arg2[%c4, %c0_29, %c0_30] : memref<9x8x4xbf16, #tpu.memory_space<vmem>>, vector<1x8x4xbf16>
    %26 = vector.shape_cast %25 : vector<1x8x4xbf16> to vector<8x4xbf16>
    %cst_31 = arith.constant dense<0.000000e+00> : vector<8x1280xf32>
    %27 = tpu.matmul %26, %24, %cst_31 {dimension_numbers = #tpu.dot_dimension_numbers<[1], [0], [0], [1], [0, 0, 1, 1], [], []>} : vector<8x4xbf16>, vector<4x1280xbf16>, vector<8x1280xf32> -> vector<8x1280xf32>
    %28 = arith.addf %22, %27 : vector<8x1280xf32>
    %c0_32 = arith.constant 0 : index
    %c0_33 = arith.constant 0 : index
    %c0_34 = arith.constant 0 : index
    %c37 = arith.constant 37 : index
    %29 = vector.load %arg1[%c0_32, %c0_33, %c0_34, %c37] : memref<2x1x4x1408xbf16, #tpu.memory_space<vmem>>, vector<1x1x4x1280xbf16>
    %30 = vector.shape_cast %29 : vector<1x1x4x1280xbf16> to vector<4x1280xbf16>
    %c5 = arith.constant 5 : index
    %c0_35 = arith.constant 0 : index
    %c0_36 = arith.constant 0 : index
    %31 = vector.load %arg2[%c5, %c0_35, %c0_36] : memref<9x8x4xbf16, #tpu.memory_space<vmem>>, vector<1x8x4xbf16>
    %32 = vector.shape_cast %31 : vector<1x8x4xbf16> to vector<8x4xbf16>
    %cst_37 = arith.constant dense<0.000000e+00> : vector<8x1280xf32>
    %33 = tpu.matmul %32, %30, %cst_37 {dimension_numbers = #tpu.dot_dimension_numbers<[1], [0], [0], [1], [0, 0, 1, 1], [], []>} : vector<8x4xbf16>, vector<4x1280xbf16>, vector<8x1280xf32> -> vector<8x1280xf32>
    %34 = arith.addf %28, %33 : vector<8x1280xf32>
    %c0_38 = arith.constant 0 : index
    %c0_39 = arith.constant 0 : index
    %c0_40 = arith.constant 0 : index
    %c70 = arith.constant 70 : index
    %35 = vector.load %arg1[%c0_38, %c0_39, %c0_40, %c70] : memref<2x1x4x1408xbf16, #tpu.memory_space<vmem>>, vector<1x1x4x1280xbf16>
    %36 = vector.shape_cast %35 : vector<1x1x4x1280xbf16> to vector<4x1280xbf16>
    %c6 = arith.constant 6 : index
    %c0_41 = arith.constant 0 : index
    %c0_42 = arith.constant 0 : index
    %37 = vector.load %arg2[%c6, %c0_41, %c0_42] : memref<9x8x4xbf16, #tpu.memory_space<vmem>>, vector<1x8x4xbf16>
    %38 = vector.shape_cast %37 : vector<1x8x4xbf16> to vector<8x4xbf16>
    %cst_43 = arith.constant dense<0.000000e+00> : vector<8x1280xf32>
    %39 = tpu.matmul %38, %36, %cst_43 {dimension_numbers = #tpu.dot_dimension_numbers<[1], [0], [0], [1], [0, 0, 1, 1], [], []>} : vector<8x4xbf16>, vector<4x1280xbf16>, vector<8x1280xf32> -> vector<8x1280xf32>
    %40 = arith.addf %34, %39 : vector<8x1280xf32>
    %c0_44 = arith.constant 0 : index
    %c0_45 = arith.constant 0 : index
    %c0_46 = arith.constant 0 : index
    %c71 = arith.constant 71 : index
    %41 = vector.load %arg1[%c0_44, %c0_45, %c0_46, %c71] : memref<2x1x4x1408xbf16, #tpu.memory_space<vmem>>, vector<1x1x4x1280xbf16>
    %42 = vector.shape_cast %41 : vector<1x1x4x1280xbf16> to vector<4x1280xbf16>
    %c7 = arith.constant 7 : index
    %c0_47 = arith.constant 0 : index
    %c0_48 = arith.constant 0 : index
    %43 = vector.load %arg2[%c7, %c0_47, %c0_48] : memref<9x8x4xbf16, #tpu.memory_space<vmem>>, vector<1x8x4xbf16>
    %44 = vector.shape_cast %43 : vector<1x8x4xbf16> to vector<8x4xbf16>
    %cst_49 = arith.constant dense<0.000000e+00> : vector<8x1280xf32>
    %45 = tpu.matmul %44, %42, %cst_49 {dimension_numbers = #tpu.dot_dimension_numbers<[1], [0], [0], [1], [0, 0, 1, 1], [], []>} : vector<8x4xbf16>, vector<4x1280xbf16>, vector<8x1280xf32> -> vector<8x1280xf32>
    %46 = arith.addf %40, %45 : vector<8x1280xf32>
    %c0_50 = arith.constant 0 : index
    %c0_51 = arith.constant 0 : index
    %c0_52 = arith.constant 0 : index
    %c72 = arith.constant 72 : index
    %47 = vector.load %arg1[%c0_50, %c0_51, %c0_52, %c72] : memref<2x1x4x1408xbf16, #tpu.memory_space<vmem>>, vector<1x1x4x1280xbf16>
    %48 = vector.shape_cast %47 : vector<1x1x4x1280xbf16> to vector<4x1280xbf16>
    %c8 = arith.constant 8 : index
    %c0_53 = arith.constant 0 : index
    %c0_54 = arith.constant 0 : index
    %49 = vector.load %arg2[%c8, %c0_53, %c0_54] : memref<9x8x4xbf16, #tpu.memory_space<vmem>>, vector<1x8x4xbf16>
    %50 = vector.shape_cast %49 : vector<1x8x4xbf16> to vector<8x4xbf16>
    %cst_55 = arith.constant dense<0.000000e+00> : vector<8x1280xf32>
    %51 = tpu.matmul %50, %48, %cst_55 {dimension_numbers = #tpu.dot_dimension_numbers<[1], [0], [0], [1], [0, 0, 1, 1], [], []>} : vector<8x4xbf16>, vector<4x1280xbf16>, vector<8x1280xf32> -> vector<8x1280xf32>
    %52 = arith.addf %46, %51 : vector<8x1280xf32>
    %c0_56 = arith.constant 0 : index
    %c0_57 = arith.constant 0 : index
    %53 = vector.load %arg3[%c0_56, %c0_57] : memref<8x1xf32, #tpu.memory_space<vmem>>, vector<8x1xf32>
    %54 = vector.broadcast %53 : vector<8x1xf32> to vector<8x1280xf32>
    %55 = arith.addf %52, %54 : vector<8x1280xf32>
    %c0_58 = arith.constant 0 : index
    %c0_59 = arith.constant 0 : index
    %c0_60 = arith.constant 0 : index
    %56 = vector.load %arg4[%c0_58, %c0_59, %c0_60] : memref<2x8x1280xf32, #tpu.memory_space<vmem>>, vector<1x8x1280xf32>
    %57 = vector.shape_cast %56 : vector<1x8x1280xf32> to vector<8x1280xf32>
    %58 = vector.shape_cast %55 : vector<8x1280xf32> to vector<1x8x1280xf32>
    tpu.vector_store %arg4[%c0_58, %c0_59, %c0_60], %58 {strides = array<i32>} : memref<2x8x1280xf32, #tpu.memory_space<vmem>>, vector<1x8x1280xf32>,
    %c1_61 = arith.constant 1 : index
    %c0_62 = arith.constant 0 : index
    %c0_63 = arith.constant 0 : index
    %c0_64 = arith.constant 0 : index
    %59 = vector.load %arg1[%c1_61, %c0_62, %c0_63, %c0_64] : memref<2x1x4x1408xbf16, #tpu.memory_space<vmem>>, vector<1x1x4x1280xbf16>
    %60 = vector.shape_cast %59 : vector<1x1x4x1280xbf16> to vector<4x1280xbf16>
    %c0_65 = arith.constant 0 : index
    %c0_66 = arith.constant 0 : index
    %c0_67 = arith.constant 0 : index
    %61 = vector.load %arg2[%c0_65, %c0_66, %c0_67] : memref<9x8x4xbf16, #tpu.memory_space<vmem>>, vector<1x8x4xbf16>
    %62 = vector.shape_cast %61 : vector<1x8x4xbf16> to vector<8x4xbf16>
    %cst_68 = arith.constant dense<0.000000e+00> : vector<8x1280xf32>
    %63 = tpu.matmul %62, %60, %cst_68 {dimension_numbers = #tpu.dot_dimension_numbers<[1], [0], [0], [1], [0, 0, 1, 1], [], []>} : vector<8x4xbf16>, vector<4x1280xbf16>, vector<8x1280xf32> -> vector<8x1280xf32>
    %c1_69 = arith.constant 1 : index
    %c0_70 = arith.constant 0 : index
    %c0_71 = arith.constant 0 : index
    %c1_72 = arith.constant 1 : index
    %64 = vector.load %arg1[%c1_69, %c0_70, %c0_71, %c1_72] : memref<2x1x4x1408xbf16, #tpu.memory_space<vmem>>, vector<1x1x4x1280xbf16>
    %65 = vector.shape_cast %64 : vector<1x1x4x1280xbf16> to vector<4x1280xbf16>
    %c1_73 = arith.constant 1 : index
    %c0_74 = arith.constant 0 : index
    %c0_75 = arith.constant 0 : index
    %66 = vector.load %arg2[%c1_73, %c0_74, %c0_75] : memref<9x8x4xbf16, #tpu.memory_space<vmem>>, vector<1x8x4xbf16>
    %67 = vector.shape_cast %66 : vector<1x8x4xbf16> to vector<8x4xbf16>
    %cst_76 = arith.constant dense<0.000000e+00> : vector<8x1280xf32>
    %68 = tpu.matmul %67, %65, %cst_76 {dimension_numbers = #tpu.dot_dimension_numbers<[1], [0], [0], [1], [0, 0, 1, 1], [], []>} : vector<8x4xbf16>, vector<4x1280xbf16>, vector<8x1280xf32> -> vector<8x1280xf32>
    %69 = arith.addf %63, %68 : vector<8x1280xf32>
    %c1_77 = arith.constant 1 : index
    %c0_78 = arith.constant 0 : index
    %c0_79 = arith.constant 0 : index
    %c2_80 = arith.constant 2 : index
    %70 = vector.load %arg1[%c1_77, %c0_78, %c0_79, %c2_80] : memref<2x1x4x1408xbf16, #tpu.memory_space<vmem>>, vector<1x1x4x1280xbf16>
    %71 = vector.shape_cast %70 : vector<1x1x4x1280xbf16> to vector<4x1280xbf16>
    %c2_81 = arith.constant 2 : index
    %c0_82 = arith.constant 0 : index
    %c0_83 = arith.constant 0 : index
    %72 = vector.load %arg2[%c2_81, %c0_82, %c0_83] : memref<9x8x4xbf16, #tpu.memory_space<vmem>>, vector<1x8x4xbf16>
    %73 = vector.shape_cast %72 : vector<1x8x4xbf16> to vector<8x4xbf16>
    %cst_84 = arith.constant dense<0.000000e+00> : vector<8x1280xf32>
    %74 = tpu.matmul %73, %71, %cst_84 {dimension_numbers = #tpu.dot_dimension_numbers<[1], [0], [0], [1], [0, 0, 1, 1], [], []>} : vector<8x4xbf16>, vector<4x1280xbf16>, vector<8x1280xf32> -> vector<8x1280xf32>
    %75 = arith.addf %69, %74 : vector<8x1280xf32>
    %c1_85 = arith.constant 1 : index
    %c0_86 = arith.constant 0 : index
    %c0_87 = arith.constant 0 : index
    %c35_88 = arith.constant 35 : index
    %76 = vector.load %arg1[%c1_85, %c0_86, %c0_87, %c35_88] : memref<2x1x4x1408xbf16, #tpu.memory_space<vmem>>, vector<1x1x4x1280xbf16>
    %77 = vector.shape_cast %76 : vector<1x1x4x1280xbf16> to vector<4x1280xbf16>
    %c3_89 = arith.constant 3 : index
    %c0_90 = arith.constant 0 : index
    %c0_91 = arith.constant 0 : index
    %78 = vector.load %arg2[%c3_89, %c0_90, %c0_91] : memref<9x8x4xbf16, #tpu.memory_space<vmem>>, vector<1x8x4xbf16>
    %79 = vector.shape_cast %78 : vector<1x8x4xbf16> to vector<8x4xbf16>
    %cst_92 = arith.constant dense<0.000000e+00> : vector<8x1280xf32>
    %80 = tpu.matmul %79, %77, %cst_92 {dimension_numbers = #tpu.dot_dimension_numbers<[1], [0], [0], [1], [0, 0, 1, 1], [], []>} : vector<8x4xbf16>, vector<4x1280xbf16>, vector<8x1280xf32> -> vector<8x1280xf32>
    %81 = arith.addf %75, %80 : vector<8x1280xf32>
    %c1_93 = arith.constant 1 : index
    %c0_94 = arith.constant 0 : index
    %c0_95 = arith.constant 0 : index
    %c36_96 = arith.constant 36 : index
    %82 = vector.load %arg1[%c1_93, %c0_94, %c0_95, %c36_96] : memref<2x1x4x1408xbf16, #tpu.memory_space<vmem>>, vector<1x1x4x1280xbf16>
    %83 = vector.shape_cast %82 : vector<1x1x4x1280xbf16> to vector<4x1280xbf16>
    %c4_97 = arith.constant 4 : index
    %c0_98 = arith.constant 0 : index
    %c0_99 = arith.constant 0 : index
    %84 = vector.load %arg2[%c4_97, %c0_98, %c0_99] : memref<9x8x4xbf16, #tpu.memory_space<vmem>>, vector<1x8x4xbf16>
    %85 = vector.shape_cast %84 : vector<1x8x4xbf16> to vector<8x4xbf16>
    %cst_100 = arith.constant dense<0.000000e+00> : vector<8x1280xf32>
    %86 = tpu.matmul %85, %83, %cst_100 {dimension_numbers = #tpu.dot_dimension_numbers<[1], [0], [0], [1], [0, 0, 1, 1], [], []>} : vector<8x4xbf16>, vector<4x1280xbf16>, vector<8x1280xf32> -> vector<8x1280xf32>
    %87 = arith.addf %81, %86 : vector<8x1280xf32>
    %c1_101 = arith.constant 1 : index
    %c0_102 = arith.constant 0 : index
    %c0_103 = arith.constant 0 : index
    %c37_104 = arith.constant 37 : index
    %88 = vector.load %arg1[%c1_101, %c0_102, %c0_103, %c37_104] : memref<2x1x4x1408xbf16, #tpu.memory_space<vmem>>, vector<1x1x4x1280xbf16>
    %89 = vector.shape_cast %88 : vector<1x1x4x1280xbf16> to vector<4x1280xbf16>
    %c5_105 = arith.constant 5 : index
    %c0_106 = arith.constant 0 : index
    %c0_107 = arith.constant 0 : index
    %90 = vector.load %arg2[%c5_105, %c0_106, %c0_107] : memref<9x8x4xbf16, #tpu.memory_space<vmem>>, vector<1x8x4xbf16>
    %91 = vector.shape_cast %90 : vector<1x8x4xbf16> to vector<8x4xbf16>
    %cst_108 = arith.constant dense<0.000000e+00> : vector<8x1280xf32>
    %92 = tpu.matmul %91, %89, %cst_108 {dimension_numbers = #tpu.dot_dimension_numbers<[1], [0], [0], [1], [0, 0, 1, 1], [], []>} : vector<8x4xbf16>, vector<4x1280xbf16>, vector<8x1280xf32> -> vector<8x1280xf32>
    %93 = arith.addf %87, %92 : vector<8x1280xf32>
    %c1_109 = arith.constant 1 : index
    %c0_110 = arith.constant 0 : index
    %c0_111 = arith.constant 0 : index
    %c70_112 = arith.constant 70 : index
    %94 = vector.load %arg1[%c1_109, %c0_110, %c0_111, %c70_112] : memref<2x1x4x1408xbf16, #tpu.memory_space<vmem>>, vector<1x1x4x1280xbf16>
    %95 = vector.shape_cast %94 : vector<1x1x4x1280xbf16> to vector<4x1280xbf16>
    %c6_113 = arith.constant 6 : index
    %c0_114 = arith.constant 0 : index
    %c0_115 = arith.constant 0 : index
    %96 = vector.load %arg2[%c6_113, %c0_114, %c0_115] : memref<9x8x4xbf16, #tpu.memory_space<vmem>>, vector<1x8x4xbf16>
    %97 = vector.shape_cast %96 : vector<1x8x4xbf16> to vector<8x4xbf16>
    %cst_116 = arith.constant dense<0.000000e+00> : vector<8x1280xf32>
    %98 = tpu.matmul %97, %95, %cst_116 {dimension_numbers = #tpu.dot_dimension_numbers<[1], [0], [0], [1], [0, 0, 1, 1], [], []>} : vector<8x4xbf16>, vector<4x1280xbf16>, vector<8x1280xf32> -> vector<8x1280xf32>
    %99 = arith.addf %93, %98 : vector<8x1280xf32>
    %c1_117 = arith.constant 1 : index
    %c0_118 = arith.constant 0 : index
    %c0_119 = arith.constant 0 : index
    %c71_120 = arith.constant 71 : index
    %100 = vector.load %arg1[%c1_117, %c0_118, %c0_119, %c71_120] : memref<2x1x4x1408xbf16, #tpu.memory_space<vmem>>, vector<1x1x4x1280xbf16>
    %101 = vector.shape_cast %100 : vector<1x1x4x1280xbf16> to vector<4x1280xbf16>
    %c7_121 = arith.constant 7 : index
    %c0_122 = arith.constant 0 : index
    %c0_123 = arith.constant 0 : index
    %102 = vector.load %arg2[%c7_121, %c0_122, %c0_123] : memref<9x8x4xbf16, #tpu.memory_space<vmem>>, vector<1x8x4xbf16>
    %103 = vector.shape_cast %102 : vector<1x8x4xbf16> to vector<8x4xbf16>
    %cst_124 = arith.constant dense<0.000000e+00> : vector<8x1280xf32>
    %104 = tpu.matmul %103, %101, %cst_124 {dimension_numbers = #tpu.dot_dimension_numbers<[1], [0], [0], [1], [0, 0, 1, 1], [], []>} : vector<8x4xbf16>, vector<4x1280xbf16>, vector<8x1280xf32> -> vector<8x1280xf32>
    %105 = arith.addf %99, %104 : vector<8x1280xf32>
    %c1_125 = arith.constant 1 : index
    %c0_126 = arith.constant 0 : index
    %c0_127 = arith.constant 0 : index
    %c72_128 = arith.constant 72 : index
    %106 = vector.load %arg1[%c1_125, %c0_126, %c0_127, %c72_128] : memref<2x1x4x1408xbf16, #tpu.memory_space<vmem>>, vector<1x1x4x1280xbf16>
    %107 = vector.shape_cast %106 : vector<1x1x4x1280xbf16> to vector<4x1280xbf16>
    %c8_129 = arith.constant 8 : index
    %c0_130 = arith.constant 0 : index
    %c0_131 = arith.constant 0 : index
    %108 = vector.load %arg2[%c8_129, %c0_130, %c0_131] : memref<9x8x4xbf16, #tpu.memory_space<vmem>>, vector<1x8x4xbf16>
    %109 = vector.shape_cast %108 : vector<1x8x4xbf16> to vector<8x4xbf16>
    %cst_132 = arith.constant dense<0.000000e+00> : vector<8x1280xf32>
    %110 = tpu.matmul %109, %107, %cst_132 {dimension_numbers = #tpu.dot_dimension_numbers<[1], [0], [0], [1], [0, 0, 1, 1], [], []>} : vector<8x4xbf16>, vector<4x1280xbf16>, vector<8x1280xf32> -> vector<8x1280xf32>
    %111 = arith.addf %105, %110 : vector<8x1280xf32>
    %c0_133 = arith.constant 0 : index
    %c0_134 = arith.constant 0 : index
    %112 = vector.load %arg3[%c0_133, %c0_134] : memref<8x1xf32, #tpu.memory_space<vmem>>, vector<8x1xf32>
    %113 = vector.broadcast %112 : vector<8x1xf32> to vector<8x1280xf32>
    %114 = arith.addf %111, %113 : vector<8x1280xf32>
    %c1_135 = arith.constant 1 : index
    %c0_136 = arith.constant 0 : index
    %c0_137 = arith.constant 0 : index
    %115 = vector.load %arg4[%c1_135, %c0_136, %c0_137] : memref<2x8x1280xf32, #tpu.memory_space<vmem>>, vector<1x8x1280xf32>
    %116 = vector.shape_cast %115 : vector<1x8x1280xf32> to vector<8x1280xf32>
    %117 = vector.shape_cast %114 : vector<8x1280xf32> to vector<1x8x1280xf32>
    tpu.vector_store %arg4[%c1_135, %c0_136, %c0_137], %117 {strides = array<i32>} : memref<2x8x1280xf32, #tpu.memory_space<vmem>>, vector<1x8x1280xf32>,
    return
  }
  func.func @transform_0(%arg0: i32) -> (i32, i32, i32, i32) {
    %c0_i32 = arith.constant 0 : i32
    %c0_i32_0 = arith.constant 0 : i32
    %c0_i32_1 = arith.constant 0 : i32
    %c0_i32_2 = arith.constant 0 : i32
    return %c0_i32, %arg0, %c0_i32_0, %c0_i32_1 : i32, i32, i32, i32
  }
  func.func @transform_1(%arg0: i32) -> (i32, i32, i32) {
    %c0_i32 = arith.constant 0 : i32
    %c0_i32_0 = arith.constant 0 : i32
    %c0_i32_1 = arith.constant 0 : i32
    %c0_i32_2 = arith.constant 0 : i32
    return %c0_i32, %c0_i32_0, %c0_i32_1 : i32, i32, i32
  }
  func.func @transform_2(%arg0: i32) -> (i32, i32) {
    %c0_i32 = arith.constant 0 : i32
    %c0_i32_0 = arith.constant 0 : i32
    %c0_i32_1 = arith.constant 0 : i32
    return %c0_i32, %c0_i32_0 : i32, i32
  }
  func.func @transform_3(%arg0: i32) -> (i32, i32, i32) {
    %c0_i32 = arith.constant 0 : i32
    %c0_i32_0 = arith.constant 0 : i32
    %c0_i32_1 = arith.constant 0 : i32
    return %c0_i32, %c0_i32_0, %arg0 : i32, i32, i32
  }
}

</mosaic_0001>

<llo_original>
// kernel: conv_transpose2d_forward.1
$region0: #{conv_transpose2d_forward.1}
  #allocation0 [shape = 'u32[]', space=smem, size = 0x4, offset = 0x4, fixed_abs, tag = 'smem constant byte address 0x4 - core index']
  #allocation1 [shape = 'u32[72,128]{1,0:T(1,128)}', space=vmem, size = 0x9000, scoped, tag = 'internal scratch']
  %s0 = inlined_call_operand.vmem [shape: bf16[2,1,4,1408], index: 0, kind: input, shape index: {}]
  %s1 = inlined_call_operand.vmem [shape: bf16[9,8,4], index: 1, kind: input, shape index: {}]
  %s2 = inlined_call_operand.vmem [shape: f32[8,1], index: 2, kind: input, shape index: {}]
  %s3 = inlined_call_operand.vmem [shape: f32[2,8,1280], index: 3, kind: output, shape index: {}]
  %s4 = sld [smem:[#allocation0]]
  $region22: #{conv_transpose2d_forward.1} parent=0
    _
  %s6 = ssub.s32 1, %s4
  %s7 = scalar_select 0, %s6, %s4
  // Predicated region
  $region2: #{conv_transpose2d_forward.1} parent=0 // pred_check
    _
  $region3: #{conv_transpose2d_forward.1} parent=0 // pred_check_branch
    %9 = sbr.rel (0) target = $region5
  $region4: #{conv_transpose2d_forward.1} parent=0 // pred_region
    _
  $region5: #{conv_transpose2d_forward.1} parent=0 // pred_fallthru
    _
  // Predicated region
  $region6: #{conv_transpose2d_forward.1} parent=0 // pred_check
    _
  $region7: #{conv_transpose2d_forward.1} parent=0 // pred_check_branch
    %11 = sbr.rel (0) target = $region9
  $region8: #{conv_transpose2d_forward.1} parent=0 // pred_region
    _
  $region9: #{conv_transpose2d_forward.1} parent=0 // pred_fallthru
    _
  // Predicated region
  $region10: #{conv_transpose2d_forward.1} parent=0 // pred_check
    _
  $region11: #{conv_transpose2d_forward.1} parent=0 // pred_check_branch
    %13 = sbr.rel (0) target = $region13
  $region12: #{conv_transpose2d_forward.1} parent=0 // pred_region
    _
  $region13: #{conv_transpose2d_forward.1} parent=0 // pred_fallthru
    _
  %v15 = vld [vmem:[%s0] sm:$0xff]
  %v16 = vld [vmem:[%s0 + $0x8] sm:$0xff]
  %v17 = vld [vmem:[%s0 + $0x10] sm:$0xf]
  %v18 = vld [vmem:[%s1] sm:$0xf]
  %v19 = vld [vmem:[%s0 + $0x10] sm:$0x3f]
  %s20 = scalar_lea.vmem %s1, 4
  %v21 = vld [vmem:[%s20] sm:$0xf]
  %23 = vst [vmem:[#allocation1] ss:$4 sm:$0xff] %v15
  %s25 = scalar_lea.vmem [#allocation1], 32
  %26 = vst [vmem:[%s25] ss:$4 sm:$0xff] %v16
  %v27 = vld.sshfl [vmem:[#allocation1] sm:$0xff pattern:$0x73625140]
  %v29 = vld.sshfl [vmem:[#allocation1 + $0x8] sm:$0xff pattern:$0x73625140]
  %v31 = vld.sshfl [vmem:[#allocation1 + $0x10] sm:$0xff pattern:$0x73625140]
  %v33 = vld.sshfl [vmem:[#allocation1 + $0x18] sm:$0xff pattern:$0x73625140]
  %v35 = vld.sshfl [vmem:[#allocation1 + $0x20] sm:$0xff pattern:$0x73625140]
  %v37 = vld.sshfl [vmem:[#allocation1 + $0x28] sm:$0xff pattern:$0x73625140]
  %v39 = vld.sshfl [vmem:[#allocation1 + $0x30] sm:$0xff pattern:$0x73625140]
  %v41 = vld.sshfl [vmem:[#allocation1 + $0x38] sm:$0xff pattern:$0x73625140]
  %44 = vst [vmem:[#allocation1] ss:$4 sm:$0xff] %v19
  %v45 = vld.sshfl [vmem:[#allocation1] sm:$0xff pattern:$0x73625140]
  %v47 = vld.sshfl [vmem:[#allocation1 + $0x8] sm:$0xff pattern:$0x73625140]
  %v49 = vld.sshfl [vmem:[#allocation1 + $0x10] sm:$0xff pattern:$0x73625140]
  %51 = vrot.lane.b32.xlu0 %v27, 127
  %v52 = vpop.permute.xlu0 %51
  %53 = vrot.lane.b32.xlu0 %v29, 127
  %v54 = vpop.permute.xlu0 %53
  %55 = vrot.lane.b32.xlu0 %v31, 127
  %v56 = vpop.permute.xlu0 %55
  %57 = vrot.lane.b32.xlu0 %v33, 127
  %v58 = vpop.permute.xlu0 %57
  %59 = vrot.lane.b32.xlu0 %v35, 127
  %v60 = vpop.permute.xlu0 %59
  %61 = vrot.lane.b32.xlu0 %v37, 127
  %v62 = vpop.permute.xlu0 %61
  %63 = vrot.lane.b32.xlu0 %v39, 127
  %v64 = vpop.permute.xlu0 %63
  %65 = vrot.lane.b32.xlu0 %v41, 127
  %v66 = vpop.permute.xlu0 %65
  %67 = vrot.lane.b32.xlu0 %v45, 127
  %v68 = vpop.permute.xlu0 %67
  %69 = vrot.lane.b32.xlu0 %v47, 127
  %v70 = vpop.permute.xlu0 %69
  %71 = vrot.lane.b32.xlu0 %v49, 127
  %v72 = vpop.permute.xlu0 %71
  %vm73 = vcmask 1039360
  %v74 = vsel %vm73, %v52, %v54
  %v75 = vsel %vm73, %v54, %v56
  %v76 = vsel %vm73, %v56, %v58
  %v77 = vsel %vm73, %v58, %v60
  %v78 = vsel %vm73, %v60, %v62
  %v79 = vsel %vm73, %v62, %v64
  %v80 = vsel %vm73, %v64, %v66
  %v81 = vsel %vm73, %v66, %v68
  %v82 = vsel %vm73, %v68, %v70
  %v83 = vsel %vm73, %v70, %v72
  %vm84 = vcmask 31744
  %v86 = vsel %vm84, %v21, 0
  %vm88 = vcmask 1041408
  %v90 = vsel %vm88, %v74, 0
  %v93 = vsel %vm88, %v75, 0
  %v96 = vsel %vm88, %v76, 0
  %v99 = vsel %vm88, %v77, 0
  %v102 = vsel %vm88, %v78, 0
  %v105 = vsel %vm88, %v79, 0
  %v108 = vsel %vm88, %v80, 0
  %v111 = vsel %vm88, %v81, 0
  %v114 = vsel %vm88, %v82, 0
  %v117 = vsel %vm88, %v83, 0
  %119 = vmatpush.bf16.msra.mxu0 0
  %120 = vmatpush.bf16.msra.mxu0 0
  %121 = vmatpush.bf16.msra.mxu0 0
  %122 = vmatpush.bf16.msra.mxu0 0
  %123 = vmatpush.bf16.msra.mxu0 0
  %124 = vmatpush.bf16.msra.mxu0 0
  %125 = vmatpush.bf16.msra.mxu0 0
  %126 = vmatpush.bf16.msra.mxu0 %v90
  %127 = vmatmul.bf16.gmra.mxu0 %v86
  %v128 = vpop.f32.mrf.mxu0
  %v129 = vadd.f32 0.0, %v128
  %v130 = vpop.f32.mrf.mxu0
  %131 = vdwg.mxu0
  %132 = vmatpush.bf16.msra.mxu0 0
  %133 = vmatpush.bf16.msra.mxu0 0
  %134 = vmatpush.bf16.msra.mxu0 0
  %135 = vmatpush.bf16.msra.mxu0 0
  %136 = vmatpush.bf16.msra.mxu0 0
  %137 = vmatpush.bf16.msra.mxu0 0
  %138 = vmatpush.bf16.msra.mxu0 0
  %139 = vmatpush.bf16.msra.mxu0 %v93
  %140 = vmatmul.bf16.gmra.mxu0 %v86
  %v141 = vpop.f32.mrf.mxu0
  %v142 = vadd.f32 0.0, %v141
  %v143 = vpop.f32.mrf.mxu0
  %144 = vdwg.mxu0
  %145 = vmatpush.bf16.msra.mxu0 0
  %146 = vmatpush.bf16.msra.mxu0 0
  %147 = vmatpush.bf16.msra.mxu0 0
  %148 = vmatpush.bf16.msra.mxu0 0
  %149 = vmatpush.bf16.msra.mxu0 0
  %150 = vmatpush.bf16.msra.mxu0 0
  %151 = vmatpush.bf16.msra.mxu0 0
  %152 = vmatpush.bf16.msra.mxu0 %v96
  %153 = vmatmul.bf16.gmra.mxu0 %v86
  %v154 = vpop.f32.mrf.mxu0
  %v155 = vadd.f32 0.0, %v154
  %v156 = vpop.f32.mrf.mxu0
  %157 = vdwg.mxu0
  %158 = vmatpush.bf16.msra.mxu0 0
  %159 = vmatpush.bf16.msra.mxu0 0
  %160 = vmatpush.bf16.msra.mxu0 0
  %161 = vmatpush.bf16.msra.mxu0 0
  %162 = vmatpush.bf16.msra.mxu0 0
  %163 = vmatpush.bf16.msra.mxu0 0
  %164 = vmatpush.bf16.msra.mxu0 0
  %165 = vmatpush.bf16.msra.mxu0 %v99
  %166 = vmatmul.bf16.gmra.mxu0 %v86
  %v167 = vpop.f32.mrf.mxu0
  %v168 = vadd.f32 0.0, %v167
  %v169 = vpop.f32.mrf.mxu0
  %170 = vdwg.mxu0
  %171 = vmatpush.bf16.msra.mxu0 0
  %172 = vmatpush.bf16.msra.mxu0 0
  %173 = vmatpush.bf16.msra.mxu0 0
  %174 = vmatpush.bf16.msra.mxu0 0
  %175 = vmatpush.bf16.msra.mxu0 0
  %176 = vmatpush.bf16.msra.mxu0 0
  %177 = vmatpush.bf16.msra.mxu0 0
  %178 = vmatpush.bf16.msra.mxu0 %v102
  %179 = vmatmul.bf16.gmra.mxu0 %v86
  %v180 = vpop.f32.mrf.mxu0
  %v181 = vadd.f32 0.0, %v180
  %v182 = vpop.f32.mrf.mxu0
  %183 = vdwg.mxu0
  %184 = vmatpush.bf16.msra.mxu0 0
  %185 = vmatpush.bf16.msra.mxu0 0
  %186 = vmatpush.bf16.msra.mxu0 0
  %187 = vmatpush.bf16.msra.mxu0 0
  %188 = vmatpush.bf16.msra.mxu0 0
  %189 = vmatpush.bf16.msra.mxu0 0
  %190 = vmatpush.bf16.msra.mxu0 0
  %191 = vmatpush.bf16.msra.mxu0 %v105
  %192 = vmatmul.bf16.gmra.mxu0 %v86
  %v193 = vpop.f32.mrf.mxu0
  %v194 = vadd.f32 0.0, %v193
  %v195 = vpop.f32.mrf.mxu0
  %196 = vdwg.mxu0
  %197 = vmatpush.bf16.msra.mxu0 0
  %198 = vmatpush.bf16.msra.mxu0 0
  %199 = vmatpush.bf16.msra.mxu0 0
  %200 = vmatpush.bf16.msra.mxu0 0
  %201 = vmatpush.bf16.msra.mxu0 0
  %202 = vmatpush.bf16.msra.mxu0 0
  %203 = vmatpush.bf16.msra.mxu0 0
  %204 = vmatpush.bf16.msra.mxu0 %v108
  %205 = vmatmul.bf16.gmra.mxu0 %v86
  %v206 = vpop.f32.mrf.mxu0
  %v207 = vadd.f32 0.0, %v206
  %v208 = vpop.f32.mrf.mxu0
  %209 = vdwg.mxu0
  %210 = vmatpush.bf16.msra.mxu0 0
  %211 = vmatpush.bf16.msra.mxu0 0
  %212 = vmatpush.bf16.msra.mxu0 0
  %213 = vmatpush.bf16.msra.mxu0 0
  %214 = vmatpush.bf16.msra.mxu0 0
  %215 = vmatpush.bf16.msra.mxu0 0
  %216 = vmatpush.bf16.msra.mxu0 0
  %217 = vmatpush.bf16.msra.mxu0 %v111
  %218 = vmatmul.bf16.gmra.mxu0 %v86
  %v219 = vpop.f32.mrf.mxu0
  %v220 = vadd.f32 0.0, %v219
  %v221 = vpop.f32.mrf.mxu0
  %222 = vdwg.mxu0
  %223 = vmatpush.bf16.msra.mxu0 0
  %224 = vmatpush.bf16.msra.mxu0 0
  %225 = vmatpush.bf16.msra.mxu0 0
  %226 = vmatpush.bf16.msra.mxu0 0
  %227 = vmatpush.bf16.msra.mxu0 0
  %228 = vmatpush.bf16.msra.mxu0 0
  %229 = vmatpush.bf16.msra.mxu0 0
  %230 = vmatpush.bf16.msra.mxu0 %v114
  %231 = vmatmul.bf16.gmra.mxu0 %v86
  %v232 = vpop.f32.mrf.mxu0
  %v233 = vadd.f32 0.0, %v232
  %v234 = vpop.f32.mrf.mxu0
  %235 = vdwg.mxu0
  %236 = vmatpush.bf16.msra.mxu0 0
  %237 = vmatpush.bf16.msra.mxu0 0
  %238 = vmatpush.bf16.msra.mxu0 0
  %239 = vmatpush.bf16.msra.mxu0 0
  %240 = vmatpush.bf16.msra.mxu0 0
  %241 = vmatpush.bf16.msra.mxu0 0
  %242 = vmatpush.bf16.msra.mxu0 0
  %243 = vmatpush.bf16.msra.mxu0 %v117
  %244 = vmatmul.bf16.gmra.mxu0 %v86
  %v245 = vpop.f32.mrf.mxu0
  %v246 = vadd.f32 0.0, %v245
  %v247 = vpop.f32.mrf.mxu0
  %248 = vdwg.mxu0
  %249 = vst [vmem:[#allocation1] ss:$4 sm:$0xff] %v15
  %s250 = scalar_lea.vmem [#allocation1], 32
  %251 = vst [vmem:[%s250] ss:$4 sm:$0xff] %v16
  %v252 = vld.sshfl [vmem:[#allocation1] sm:$0xff pattern:$0x73625140]
  %v253 = vld.sshfl [vmem:[#allocation1 + $0x8] sm:$0xff pattern:$0x73625140]
  %v254 = vld.sshfl [vmem:[#allocation1 + $0x10] sm:$0xff pattern:$0x73625140]
  %v255 = vld.sshfl [vmem:[#allocation1 + $0x18] sm:$0xff pattern:$0x73625140]
  %v256 = vld.sshfl [vmem:[#allocation1 + $0x20] sm:$0xff pattern:$0x73625140]
  %v257 = vld.sshfl [vmem:[#allocation1 + $0x28] sm:$0xff pattern:$0x73625140]
  %v258 = vld.sshfl [vmem:[#allocation1 + $0x30] sm:$0xff pattern:$0x73625140]
  %v259 = vld.sshfl [vmem:[#allocation1 + $0x38] sm:$0xff pattern:$0x73625140]
  %261 = vst [vmem:[#allocation1] ss:$4 sm:$0xff] %v17
  %v262 = vld.sshfl [vmem:[#allocation1] sm:$0xff pattern:$0x73625140]
  %v263 = vld.sshfl [vmem:[#allocation1 + $0x8] sm:$0xff pattern:$0x73625140]
  %v265 = vsel %vm84, %v18, 0
  %v267 = vsel %vm88, %v252, 0
  %v269 = vsel %vm88, %v253, 0
  %v271 = vsel %vm88, %v254, 0
  %v273 = vsel %vm88, %v255, 0
  %v275 = vsel %vm88, %v256, 0
  %v277 = vsel %vm88, %v257, 0
  %v279 = vsel %vm88, %v258, 0
  %v281 = vsel %vm88, %v259, 0
  %v283 = vsel %vm88, %v262, 0
  %v285 = vsel %vm88, %v263, 0
  %287 = vmatpush.bf16.msra.mxu0 0
  %288 = vmatpush.bf16.msra.mxu0 0
  %289 = vmatpush.bf16.msra.mxu0 0
  %290 = vmatpush.bf16.msra.mxu0 0
  %291 = vmatpush.bf16.msra.mxu0 0
  %292 = vmatpush.bf16.msra.mxu0 0
  %293 = vmatpush.bf16.msra.mxu0 0
  %294 = vmatpush.bf16.msra.mxu0 %v267
  %295 = vmatmul.bf16.gmra.mxu0 %v265
  %v296 = vpop.f32.mrf.mxu0
  %v297 = vadd.f32 %v129, %v296
  %v298 = vpop.f32.mrf.mxu0
  %299 = vdwg.mxu0
  %300 = vmatpush.bf16.msra.mxu0 0
  %301 = vmatpush.bf16.msra.mxu0 0
  %302 = vmatpush.bf16.msra.mxu0 0
  %303 = vmatpush.bf16.msra.mxu0 0
  %304 = vmatpush.bf16.msra.mxu0 0
  %305 = vmatpush.bf16.msra.mxu0 0
  %306 = vmatpush.bf16.msra.mxu0 0
  %307 = vmatpush.bf16.msra.mxu0 %v269
  %308 = vmatmul.bf16.gmra.mxu0 %v265
  %v309 = vpop.f32.mrf.mxu0
  %v310 = vadd.f32 %v142, %v309
  %v311 = vpop.f32.mrf.mxu0
  %312 = vdwg.mxu0
  %313 = vmatpush.bf16.msra.mxu0 0
  %314 = vmatpush.bf16.msra.mxu0 0
  %315 = vmatpush.bf16.msra.mxu0 0
  %316 = vmatpush.bf16.msra.mxu0 0
  %317 = vmatpush.bf16.msra.mxu0 0
  %318 = vmatpush.bf16.msra.mxu0 0
  %319 = vmatpush.bf16.msra.mxu0 0
  %320 = vmatpush.bf16.msra.mxu0 %v271
  %321 = vmatmul.bf16.gmra.mxu0 %v265
  %v322 = vpop.f32.mrf.mxu0
  %v323 = vadd.f32 %v155, %v322
  %v324 = vpop.f32.mrf.mxu0
  %325 = vdwg.mxu0
  %326 = vmatpush.bf16.msra.mxu0 0
  %327 = vmatpush.bf16.msra.mxu0 0
  %328 = vmatpush.bf16.msra.mxu0 0
  %329 = vmatpush.bf16.msra.mxu0 0
  %330 = vmatpush.bf16.msra.mxu0 0
  %331 = vmatpush.bf16.msra.mxu0 0
  %332 = vmatpush.bf16.msra.mxu0 0
  %333 = vmatpush.bf16.msra.mxu0 %v273
  %334 = vmatmul.bf16.gmra.mxu0 %v265
  %v335 = vpop.f32.mrf.mxu0
  %v336 = vadd.f32 %v168, %v335
  %v337 = vpop.f32.mrf.mxu0
  %338 = vdwg.mxu0
  %339 = vmatpush.bf16.msra.mxu0 0
  %340 = vmatpush.bf16.msra.mxu0 0
  %341 = vmatpush.bf16.msra.mxu0 0
  %342 = vmatpush.bf16.msra.mxu0 0
  %343 = vmatpush.bf16.msra.mxu0 0
  %344 = vmatpush.bf16.msra.mxu0 0
  %345 = vmatpush.bf16.msra.mxu0 0
  %346 = vmatpush.bf16.msra.mxu0 %v275
  %347 = vmatmul.bf16.gmra.mxu0 %v265
  %v348 = vpop.f32.mrf.mxu0
  %v349 = vadd.f32 %v181, %v348
  %v350 = vpop.f32.mrf.mxu0
  %351 = vdwg.mxu0
  %352 = vmatpush.bf16.msra.mxu0 0
  %353 = vmatpush.bf16.msra.mxu0 0
  %354 = vmatpush.bf16.msra.mxu0 0
  %355 = vmatpush.bf16.msra.mxu0 0
  %356 = vmatpush.bf16.msra.mxu0 0
  %357 = vmatpush.bf16.msra.mxu0 0
  %358 = vmatpush.bf16.msra.mxu0 0
  %359 = vmatpush.bf16.msra.mxu0 %v277
  %360 = vmatmul.bf16.gmra.mxu0 %v265
  %v361 = vpop.f32.mrf.mxu0
  %v362 = vadd.f32 %v194, %v361
  %v363 = vpop.f32.mrf.mxu0
  %364 = vdwg.mxu0
  %365 = vmatpush.bf16.msra.mxu0 0
  %366 = vmatpush.bf16.msra.mxu0 0
  %367 = vmatpush.bf16.msra.mxu0 0
  %368 = vmatpush.bf16.msra.mxu0 0
  %369 = vmatpush.bf16.msra.mxu0 0
  %370 = vmatpush.bf16.msra.mxu0 0
  %371 = vmatpush.bf16.msra.mxu0 0
  %372 = vmatpush.bf16.msra.mxu0 %v279
  %373 = vmatmul.bf16.gmra.mxu0 %v265
  %v374 = vpop.f32.mrf.mxu0
  %v375 = vadd.f32 %v207, %v374
  %v376 = vpop.f32.mrf.mxu0
  %377 = vdwg.mxu0
  %378 = vmatpush.bf16.msra.mxu0 0
  %379 = vmatpush.bf16.msra.mxu0 0
  %380 = vmatpush.bf16.msra.mxu0 0
  %381 = vmatpush.bf16.msra.mxu0 0
  %382 = vmatpush.bf16.msra.mxu0 0
  %383 = vmatpush.bf16.msra.mxu0 0
  %384 = vmatpush.bf16.msra.mxu0 0
  %385 = vmatpush.bf16.msra.mxu0 %v281
  %386 = vmatmul.bf16.gmra.mxu0 %v265
  %v387 = vpop.f32.mrf.mxu0
  %v388 = vadd.f32 %v220, %v387
  %v389 = vpop.f32.mrf.mxu0
  %390 = vdwg.mxu0
  %391 = vmatpush.bf16.msra.mxu0 0
  %392 = vmatpush.bf16.msra.mxu0 0
  %393 = vmatpush.bf16.msra.mxu0 0
  %394 = vmatpush.bf16.msra.mxu0 0
  %395 = vmatpush.bf16.msra.mxu0 0
  %396 = vmatpush.bf16.msra.mxu0 0
  %397 = vmatpush.bf16.msra.mxu0 0
  %398 = vmatpush.bf16.msra.mxu0 %v283
  %399 = vmatmul.bf16.gmra.mxu0 %v265
  %v400 = vpop.f32.mrf.mxu0
  %v401 = vadd.f32 %v233, %v400
  %v402 = vpop.f32.mrf.mxu0
  %403 = vdwg.mxu0
  %404 = vmatpush.bf16.msra.mxu0 0
  %405 = vmatpush.bf16.msra.mxu0 0
  %406 = vmatpush.bf16.msra.mxu0 0
  %407 = vmatpush.bf16.msra.mxu0 0
  %408 = vmatpush.bf16.msra.mxu0 0
  %409 = vmatpush.bf16.msra.mxu0 0
  %410 = vmatpush.bf16.msra.mxu0 0
  %411 = vmatpush.bf16.msra.mxu0 %v285
  %412 = vmatmul.bf16.gmra.mxu0 %v265
  %v413 = vpop.f32.mrf.mxu0
  %v414 = vadd.f32 %v246, %v413
  %v415 = vpop.f32.mrf.mxu0
  %416 = vdwg.mxu0
  %v417 = vld [vmem:[%s0] sm:$0xff]
  %v418 = vld [vmem:[%s0 + $0x8] sm:$0xff]
  %v419 = vld [vmem:[%s0 + $0x10] sm:$0x3f]
  %s420 = scalar_lea.vmem %s1, 8
  %v421 = vld [vmem:[%s420] sm:$0xf]
  %423 = vst [vmem:[#allocation1] ss:$4 sm:$0xff] %v417
  %s425 = scalar_lea.vmem [#allocation1], 32
  %426 = vst [vmem:[%s425] ss:$4 sm:$0xff] %v418
  %v427 = vld.sshfl [vmem:[#allocation1] sm:$0xff pattern:$0x73625140]
  %v429 = vld.sshfl [vmem:[#allocation1 + $0x8] sm:$0xff pattern:$0x73625140]
  %v431 = vld.sshfl [vmem:[#allocation1 + $0x10] sm:$0xff pattern:$0x73625140]
  %v433 = vld.sshfl [vmem:[#allocation1 + $0x18] sm:$0xff pattern:$0x73625140]
  %v435 = vld.sshfl [vmem:[#allocation1 + $0x20] sm:$0xff pattern:$0x73625140]
  %v437 = vld.sshfl [vmem:[#allocation1 + $0x28] sm:$0xff pattern:$0x73625140]
  %v439 = vld.sshfl [vmem:[#allocation1 + $0x30] sm:$0xff pattern:$0x73625140]
  %v441 = vld.sshfl [vmem:[#allocation1 + $0x38] sm:$0xff pattern:$0x73625140]
  %444 = vst [vmem:[#allocation1] ss:$4 sm:$0xff] %v419
  %v445 = vld.sshfl [vmem:[#allocation1] sm:$0xff pattern:$0x73625140]
  %v447 = vld.sshfl [vmem:[#allocation1 + $0x8] sm:$0xff pattern:$0x73625140]
  %v449 = vld.sshfl [vmem:[#allocation1 + $0x10] sm:$0xff pattern:$0x73625140]
  %451 = vrot.lane.b32.xlu0 %v427, 126
  %v452 = vpop.permute.xlu0 %451
  %453 = vrot.lane.b32.xlu0 %v429, 126
  %v454 = vpop.permute.xlu0 %453
  %455 = vrot.lane.b32.xlu0 %v431, 126
  %v456 = vpop.permute.xlu0 %455
  %457 = vrot.lane.b32.xlu0 %v433, 126
  %v458 = vpop.permute.xlu0 %457
  %459 = vrot.lane.b32.xlu0 %v435, 126
  %v460 = vpop.permute.xlu0 %459
  %461 = vrot.lane.b32.xlu0 %v437, 126
  %v462 = vpop.permute.xlu0 %461
  %463 = vrot.lane.b32.xlu0 %v439, 126
  %v464 = vpop.permute.xlu0 %463
  %465 = vrot.lane.b32.xlu0 %v441, 126
  %v466 = vpop.permute.xlu0 %465
  %467 = vrot.lane.b32.xlu0 %v445, 126
  %v468 = vpop.permute.xlu0 %467
  %469 = vrot.lane.b32.xlu0 %v447, 126
  %v470 = vpop.permute.xlu0 %469
  %471 = vrot.lane.b32.xlu0 %v449, 126
  %v472 = vpop.permute.xlu0 %471
  %vm473 = vcmask 1031168
  %v474 = vsel %vm473, %v452, %v454
  %v475 = vsel %vm473, %v454, %v456
  %v476 = vsel %vm473, %v456, %v458
  %v477 = vsel %vm473, %v458, %v460
  %v478 = vsel %vm473, %v460, %v462
  %v479 = vsel %vm473, %v462, %v464
  %v480 = vsel %vm473, %v464, %v466
  %v481 = vsel %vm473, %v466, %v468
  %v482 = vsel %vm473, %v468, %v470
  %v483 = vsel %vm473, %v470, %v472
  %v485 = vsel %vm84, %v421, 0
  %v488 = vsel %vm88, %v474, 0
  %v491 = vsel %vm88, %v475, 0
  %v494 = vsel %vm88, %v476, 0
  %v497 = vsel %vm88, %v477, 0
  %v500 = vsel %vm88, %v478, 0
  %v503 = vsel %vm88, %v479, 0
  %v506 = vsel %vm88, %v480, 0
  %v509 = vsel %vm88, %v481, 0
  %v512 = vsel %vm88, %v482, 0
  %v515 = vsel %vm88, %v483, 0
  %517 = vmatpush.bf16.msra.mxu0 0
  %518 = vmatpush.bf16.msra.mxu0 0
  %519 = vmatpush.bf16.msra.mxu0 0
  %520 = vmatpush.bf16.msra.mxu0 0
  %521 = vmatpush.bf16.msra.mxu0 0
  %522 = vmatpush.bf16.msra.mxu0 0
  %523 = vmatpush.bf16.msra.mxu0 0
  %524 = vmatpush.bf16.msra.mxu0 %v488
  %525 = vmatmul.bf16.gmra.mxu0 %v485
  %v526 = vpop.f32.mrf.mxu0
  %v527 = vadd.f32 0.0, %v526
  %v528 = vpop.f32.mrf.mxu0
  %529 = vdwg.mxu0
  %530 = vmatpush.bf16.msra.mxu0 0
  %531 = vmatpush.bf16.msra.mxu0 0
  %532 = vmatpush.bf16.msra.mxu0 0
  %533 = vmatpush.bf16.msra.mxu0 0
  %534 = vmatpush.bf16.msra.mxu0 0
  %535 = vmatpush.bf16.msra.mxu0 0
  %536 = vmatpush.bf16.msra.mxu0 0
  %537 = vmatpush.bf16.msra.mxu0 %v491
  %538 = vmatmul.bf16.gmra.mxu0 %v485
  %v539 = vpop.f32.mrf.mxu0
  %v540 = vadd.f32 0.0, %v539
  %v541 = vpop.f32.mrf.mxu0
  %542 = vdwg.mxu0
  %543 = vmatpush.bf16.msra.mxu0 0
  %544 = vmatpush.bf16.msra.mxu0 0
  %545 = vmatpush.bf16.msra.mxu0 0
  %546 = vmatpush.bf16.msra.mxu0 0
  %547 = vmatpush.bf16.msra.mxu0 0
  %548 = vmatpush.bf16.msra.mxu0 0
  %549 = vmatpush.bf16.msra.mxu0 0
  %550 = vmatpush.bf16.msra.mxu0 %v494
  %551 = vmatmul.bf16.gmra.mxu0 %v485
  %v552 = vpop.f32.mrf.mxu0
  %v553 = vadd.f32 0.0, %v552
  %v554 = vpop.f32.mrf.mxu0
  %555 = vdwg.mxu0
  %556 = vmatpush.bf16.msra.mxu0 0
  %557 = vmatpush.bf16.msra.mxu0 0
  %558 = vmatpush.bf16.msra.mxu0 0
  %559 = vmatpush.bf16.msra.mxu0 0
  %560 = vmatpush.bf16.msra.mxu0 0
  %561 = vmatpush.bf16.msra.mxu0 0
  %562 = vmatpush.bf16.msra.mxu0 0
  %563 = vmatpush.bf16.msra.mxu0 %v497
  %564 = vmatmul.bf16.gmra.mxu0 %v485
  %v565 = vpop.f32.mrf.mxu0
  %v566 = vadd.f32 0.0, %v565
  %v567 = vpop.f32.mrf.mxu0
  %568 = vdwg.mxu0
  %569 = vmatpush.bf16.msra.mxu0 0
  %570 = vmatpush.bf16.msra.mxu0 0
  %571 = vmatpush.bf16.msra.mxu0 0
  %572 = vmatpush.bf16.msra.mxu0 0
  %573 = vmatpush.bf16.msra.mxu0 0
  %574 = vmatpush.bf16.msra.mxu0 0
  %575 = vmatpush.bf16.msra.mxu0 0
  %576 = vmatpush.bf16.msra.mxu0 %v500
  %577 = vmatmul.bf16.gmra.mxu0 %v485
  %v578 = vpop.f32.mrf.mxu0
  %v579 = vadd.f32 0.0, %v578
  %v580 = vpop.f32.mrf.mxu0
  %581 = vdwg.mxu0
  %582 = vmatpush.bf16.msra.mxu0 0
  %583 = vmatpush.bf16.msra.mxu0 0
  %584 = vmatpush.bf16.msra.mxu0 0
  %585 = vmatpush.bf16.msra.mxu0 0
  %586 = vmatpush.bf16.msra.mxu0 0
  %587 = vmatpush.bf16.msra.mxu0 0
  %588 = vmatpush.bf16.msra.mxu0 0
  %589 = vmatpush.bf16.msra.mxu0 %v503
  %590 = vmatmul.bf16.gmra.mxu0 %v485
  %v591 = vpop.f32.mrf.mxu0
  %v592 = vadd.f32 0.0, %v591
  %v593 = vpop.f32.mrf.mxu0
  %594 = vdwg.mxu0
  %595 = vmatpush.bf16.msra.mxu0 0
  %596 = vmatpush.bf16.msra.mxu0 0
  %597 = vmatpush.bf16.msra.mxu0 0
  %598 = vmatpush.bf16.msra.mxu0 0
  %599 = vmatpush.bf16.msra.mxu0 0
  %600 = vmatpush.bf16.msra.mxu0 0
  %601 = vmatpush.bf16.msra.mxu0 0
  %602 = vmatpush.bf16.msra.mxu0 %v506
  %603 = vmatmul.bf16.gmra.mxu0 %v485
  %v604 = vpop.f32.mrf.mxu0
  %v605 = vadd.f32 0.0, %v604
  %v606 = vpop.f32.mrf.mxu0
  %607 = vdwg.mxu0
  %608 = vmatpush.bf16.msra.mxu0 0
  %609 = vmatpush.bf16.msra.mxu0 0
  %610 = vmatpush.bf16.msra.mxu0 0
  %611 = vmatpush.bf16.msra.mxu0 0
  %612 = vmatpush.bf16.msra.mxu0 0
  %613 = vmatpush.bf16.msra.mxu0 0
  %614 = vmatpush.bf16.msra.mxu0 0
  %615 = vmatpush.bf16.msra.mxu0 %v509
  %616 = vmatmul.bf16.gmra.mxu0 %v485
  %v617 = vpop.f32.mrf.mxu0
  %v618 = vadd.f32 0.0, %v617
  %v619 = vpop.f32.mrf.mxu0
  %620 = vdwg.mxu0
  %621 = vmatpush.bf16.msra.mxu0 0
  %622 = vmatpush.bf16.msra.mxu0 0
  %623 = vmatpush.bf16.msra.mxu0 0
  %624 = vmatpush.bf16.msra.mxu0 0
  %625 = vmatpush.bf16.msra.mxu0 0
  %626 = vmatpush.bf16.msra.mxu0 0
  %627 = vmatpush.bf16.msra.mxu0 0
  %628 = vmatpush.bf16.msra.mxu0 %v512
  %629 = vmatmul.bf16.gmra.mxu0 %v485
  %v630 = vpop.f32.mrf.mxu0
  %v631 = vadd.f32 0.0, %v630
  %v632 = vpop.f32.mrf.mxu0
  %633 = vdwg.mxu0
  %634 = vmatpush.bf16.msra.mxu0 0
  %635 = vmatpush.bf16.msra.mxu0 0
  %636 = vmatpush.bf16.msra.mxu0 0
  %637 = vmatpush.bf16.msra.mxu0 0
  %638 = vmatpush.bf16.msra.mxu0 0
  %639 = vmatpush.bf16.msra.mxu0 0
  %640 = vmatpush.bf16.msra.mxu0 0
  %641 = vmatpush.bf16.msra.mxu0 %v515
  %642 = vmatmul.bf16.gmra.mxu0 %v485
  %v643 = vpop.f32.mrf.mxu0
  %v644 = vadd.f32 0.0, %v643
  %v645 = vpop.f32.mrf.mxu0
  %646 = vdwg.mxu0
  %v647 = vadd.f32 %v297, %v527
  %v648 = vadd.f32 %v310, %v540
  %v649 = vadd.f32 %v323, %v553
  %v650 = vadd.f32 %v336, %v566
  %v651 = vadd.f32 %v349, %v579
  %v652 = vadd.f32 %v362, %v592
  %v653 = vadd.f32 %v375, %v605
  %v654 = vadd.f32 %v388, %v618
  %v655 = vadd.f32 %v401, %v631
  %v656 = vadd.f32 %v414, %v644
  %v657 = vld [vmem:[%s0] sm:$0xff]
  %v658 = vld [vmem:[%s0 + $0x8] sm:$0xff]
  %v659 = vld [vmem:[%s0 + $0x10] sm:$0x3f]
  %s660 = scalar_lea.vmem %s1, 12
  %v661 = vld [vmem:[%s660] sm:$0xf]
  %663 = vst [vmem:[#allocation1] ss:$4 sm:$0xff] %v657
  %s665 = scalar_lea.vmem [#allocation1], 32
  %666 = vst [vmem:[%s665] ss:$4 sm:$0xff] %v658
  %v667 = vld.sshfl [vmem:[#allocation1] sm:$0xff pattern:$0x73625140]
  %v669 = vld.sshfl [vmem:[#allocation1 + $0x8] sm:$0xff pattern:$0x73625140]
  %v671 = vld.sshfl [vmem:[#allocation1 + $0x10] sm:$0xff pattern:$0x73625140]
  %v673 = vld.sshfl [vmem:[#allocation1 + $0x18] sm:$0xff pattern:$0x73625140]
  %v675 = vld.sshfl [vmem:[#allocation1 + $0x20] sm:$0xff pattern:$0x73625140]
  %v677 = vld.sshfl [vmem:[#allocation1 + $0x28] sm:$0xff pattern:$0x73625140]
  %v679 = vld.sshfl [vmem:[#allocation1 + $0x30] sm:$0xff pattern:$0x73625140]
  %v681 = vld.sshfl [vmem:[#allocation1 + $0x38] sm:$0xff pattern:$0x73625140]
  %684 = vst [vmem:[#allocation1] ss:$4 sm:$0xff] %v659
  %v685 = vld.sshfl [vmem:[#allocation1] sm:$0xff pattern:$0x73625140]
  %v687 = vld.sshfl [vmem:[#allocation1 + $0x8] sm:$0xff pattern:$0x73625140]
  %v689 = vld.sshfl [vmem:[#allocation1 + $0x10] sm:$0xff pattern:$0x73625140]
  %691 = vrot.lane.b32.xlu0 %v667, 93
  %v692 = vpop.permute.xlu0 %691
  %693 = vrot.lane.b32.xlu0 %v669, 93
  %v694 = vpop.permute.xlu0 %693
  %695 = vrot.lane.b32.xlu0 %v671, 93
  %v696 = vpop.permute.xlu0 %695
  %697 = vrot.lane.b32.xlu0 %v673, 93
  %v698 = vpop.permute.xlu0 %697
  %699 = vrot.lane.b32.xlu0 %v675, 93
  %v700 = vpop.permute.xlu0 %699
  %701 = vrot.lane.b32.xlu0 %v677, 93
  %v702 = vpop.permute.xlu0 %701
  %703 = vrot.lane.b32.xlu0 %v679, 93
  %v704 = vpop.permute.xlu0 %703
  %705 = vrot.lane.b32.xlu0 %v681, 93
  %v706 = vpop.permute.xlu0 %705
  %707 = vrot.lane.b32.xlu0 %v685, 93
  %v708 = vpop.permute.xlu0 %707
  %709 = vrot.lane.b32.xlu0 %v687, 93
  %v710 = vpop.permute.xlu0 %709
  %711 = vrot.lane.b32.xlu0 %v689, 93
  %v712 = vpop.permute.xlu0 %711
  %vm713 = vcmask 760832
  %v714 = vsel %vm713, %v692, %v694
  %v715 = vsel %vm713, %v694, %v696
  %v716 = vsel %vm713, %v696, %v698
  %v717 = vsel %vm713, %v698, %v700
  %v718 = vsel %vm713, %v700, %v702
  %v719 = vsel %vm713, %v702, %v704
  %v720 = vsel %vm713, %v704, %v706
  %v721 = vsel %vm713, %v706, %v708
  %v722 = vsel %vm713, %v708, %v710
  %v723 = vsel %vm713, %v710, %v712
  %v725 = vsel %vm84, %v661, 0
  %v728 = vsel %vm88, %v714, 0
  %v731 = vsel %vm88, %v715, 0
  %v734 = vsel %vm88, %v716, 0
  %v737 = vsel %vm88, %v717, 0
  %v740 = vsel %vm88, %v718, 0
  %v743 = vsel %vm88, %v719, 0
  %v746 = vsel %vm88, %v720, 0
  %v749 = vsel %vm88, %v721, 0
  %v752 = vsel %vm88, %v722, 0
  %v755 = vsel %vm88, %v723, 0
  %757 = vmatpush.bf16.msra.mxu0 0
  %758 = vmatpush.bf16.msra.mxu0 0
  %759 = vmatpush.bf16.msra.mxu0 0
  %760 = vmatpush.bf16.msra.mxu0 0
  %761 = vmatpush.bf16.msra.mxu0 0
  %762 = vmatpush.bf16.msra.mxu0 0
  %763 = vmatpush.bf16.msra.mxu0 0
  %764 = vmatpush.bf16.msra.mxu0 %v728
  %765 = vmatmul.bf16.gmra.mxu0 %v725
  %v766 = vpop.f32.mrf.mxu0
  %v767 = vadd.f32 0.0, %v766
  %v768 = vpop.f32.mrf.mxu0
  %769 = vdwg.mxu0
  %770 = vmatpush.bf16.msra.mxu0 0
  %771 = vmatpush.bf16.msra.mxu0 0
  %772 = vmatpush.bf16.msra.mxu0 0
  %773 = vmatpush.bf16.msra.mxu0 0
  %774 = vmatpush.bf16.msra.mxu0 0
  %775 = vmatpush.bf16.msra.mxu0 0
  %776 = vmatpush.bf16.msra.mxu0 0
  %777 = vmatpush.bf16.msra.mxu0 %v731
  %778 = vmatmul.bf16.gmra.mxu0 %v725
  %v779 = vpop.f32.mrf.mxu0
  %v780 = vadd.f32 0.0, %v779
  %v781 = vpop.f32.mrf.mxu0
  %782 = vdwg.mxu0
  %783 = vmatpush.bf16.msra.mxu0 0
  %784 = vmatpush.bf16.msra.mxu0 0
  %785 = vmatpush.bf16.msra.mxu0 0
  %786 = vmatpush.bf16.msra.mxu0 0
  %787 = vmatpush.bf16.msra.mxu0 0
  %788 = vmatpush.bf16.msra.mxu0 0
  %789 = vmatpush.bf16.msra.mxu0 0
  %790 = vmatpush.bf16.msra.mxu0 %v734
  %791 = vmatmul.bf16.gmra.mxu0 %v725
  %v792 = vpop.f32.mrf.mxu0
  %v793 = vadd.f32 0.0, %v792
  %v794 = vpop.f32.mrf.mxu0
  %795 = vdwg.mxu0
  %796 = vmatpush.bf16.msra.mxu0 0
  %797 = vmatpush.bf16.msra.mxu0 0
  %798 = vmatpush.bf16.msra.mxu0 0
  %799 = vmatpush.bf16.msra.mxu0 0
  %800 = vmatpush.bf16.msra.mxu0 0
  %801 = vmatpush.bf16.msra.mxu0 0
  %802 = vmatpush.bf16.msra.mxu0 0
  %803 = vmatpush.bf16.msra.mxu0 %v737
  %804 = vmatmul.bf16.gmra.mxu0 %v725
  %v805 = vpop.f32.mrf.mxu0
  %v806 = vadd.f32 0.0, %v805
  %v807 = vpop.f32.mrf.mxu0
  %808 = vdwg.mxu0
  %809 = vmatpush.bf16.msra.mxu0 0
  %810 = vmatpush.bf16.msra.mxu0 0
  %811 = vmatpush.bf16.msra.mxu0 0
  %812 = vmatpush.bf16.msra.mxu0 0
  %813 = vmatpush.bf16.msra.mxu0 0
  %814 = vmatpush.bf16.msra.mxu0 0
  %815 = vmatpush.bf16.msra.mxu0 0
  %816 = vmatpush.bf16.msra.mxu0 %v740
  %817 = vmatmul.bf16.gmra.mxu0 %v725
  %v818 = vpop.f32.mrf.mxu0
  %v819 = vadd.f32 0.0, %v818
  %v820 = vpop.f32.mrf.mxu0
  %821 = vdwg.mxu0
  %822 = vmatpush.bf16.msra.mxu0 0
  %823 = vmatpush.bf16.msra.mxu0 0
  %824 = vmatpush.bf16.msra.mxu0 0
  %825 = vmatpush.bf16.msra.mxu0 0
  %826 = vmatpush.bf16.msra.mxu0 0
  %827 = vmatpush.bf16.msra.mxu0 0
  %828 = vmatpush.bf16.msra.mxu0 0
  %829 = vmatpush.bf16.msra.mxu0 %v743
  %830 = vmatmul.bf16.gmra.mxu0 %v725
  %v831 = vpop.f32.mrf.mxu0
  %v832 = vadd.f32 0.0, %v831
  %v833 = vpop.f32.mrf.mxu0
  %834 = vdwg.mxu0
  %835 = vmatpush.bf16.msra.mxu0 0
  %836 = vmatpush.bf16.msra.mxu0 0
  %837 = vmatpush.bf16.msra.mxu0 0
  %838 = vmatpush.bf16.msra.mxu0 0
  %839 = vmatpush.bf16.msra.mxu0 0
  %840 = vmatpush.bf16.msra.mxu0 0
  %841 = vmatpush.bf16.msra.mxu0 0
  %842 = vmatpush.bf16.msra.mxu0 %v746
  %843 = vmatmul.bf16.gmra.mxu0 %v725
  %v844 = vpop.f32.mrf.mxu0
  %v845 = vadd.f32 0.0, %v844
  %v846 = vpop.f32.mrf.mxu0
  %847 = vdwg.mxu0
  %848 = vmatpush.bf16.msra.mxu0 0
  %849 = vmatpush.bf16.msra.mxu0 0
  %850 = vmatpush.bf16.msra.mxu0 0
  %851 = vmatpush.bf16.msra.mxu0 0
  %852 = vmatpush.bf16.msra.mxu0 0
  %853 = vmatpush.bf16.msra.mxu0 0
  %854 = vmatpush.bf16.msra.mxu0 0
  %855 = vmatpush.bf16.msra.mxu0 %v749
  %856 = vmatmul.bf16.gmra.mxu0 %v725
  %v857 = vpop.f32.mrf.mxu0
  %v858 = vadd.f32 0.0, %v857
  %v859 = vpop.f32.mrf.mxu0
  %860 = vdwg.mxu0
  %861 = vmatpush.bf16.msra.mxu0 0
  %862 = vmatpush.bf16.msra.mxu0 0
  %863 = vmatpush.bf16.msra.mxu0 0
  %864 = vmatpush.bf16.msra.mxu0 0
  %865 = vmatpush.bf16.msra.mxu0 0
  %866 = vmatpush.bf16.msra.mxu0 0
  %867 = vmatpush.bf16.msra.mxu0 0
  %868 = vmatpush.bf16.msra.mxu0 %v752
  %869 = vmatmul.bf16.gmra.mxu0 %v725
  %v870 = vpop.f32.mrf.mxu0
  %v871 = vadd.f32 0.0, %v870
  %v872 = vpop.f32.mrf.mxu0
  %873 = vdwg.mxu0
  %874 = vmatpush.bf16.msra.mxu0 0
  %875 = vmatpush.bf16.msra.mxu0 0
  %876 = vmatpush.bf16.msra.mxu0 0
  %877 = vmatpush.bf16.msra.mxu0 0
  %878 = vmatpush.bf16.msra.mxu0 0
  %879 = vmatpush.bf16.msra.mxu0 0
  %880 = vmatpush.bf16.msra.mxu0 0
  %881 = vmatpush.bf16.msra.mxu0 %v755
  %882 = vmatmul.bf16.gmra.mxu0 %v725
  %v883 = vpop.f32.mrf.mxu0
  %v884 = vadd.f32 0.0, %v883
  %v885 = vpop.f32.mrf.mxu0
  %886 = vdwg.mxu0
  %v887 = vadd.f32 %v647, %v767
  %v888 = vadd.f32 %v648, %v780
  %v889 = vadd.f32 %v649, %v793
  %v890 = vadd.f32 %v650, %v806
  %v891 = vadd.f32 %v651, %v819
  %v892 = vadd.f32 %v652, %v832
  %v893 = vadd.f32 %v653, %v845
  %v894 = vadd.f32 %v654, %v858
  %v895 = vadd.f32 %v655, %v871
  %v896 = vadd.f32 %v656, %v884
  %v897 = vld [vmem:[%s0] sm:$0xff]
  %v898 = vld [vmem:[%s0 + $0x8] sm:$0xff]
  %v899 = vld [vmem:[%s0 + $0x10] sm:$0x3f]
  %s900 = scalar_lea.vmem %s1, 16
  %v901 = vld [vmem:[%s900] sm:$0xf]
  %903 = vst [vmem:[#allocation1] ss:$4 sm:$0xff] %v897
  %s905 = scalar_lea.vmem [#allocation1], 32
  %906 = vst [vmem:[%s905] ss:$4 sm:$0xff] %v898
  %v907 = vld.sshfl [vmem:[#allocation1] sm:$0xff pattern:$0x73625140]
  %v909 = vld.sshfl [vmem:[#allocation1 + $0x8] sm:$0xff pattern:$0x73625140]
  %v911 = vld.sshfl [vmem:[#allocation1 + $0x10] sm:$0xff pattern:$0x73625140]
  %v913 = vld.sshfl [vmem:[#allocation1 + $0x18] sm:$0xff pattern:$0x73625140]
  %v915 = vld.sshfl [vmem:[#allocation1 + $0x20] sm:$0xff pattern:$0x73625140]
  %v917 = vld.sshfl [vmem:[#allocation1 + $0x28] sm:$0xff pattern:$0x73625140]
  %v919 = vld.sshfl [vmem:[#allocation1 + $0x30] sm:$0xff pattern:$0x73625140]
  %v921 = vld.sshfl [vmem:[#allocation1 + $0x38] sm:$0xff pattern:$0x73625140]
  %924 = vst [vmem:[#allocation1] ss:$4 sm:$0xff] %v899
  %v925 = vld.sshfl [vmem:[#allocation1] sm:$0xff pattern:$0x73625140]
  %v927 = vld.sshfl [vmem:[#allocation1 + $0x8] sm:$0xff pattern:$0x73625140]
  %v929 = vld.sshfl [vmem:[#allocation1 + $0x10] sm:$0xff pattern:$0x73625140]
  %931 = vrot.lane.b32.xlu0 %v907, 92
  %v932 = vpop.permute.xlu0 %931
  %933 = vrot.lane.b32.xlu0 %v909, 92
  %v934 = vpop.permute.xlu0 %933
  %935 = vrot.lane.b32.xlu0 %v911, 92
  %v936 = vpop.permute.xlu0 %935
  %937 = vrot.lane.b32.xlu0 %v913, 92
  %v938 = vpop.permute.xlu0 %937
  %939 = vrot.lane.b32.xlu0 %v915, 92
  %v940 = vpop.permute.xlu0 %939
  %941 = vrot.lane.b32.xlu0 %v917, 92
  %v942 = vpop.permute.xlu0 %941
  %943 = vrot.lane.b32.xlu0 %v919, 92
  %v944 = vpop.permute.xlu0 %943
  %945 = vrot.lane.b32.xlu0 %v921, 92
  %v946 = vpop.permute.xlu0 %945
  %947 = vrot.lane.b32.xlu0 %v925, 92
  %v948 = vpop.permute.xlu0 %947
  %949 = vrot.lane.b32.xlu0 %v927, 92
  %v950 = vpop.permute.xlu0 %949
  %951 = vrot.lane.b32.xlu0 %v929, 92
  %v952 = vpop.permute.xlu0 %951
  %vm953 = vcmask 752640
  %v954 = vsel %vm953, %v932, %v934
  %v955 = vsel %vm953, %v934, %v936
  %v956 = vsel %vm953, %v936, %v938
  %v957 = vsel %vm953, %v938, %v940
  %v958 = vsel %vm953, %v940, %v942
  %v959 = vsel %vm953, %v942, %v944
  %v960 = vsel %vm953, %v944, %v946
  %v961 = vsel %vm953, %v946, %v948
  %v962 = vsel %vm953, %v948, %v950
  %v963 = vsel %vm953, %v950, %v952
  %v965 = vsel %vm84, %v901, 0
  %v968 = vsel %vm88, %v954, 0
  %v971 = vsel %vm88, %v955, 0
  %v974 = vsel %vm88, %v956, 0
  %v977 = vsel %vm88, %v957, 0
  %v980 = vsel %vm88, %v958, 0
  %v983 = vsel %vm88, %v959, 0
  %v986 = vsel %vm88, %v960, 0
  %v989 = vsel %vm88, %v961, 0
  %v992 = vsel %vm88, %v962, 0
  %v995 = vsel %vm88, %v963, 0
  %997 = vmatpush.bf16.msra.mxu0 0
  %998 = vmatpush.bf16.msra.mxu0 0
  %999 = vmatpush.bf16.msra.mxu0 0
  %1000 = vmatpush.bf16.msra.mxu0 0
  %1001 = vmatpush.bf16.msra.mxu0 0
  %1002 = vmatpush.bf16.msra.mxu0 0
  %1003 = vmatpush.bf16.msra.mxu0 0
  %1004 = vmatpush.bf16.msra.mxu0 %v968
  %1005 = vmatmul.bf16.gmra.mxu0 %v965
  %v1006 = vpop.f32.mrf.mxu0
  %v1007 = vadd.f32 0.0, %v1006
  %v1008 = vpop.f32.mrf.mxu0
  %1009 = vdwg.mxu0
  %1010 = vmatpush.bf16.msra.mxu0 0
  %1011 = vmatpush.bf16.msra.mxu0 0
  %1012 = vmatpush.bf16.msra.mxu0 0
  %1013 = vmatpush.bf16.msra.mxu0 0
  %1014 = vmatpush.bf16.msra.mxu0 0
  %1015 = vmatpush.bf16.msra.mxu0 0
  %1016 = vmatpush.bf16.msra.mxu0 0
  %1017 = vmatpush.bf16.msra.mxu0 %v971
  %1018 = vmatmul.bf16.gmra.mxu0 %v965
  %v1019 = vpop.f32.mrf.mxu0
  %v1020 = vadd.f32 0.0, %v1019
  %v1021 = vpop.f32.mrf.mxu0
  %1022 = vdwg.mxu0
  %1023 = vmatpush.bf16.msra.mxu0 0
  %1024 = vmatpush.bf16.msra.mxu0 0
  %1025 = vmatpush.bf16.msra.mxu0 0
  %1026 = vmatpush.bf16.msra.mxu0 0
  %1027 = vmatpush.bf16.msra.mxu0 0
  %1028 = vmatpush.bf16.msra.mxu0 0
  %1029 = vmatpush.bf16.msra.mxu0 0
  %1030 = vmatpush.bf16.msra.mxu0 %v974
  %1031 = vmatmul.bf16.gmra.mxu0 %v965
  %v1032 = vpop.f32.mrf.mxu0
  %v1033 = vadd.f32 0.0, %v1032
  %v1034 = vpop.f32.mrf.mxu0
  %1035 = vdwg.mxu0
  %1036 = vmatpush.bf16.msra.mxu0 0
  %1037 = vmatpush.bf16.msra.mxu0 0
  %1038 = vmatpush.bf16.msra.mxu0 0
  %1039 = vmatpush.bf16.msra.mxu0 0
  %1040 = vmatpush.bf16.msra.mxu0 0
  %1041 = vmatpush.bf16.msra.mxu0 0
  %1042 = vmatpush.bf16.msra.mxu0 0
  %1043 = vmatpush.bf16.msra.mxu0 %v977
  %1044 = vmatmul.bf16.gmra.mxu0 %v965
  %v1045 = vpop.f32.mrf.mxu0
  %v1046 = vadd.f32 0.0, %v1045
  %v1047 = vpop.f32.mrf.mxu0
  %1048 = vdwg.mxu0
  %1049 = vmatpush.bf16.msra.mxu0 0
  %1050 = vmatpush.bf16.msra.mxu0 0
  %1051 = vmatpush.bf16.msra.mxu0 0
  %1052 = vmatpush.bf16.msra.mxu0 0
  %1053 = vmatpush.bf16.msra.mxu0 0
  %1054 = vmatpush.bf16.msra.mxu0 0
  %1055 = vmatpush.bf16.msra.mxu0 0
  %1056 = vmatpush.bf16.msra.mxu0 %v980
  %1057 = vmatmul.bf16.gmra.mxu0 %v965
  %v1058 = vpop.f32.mrf.mxu0
  %v1059 = vadd.f32 0.0, %v1058
  %v1060 = vpop.f32.mrf.mxu0
  %1061 = vdwg.mxu0
  %1062 = vmatpush.bf16.msra.mxu0 0
  %1063 = vmatpush.bf16.msra.mxu0 0
  %1064 = vmatpush.bf16.msra.mxu0 0
  %1065 = vmatpush.bf16.msra.mxu0 0
  %1066 = vmatpush.bf16.msra.mxu0 0
  %1067 = vmatpush.bf16.msra.mxu0 0
  %1068 = vmatpush.bf16.msra.mxu0 0
  %1069 = vmatpush.bf16.msra.mxu0 %v983
  %1070 = vmatmul.bf16.gmra.mxu0 %v965
  %v1071 = vpop.f32.mrf.mxu0
  %v1072 = vadd.f32 0.0, %v1071
  %v1073 = vpop.f32.mrf.mxu0
  %1074 = vdwg.mxu0
  %1075 = vmatpush.bf16.msra.mxu0 0
  %1076 = vmatpush.bf16.msra.mxu0 0
  %1077 = vmatpush.bf16.msra.mxu0 0
  %1078 = vmatpush.bf16.msra.mxu0 0
  %1079 = vmatpush.bf16.msra.mxu0 0
  %1080 = vmatpush.bf16.msra.mxu0 0
  %1081 = vmatpush.bf16.msra.mxu0 0
  %1082 = vmatpush.bf16.msra.mxu0 %v986
  %1083 = vmatmul.bf16.gmra.mxu0 %v965
  %v1084 = vpop.f32.mrf.mxu0
  %v1085 = vadd.f32 0.0, %v1084
  %v1086 = vpop.f32.mrf.mxu0
  %1087 = vdwg.mxu0
  %1088 = vmatpush.bf16.msra.mxu0 0
  %1089 = vmatpush.bf16.msra.mxu0 0
  %1090 = vmatpush.bf16.msra.mxu0 0
  %1091 = vmatpush.bf16.msra.mxu0 0
  %1092 = vmatpush.bf16.msra.mxu0 0
  %1093 = vmatpush.bf16.msra.mxu0 0
  %1094 = vmatpush.bf16.msra.mxu0 0
  %1095 = vmatpush.bf16.msra.mxu0 %v989
  %1096 = vmatmul.bf16.gmra.mxu0 %v965
  %v1097 = vpop.f32.mrf.mxu0
  %v1098 = vadd.f32 0.0, %v1097
  %v1099 = vpop.f32.mrf.mxu0
  %1100 = vdwg.mxu0
  %1101 = vmatpush.bf16.msra.mxu0 0
  %1102 = vmatpush.bf16.msra.mxu0 0
  %1103 = vmatpush.bf16.msra.mxu0 0
  %1104 = vmatpush.bf16.msra.mxu0 0
  %1105 = vmatpush.bf16.msra.mxu0 0
  %1106 = vmatpush.bf16.msra.mxu0 0
  %1107 = vmatpush.bf16.msra.mxu0 0
  %1108 = vmatpush.bf16.msra.mxu0 %v992
  %1109 = vmatmul.bf16.gmra.mxu0 %v965
  %v1110 = vpop.f32.mrf.mxu0
  %v1111 = vadd.f32 0.0, %v1110
  %v1112 = vpop.f32.mrf.mxu0
  %1113 = vdwg.mxu0
  %1114 = vmatpush.bf16.msra.mxu0 0
  %1115 = vmatpush.bf16.msra.mxu0 0
  %1116 = vmatpush.bf16.msra.mxu0 0
  %1117 = vmatpush.bf16.msra.mxu0 0
  %1118 = vmatpush.bf16.msra.mxu0 0
  %1119 = vmatpush.bf16.msra.mxu0 0
  %1120 = vmatpush.bf16.msra.mxu0 0
  %1121 = vmatpush.bf16.msra.mxu0 %v995
  %1122 = vmatmul.bf16.gmra.mxu0 %v965
  %v1123 = vpop.f32.mrf.mxu0
  %v1124 = vadd.f32 0.0, %v1123
  %v1125 = vpop.f32.mrf.mxu0
  %1126 = vdwg.mxu0
  %v1127 = vadd.f32 %v887, %v1007
  %v1128 = vadd.f32 %v888, %v1020
  %v1129 = vadd.f32 %v889, %v1033
  %v1130 = vadd.f32 %v890, %v1046
  %v1131 = vadd.f32 %v891, %v1059
  %v1132 = vadd.f32 %v892, %v1072
  %v1133 = vadd.f32 %v893, %v1085
  %v1134 = vadd.f32 %v894, %v1098
  %v1135 = vadd.f32 %v895, %v1111
  %v1136 = vadd.f32 %v896, %v1124
  %v1137 = vld [vmem:[%s0] sm:$0xff]
  %v1138 = vld [vmem:[%s0 + $0x8] sm:$0xff]
  %v1139 = vld [vmem:[%s0 + $0x10] sm:$0x3f]
  %s1140 = scalar_lea.vmem %s1, 20
  %v1141 = vld [vmem:[%s1140] sm:$0xf]
  %1143 = vst [vmem:[#allocation1] ss:$4 sm:$0xff] %v1137
  %s1145 = scalar_lea.vmem [#allocation1], 32
  %1146 = vst [vmem:[%s1145] ss:$4 sm:$0xff] %v1138
  %v1147 = vld.sshfl [vmem:[#allocation1] sm:$0xff pattern:$0x73625140]
  %v1149 = vld.sshfl [vmem:[#allocation1 + $0x8] sm:$0xff pattern:$0x73625140]
  %v1151 = vld.sshfl [vmem:[#allocation1 + $0x10] sm:$0xff pattern:$0x73625140]
  %v1153 = vld.sshfl [vmem:[#allocation1 + $0x18] sm:$0xff pattern:$0x73625140]
  %v1155 = vld.sshfl [vmem:[#allocation1 + $0x20] sm:$0xff pattern:$0x73625140]
  %v1157 = vld.sshfl [vmem:[#allocation1 + $0x28] sm:$0xff pattern:$0x73625140]
  %v1159 = vld.sshfl [vmem:[#allocation1 + $0x30] sm:$0xff pattern:$0x73625140]
  %v1161 = vld.sshfl [vmem:[#allocation1 + $0x38] sm:$0xff pattern:$0x73625140]
  %1164 = vst [vmem:[#allocation1] ss:$4 sm:$0xff] %v1139
  %v1165 = vld.sshfl [vmem:[#allocation1] sm:$0xff pattern:$0x73625140]
  %v1167 = vld.sshfl [vmem:[#allocation1 + $0x8] sm:$0xff pattern:$0x73625140]
  %v1169 = vld.sshfl [vmem:[#allocation1 + $0x10] sm:$0xff pattern:$0x73625140]
  %1171 = vrot.lane.b32.xlu0 %v1147, 91
  %v1172 = vpop.permute.xlu0 %1171
  %1173 = vrot.lane.b32.xlu0 %v1149, 91
  %v1174 = vpop.permute.xlu0 %1173
  %1175 = vrot.lane.b32.xlu0 %v1151, 91
  %v1176 = vpop.permute.xlu0 %1175
  %1177 = vrot.lane.b32.xlu0 %v1153, 91
  %v1178 = vpop.permute.xlu0 %1177
  %1179 = vrot.lane.b32.xlu0 %v1155, 91
  %v1180 = vpop.permute.xlu0 %1179
  %1181 = vrot.lane.b32.xlu0 %v1157, 91
  %v1182 = vpop.permute.xlu0 %1181
  %1183 = vrot.lane.b32.xlu0 %v1159, 91
  %v1184 = vpop.permute.xlu0 %1183
  %1185 = vrot.lane.b32.xlu0 %v1161, 91
  %v1186 = vpop.permute.xlu0 %1185
  %1187 = vrot.lane.b32.xlu0 %v1165, 91
  %v1188 = vpop.permute.xlu0 %1187
  %1189 = vrot.lane.b32.xlu0 %v1167, 91
  %v1190 = vpop.permute.xlu0 %1189
  %1191 = vrot.lane.b32.xlu0 %v1169, 91
  %v1192 = vpop.permute.xlu0 %1191
  %vm1193 = vcmask 744448
  %v1194 = vsel %vm1193, %v1172, %v1174
  %v1195 = vsel %vm1193, %v1174, %v1176
  %v1196 = vsel %vm1193, %v1176, %v1178
  %v1197 = vsel %vm1193, %v1178, %v1180
  %v1198 = vsel %vm1193, %v1180, %v1182
  %v1199 = vsel %vm1193, %v1182, %v1184
  %v1200 = vsel %vm1193, %v1184, %v1186
  %v1201 = vsel %vm1193, %v1186, %v1188
  %v1202 = vsel %vm1193, %v1188, %v1190
  %v1203 = vsel %vm1193, %v1190, %v1192
  %v1205 = vsel %vm84, %v1141, 0
  %v1208 = vsel %vm88, %v1194, 0
  %v1211 = vsel %vm88, %v1195, 0
  %v1214 = vsel %vm88, %v1196, 0
  %v1217 = vsel %vm88, %v1197, 0
  %v1220 = vsel %vm88, %v1198, 0
  %v1223 = vsel %vm88, %v1199, 0
  %v1226 = vsel %vm88, %v1200, 0
  %v1229 = vsel %vm88, %v1201, 0
  %v1232 = vsel %vm88, %v1202, 0
  %v1235 = vsel %vm88, %v1203, 0
  %1237 = vmatpush.bf16.msra.mxu0 0
  %1238 = vmatpush.bf16.msra.mxu0 0
  %1239 = vmatpush.bf16.msra.mxu0 0
  %1240 = vmatpush.bf16.msra.mxu0 0
  %1241 = vmatpush.bf16.msra.mxu0 0
  %1242 = vmatpush.bf16.msra.mxu0 0
  %1243 = vmatpush.bf16.msra.mxu0 0
  %1244 = vmatpush.bf16.msra.mxu0 %v1208
  %1245 = vmatmul.bf16.gmra.mxu0 %v1205
  %v1246 = vpop.f32.mrf.mxu0
  %v1247 = vadd.f32 0.0, %v1246
  %v1248 = vpop.f32.mrf.mxu0
  %1249 = vdwg.mxu0
  %1250 = vmatpush.bf16.msra.mxu0 0
  %1251 = vmatpush.bf16.msra.mxu0 0
  %1252 = vmatpush.bf16.msra.mxu0 0
  %1253 = vmatpush.bf16.msra.mxu0 0
  %1254 = vmatpush.bf16.msra.mxu0 0
  %1255 = vmatpush.bf16.msra.mxu0 0
  %1256 = vmatpush.bf16.msra.mxu0 0
  %1257 = vmatpush.bf16.msra.mxu0 %v1211
  %1258 = vmatmul.bf16.gmra.mxu0 %v1205
  %v1259 = vpop.f32.mrf.mxu0
  %v1260 = vadd.f32 0.0, %v1259
  %v1261 = vpop.f32.mrf.mxu0
  %1262 = vdwg.mxu0
  %1263 = vmatpush.bf16.msra.mxu0 0
  %1264 = vmatpush.bf16.msra.mxu0 0
  %1265 = vmatpush.bf16.msra.mxu0 0
  %1266 = vmatpush.bf16.msra.mxu0 0
  %1267 = vmatpush.bf16.msra.mxu0 0
  %1268 = vmatpush.bf16.msra.mxu0 0
  %1269 = vmatpush.bf16.msra.mxu0 0
  %1270 = vmatpush.bf16.msra.mxu0 %v1214
  %1271 = vmatmul.bf16.gmra.mxu0 %v1205
  %v1272 = vpop.f32.mrf.mxu0
  %v1273 = vadd.f32 0.0, %v1272
  %v1274 = vpop.f32.mrf.mxu0
  %1275 = vdwg.mxu0
  %1276 = vmatpush.bf16.msra.mxu0 0
  %1277 = vmatpush.bf16.msra.mxu0 0
  %1278 = vmatpush.bf16.msra.mxu0 0
  %1279 = vmatpush.bf16.msra.mxu0 0
  %1280 = vmatpush.bf16.msra.mxu0 0
  %1281 = vmatpush.bf16.msra.mxu0 0
  %1282 = vmatpush.bf16.msra.mxu0 0
  %1283 = vmatpush.bf16.msra.mxu0 %v1217
  %1284 = vmatmul.bf16.gmra.mxu0 %v1205
  %v1285 = vpop.f32.mrf.mxu0
  %v1286 = vadd.f32 0.0, %v1285
  %v1287 = vpop.f32.mrf.mxu0
  %1288 = vdwg.mxu0
  %1289 = vmatpush.bf16.msra.mxu0 0
  %1290 = vmatpush.bf16.msra.mxu0 0
  %1291 = vmatpush.bf16.msra.mxu0 0
  %1292 = vmatpush.bf16.msra.mxu0 0
  %1293 = vmatpush.bf16.msra.mxu0 0
  %1294 = vmatpush.bf16.msra.mxu0 0
  %1295 = vmatpush.bf16.msra.mxu0 0
  %1296 = vmatpush.bf16.msra.mxu0 %v1220
  %1297 = vmatmul.bf16.gmra.mxu0 %v1205
  %v1298 = vpop.f32.mrf.mxu0
  %v1299 = vadd.f32 0.0, %v1298
  %v1300 = vpop.f32.mrf.mxu0
  %1301 = vdwg.mxu0
  %1302 = vmatpush.bf16.msra.mxu0 0
  %1303 = vmatpush.bf16.msra.mxu0 0
  %1304 = vmatpush.bf16.msra.mxu0 0
  %1305 = vmatpush.bf16.msra.mxu0 0
  %1306 = vmatpush.bf16.msra.mxu0 0
  %1307 = vmatpush.bf16.msra.mxu0 0
  %1308 = vmatpush.bf16.msra.mxu0 0
  %1309 = vmatpush.bf16.msra.mxu0 %v1223
  %1310 = vmatmul.bf16.gmra.mxu0 %v1205
  %v1311 = vpop.f32.mrf.mxu0
  %v1312 = vadd.f32 0.0, %v1311
  %v1313 = vpop.f32.mrf.mxu0
  %1314 = vdwg.mxu0
  %1315 = vmatpush.bf16.msra.mxu0 0
  %1316 = vmatpush.bf16.msra.mxu0 0
  %1317 = vmatpush.bf16.msra.mxu0 0
  %1318 = vmatpush.bf16.msra.mxu0 0
  %1319 = vmatpush.bf16.msra.mxu0 0
  %1320 = vmatpush.bf16.msra.mxu0 0
  %1321 = vmatpush.bf16.msra.mxu0 0
  %1322 = vmatpush.bf16.msra.mxu0 %v1226
  %1323 = vmatmul.bf16.gmra.mxu0 %v1205
  %v1324 = vpop.f32.mrf.mxu0
  %v1325 = vadd.f32 0.0, %v1324
  %v1326 = vpop.f32.mrf.mxu0
  %1327 = vdwg.mxu0
  %1328 = vmatpush.bf16.msra.mxu0 0
  %1329 = vmatpush.bf16.msra.mxu0 0
  %1330 = vmatpush.bf16.msra.mxu0 0
  %1331 = vmatpush.bf16.msra.mxu0 0
  %1332 = vmatpush.bf16.msra.mxu0 0
  %1333 = vmatpush.bf16.msra.mxu0 0
  %1334 = vmatpush.bf16.msra.mxu0 0
  %1335 = vmatpush.bf16.msra.mxu0 %v1229
  %1336 = vmatmul.bf16.gmra.mxu0 %v1205
  %v1337 = vpop.f32.mrf.mxu0
  %v1338 = vadd.f32 0.0, %v1337
  %v1339 = vpop.f32.mrf.mxu0
  %1340 = vdwg.mxu0
  %1341 = vmatpush.bf16.msra.mxu0 0
  %1342 = vmatpush.bf16.msra.mxu0 0
  %1343 = vmatpush.bf16.msra.mxu0 0
  %1344 = vmatpush.bf16.msra.mxu0 0
  %1345 = vmatpush.bf16.msra.mxu0 0
  %1346 = vmatpush.bf16.msra.mxu0 0
  %1347 = vmatpush.bf16.msra.mxu0 0
  %1348 = vmatpush.bf16.msra.mxu0 %v1232
  %1349 = vmatmul.bf16.gmra.mxu0 %v1205
  %v1350 = vpop.f32.mrf.mxu0
  %v1351 = vadd.f32 0.0, %v1350
  %v1352 = vpop.f32.mrf.mxu0
  %1353 = vdwg.mxu0
  %1354 = vmatpush.bf16.msra.mxu0 0
  %1355 = vmatpush.bf16.msra.mxu0 0
  %1356 = vmatpush.bf16.msra.mxu0 0
  %1357 = vmatpush.bf16.msra.mxu0 0
  %1358 = vmatpush.bf16.msra.mxu0 0
  %1359 = vmatpush.bf16.msra.mxu0 0
  %1360 = vmatpush.bf16.msra.mxu0 0
  %1361 = vmatpush.bf16.msra.mxu0 %v1235
  %1362 = vmatmul.bf16.gmra.mxu0 %v1205
  %v1363 = vpop.f32.mrf.mxu0
  %v1364 = vadd.f32 0.0, %v1363
  %v1365 = vpop.f32.mrf.mxu0
  %1366 = vdwg.mxu0
  %v1367 = vadd.f32 %v1127, %v1247
  %v1368 = vadd.f32 %v1128, %v1260
  %v1369 = vadd.f32 %v1129, %v1273
  %v1370 = vadd.f32 %v1130, %v1286
  %v1371 = vadd.f32 %v1131, %v1299
  %v1372 = vadd.f32 %v1132, %v1312
  %v1373 = vadd.f32 %v1133, %v1325
  %v1374 = vadd.f32 %v1134, %v1338
  %v1375 = vadd.f32 %v1135, %v1351
  %v1376 = vadd.f32 %v1136, %v1364
  %v1377 = vld [vmem:[%s0] sm:$0xff]
  %v1378 = vld [vmem:[%s0 + $0x8] sm:$0xff]
  %v1379 = vld [vmem:[%s0 + $0x10] sm:$0x3f]
  %s1380 = scalar_lea.vmem %s1, 24
  %v1381 = vld [vmem:[%s1380] sm:$0xf]
  %1383 = vst [vmem:[#allocation1] ss:$4 sm:$0xff] %v1377
  %s1385 = scalar_lea.vmem [#allocation1], 32
  %1386 = vst [vmem:[%s1385] ss:$4 sm:$0xff] %v1378
  %v1387 = vld.sshfl [vmem:[#allocation1] sm:$0xff pattern:$0x73625140]
  %v1389 = vld.sshfl [vmem:[#allocation1 + $0x8] sm:$0xff pattern:$0x73625140]
  %v1391 = vld.sshfl [vmem:[#allocation1 + $0x10] sm:$0xff pattern:$0x73625140]
  %v1393 = vld.sshfl [vmem:[#allocation1 + $0x18] sm:$0xff pattern:$0x73625140]
  %v1395 = vld.sshfl [vmem:[#allocation1 + $0x20] sm:$0xff pattern:$0x73625140]
  %v1397 = vld.sshfl [vmem:[#allocation1 + $0x28] sm:$0xff pattern:$0x73625140]
  %v1399 = vld.sshfl [vmem:[#allocation1 + $0x30] sm:$0xff pattern:$0x73625140]
  %v1401 = vld.sshfl [vmem:[#allocation1 + $0x38] sm:$0xff pattern:$0x73625140]
  %1404 = vst [vmem:[#allocation1] ss:$4 sm:$0xff] %v1379
  %v1405 = vld.sshfl [vmem:[#allocation1] sm:$0xff pattern:$0x73625140]
  %v1407 = vld.sshfl [vmem:[#allocation1 + $0x8] sm:$0xff pattern:$0x73625140]
  %v1409 = vld.sshfl [vmem:[#allocation1 + $0x10] sm:$0xff pattern:$0x73625140]
  %1411 = vrot.lane.b32.xlu0 %v1387, 58
  %v1412 = vpop.permute.xlu0 %1411
  %1413 = vrot.lane.b32.xlu0 %v1389, 58
  %v1414 = vpop.permute.xlu0 %1413
  %1415 = vrot.lane.b32.xlu0 %v1391, 58
  %v1416 = vpop.permute.xlu0 %1415
  %1417 = vrot.lane.b32.xlu0 %v1393, 58
  %v1418 = vpop.permute.xlu0 %1417
  %1419 = vrot.lane.b32.xlu0 %v1395, 58
  %v1420 = vpop.permute.xlu0 %1419
  %1421 = vrot.lane.b32.xlu0 %v1397, 58
  %v1422 = vpop.permute.xlu0 %1421
  %1423 = vrot.lane.b32.xlu0 %v1399, 58
  %v1424 = vpop.permute.xlu0 %1423
  %1425 = vrot.lane.b32.xlu0 %v1401, 58
  %v1426 = vpop.permute.xlu0 %1425
  %1427 = vrot.lane.b32.xlu0 %v1405, 58
  %v1428 = vpop.permute.xlu0 %1427
  %1429 = vrot.lane.b32.xlu0 %v1407, 58
  %v1430 = vpop.permute.xlu0 %1429
  %1431 = vrot.lane.b32.xlu0 %v1409, 58
  %v1432 = vpop.permute.xlu0 %1431
  %vm1433 = vcmask 474112
  %v1434 = vsel %vm1433, %v1412, %v1414
  %v1435 = vsel %vm1433, %v1414, %v1416
  %v1436 = vsel %vm1433, %v1416, %v1418
  %v1437 = vsel %vm1433, %v1418, %v1420
  %v1438 = vsel %vm1433, %v1420, %v1422
  %v1439 = vsel %vm1433, %v1422, %v1424
  %v1440 = vsel %vm1433, %v1424, %v1426
  %v1441 = vsel %vm1433, %v1426, %v1428
  %v1442 = vsel %vm1433, %v1428, %v1430
  %v1443 = vsel %vm1433, %v1430, %v1432
  %v1445 = vsel %vm84, %v1381, 0
  %v1448 = vsel %vm88, %v1434, 0
  %v1451 = vsel %vm88, %v1435, 0
  %v1454 = vsel %vm88, %v1436, 0
  %v1457 = vsel %vm88, %v1437, 0
  %v1460 = vsel %vm88, %v1438, 0
  %v1463 = vsel %vm88, %v1439, 0
  %v1466 = vsel %vm88, %v1440, 0
  %v1469 = vsel %vm88, %v1441, 0
  %v1472 = vsel %vm88, %v1442, 0
  %v1475 = vsel %vm88, %v1443, 0
  %1477 = vmatpush.bf16.msra.mxu0 0
  %1478 = vmatpush.bf16.msra.mxu0 0
  %1479 = vmatpush.bf16.msra.mxu0 0
  %1480 = vmatpush.bf16.msra.mxu0 0
  %1481 = vmatpush.bf16.msra.mxu0 0
  %1482 = vmatpush.bf16.msra.mxu0 0
  %1483 = vmatpush.bf16.msra.mxu0 0
  %1484 = vmatpush.bf16.msra.mxu0 %v1448
  %1485 = vmatmul.bf16.gmra.mxu0 %v1445
  %v1486 = vpop.f32.mrf.mxu0
  %v1487 = vadd.f32 0.0, %v1486
  %v1488 = vpop.f32.mrf.mxu0
  %1489 = vdwg.mxu0
  %1490 = vmatpush.bf16.msra.mxu0 0
  %1491 = vmatpush.bf16.msra.mxu0 0
  %1492 = vmatpush.bf16.msra.mxu0 0
  %1493 = vmatpush.bf16.msra.mxu0 0
  %1494 = vmatpush.bf16.msra.mxu0 0
  %1495 = vmatpush.bf16.msra.mxu0 0
  %1496 = vmatpush.bf16.msra.mxu0 0
  %1497 = vmatpush.bf16.msra.mxu0 %v1451
  %1498 = vmatmul.bf16.gmra.mxu0 %v1445
  %v1499 = vpop.f32.mrf.mxu0
  %v1500 = vadd.f32 0.0, %v1499
  %v1501 = vpop.f32.mrf.mxu0
  %1502 = vdwg.mxu0
  %1503 = vmatpush.bf16.msra.mxu0 0
  %1504 = vmatpush.bf16.msra.mxu0 0
  %1505 = vmatpush.bf16.msra.mxu0 0
  %1506 = vmatpush.bf16.msra.mxu0 0
  %1507 = vmatpush.bf16.msra.mxu0 0
  %1508 = vmatpush.bf16.msra.mxu0 0
  %1509 = vmatpush.bf16.msra.mxu0 0
  %1510 = vmatpush.bf16.msra.mxu0 %v1454
  %1511 = vmatmul.bf16.gmra.mxu0 %v1445
  %v1512 = vpop.f32.mrf.mxu0
  %v1513 = vadd.f32 0.0, %v1512
  %v1514 = vpop.f32.mrf.mxu0
  %1515 = vdwg.mxu0
  %1516 = vmatpush.bf16.msra.mxu0 0
  %1517 = vmatpush.bf16.msra.mxu0 0
  %1518 = vmatpush.bf16.msra.mxu0 0
  %1519 = vmatpush.bf16.msra.mxu0 0
  %1520 = vmatpush.bf16.msra.mxu0 0
  %1521 = vmatpush.bf16.msra.mxu0 0
  %1522 = vmatpush.bf16.msra.mxu0 0
  %1523 = vmatpush.bf16.msra.mxu0 %v1457
  %1524 = vmatmul.bf16.gmra.mxu0 %v1445
  %v1525 = vpop.f32.mrf.mxu0
  %v1526 = vadd.f32 0.0, %v1525
  %v1527 = vpop.f32.mrf.mxu0
  %1528 = vdwg.mxu0
  %1529 = vmatpush.bf16.msra.mxu0 0
  %1530 = vmatpush.bf16.msra.mxu0 0
  %1531 = vmatpush.bf16.msra.mxu0 0
  %1532 = vmatpush.bf16.msra.mxu0 0
  %1533 = vmatpush.bf16.msra.mxu0 0
  %1534 = vmatpush.bf16.msra.mxu0 0
  %1535 = vmatpush.bf16.msra.mxu0 0
  %1536 = vmatpush.bf16.msra.mxu0 %v1460
  %1537 = vmatmul.bf16.gmra.mxu0 %v1445
  %v1538 = vpop.f32.mrf.mxu0
  %v1539 = vadd.f32 0.0, %v1538
  %v1540 = vpop.f32.mrf.mxu0
  %1541 = vdwg.mxu0
  %1542 = vmatpush.bf16.msra.mxu0 0
  %1543 = vmatpush.bf16.msra.mxu0 0
  %1544 = vmatpush.bf16.msra.mxu0 0
  %1545 = vmatpush.bf16.msra.mxu0 0
  %1546 = vmatpush.bf16.msra.mxu0 0
  %1547 = vmatpush.bf16.msra.mxu0 0
  %1548 = vmatpush.bf16.msra.mxu0 0
  %1549 = vmatpush.bf16.msra.mxu0 %v1463
  %1550 = vmatmul.bf16.gmra.mxu0 %v1445
  %v1551 = vpop.f32.mrf.mxu0
  %v1552 = vadd.f32 0.0, %v1551
  %v1553 = vpop.f32.mrf.mxu0
  %1554 = vdwg.mxu0
  %1555 = vmatpush.bf16.msra.mxu0 0
  %1556 = vmatpush.bf16.msra.mxu0 0
  %1557 = vmatpush.bf16.msra.mxu0 0
  %1558 = vmatpush.bf16.msra.mxu0 0
  %1559 = vmatpush.bf16.msra.mxu0 0
  %1560 = vmatpush.bf16.msra.mxu0 0
  %1561 = vmatpush.bf16.msra.mxu0 0
  %1562 = vmatpush.bf16.msra.mxu0 %v1466
  %1563 = vmatmul.bf16.gmra.mxu0 %v1445
  %v1564 = vpop.f32.mrf.mxu0
  %v1565 = vadd.f32 0.0, %v1564
  %v1566 = vpop.f32.mrf.mxu0
  %1567 = vdwg.mxu0
  %1568 = vmatpush.bf16.msra.mxu0 0
  %1569 = vmatpush.bf16.msra.mxu0 0
  %1570 = vmatpush.bf16.msra.mxu0 0
  %1571 = vmatpush.bf16.msra.mxu0 0
  %1572 = vmatpush.bf16.msra.mxu0 0
  %1573 = vmatpush.bf16.msra.mxu0 0
  %1574 = vmatpush.bf16.msra.mxu0 0
  %1575 = vmatpush.bf16.msra.mxu0 %v1469
  %1576 = vmatmul.bf16.gmra.mxu0 %v1445
  %v1577 = vpop.f32.mrf.mxu0
  %v1578 = vadd.f32 0.0, %v1577
  %v1579 = vpop.f32.mrf.mxu0
  %1580 = vdwg.mxu0
  %1581 = vmatpush.bf16.msra.mxu0 0
  %1582 = vmatpush.bf16.msra.mxu0 0
  %1583 = vmatpush.bf16.msra.mxu0 0
  %1584 = vmatpush.bf16.msra.mxu0 0
  %1585 = vmatpush.bf16.msra.mxu0 0
  %1586 = vmatpush.bf16.msra.mxu0 0
  %1587 = vmatpush.bf16.msra.mxu0 0
  %1588 = vmatpush.bf16.msra.mxu0 %v1472
  %1589 = vmatmul.bf16.gmra.mxu0 %v1445
  %v1590 = vpop.f32.mrf.mxu0
  %v1591 = vadd.f32 0.0, %v1590
  %v1592 = vpop.f32.mrf.mxu0
  %1593 = vdwg.mxu0
  %1594 = vmatpush.bf16.msra.mxu0 0
  %1595 = vmatpush.bf16.msra.mxu0 0
  %1596 = vmatpush.bf16.msra.mxu0 0
  %1597 = vmatpush.bf16.msra.mxu0 0
  %1598 = vmatpush.bf16.msra.mxu0 0
  %1599 = vmatpush.bf16.msra.mxu0 0
  %1600 = vmatpush.bf16.msra.mxu0 0
  %1601 = vmatpush.bf16.msra.mxu0 %v1475
  %1602 = vmatmul.bf16.gmra.mxu0 %v1445
  %v1603 = vpop.f32.mrf.mxu0
  %v1604 = vadd.f32 0.0, %v1603
  %v1605 = vpop.f32.mrf.mxu0
  %1606 = vdwg.mxu0
  %v1607 = vadd.f32 %v1367, %v1487
  %v1608 = vadd.f32 %v1368, %v1500
  %v1609 = vadd.f32 %v1369, %v1513
  %v1610 = vadd.f32 %v1370, %v1526
  %v1611 = vadd.f32 %v1371, %v1539
  %v1612 = vadd.f32 %v1372, %v1552
  %v1613 = vadd.f32 %v1373, %v1565
  %v1614 = vadd.f32 %v1374, %v1578
  %v1615 = vadd.f32 %v1375, %v1591
  %v1616 = vadd.f32 %v1376, %v1604
  %v1617 = vld [vmem:[%s0] sm:$0xff]
  %v1618 = vld [vmem:[%s0 + $0x8] sm:$0xff]
  %v1619 = vld [vmem:[%s0 + $0x10] sm:$0x3f]
  %s1620 = scalar_lea.vmem %s1, 28
  %v1621 = vld [vmem:[%s1620] sm:$0xf]
  %1623 = vst [vmem:[#allocation1] ss:$4 sm:$0xff] %v1617
  %s1625 = scalar_lea.vmem [#allocation1], 32
  %1626 = vst [vmem:[%s1625] ss:$4 sm:$0xff] %v1618
  %v1627 = vld.sshfl [vmem:[#allocation1] sm:$0xff pattern:$0x73625140]
  %v1629 = vld.sshfl [vmem:[#allocation1 + $0x8] sm:$0xff pattern:$0x73625140]
  %v1631 = vld.sshfl [vmem:[#allocation1 + $0x10] sm:$0xff pattern:$0x73625140]
  %v1633 = vld.sshfl [vmem:[#allocation1 + $0x18] sm:$0xff pattern:$0x73625140]
  %v1635 = vld.sshfl [vmem:[#allocation1 + $0x20] sm:$0xff pattern:$0x73625140]
  %v1637 = vld.sshfl [vmem:[#allocation1 + $0x28] sm:$0xff pattern:$0x73625140]
  %v1639 = vld.sshfl [vmem:[#allocation1 + $0x30] sm:$0xff pattern:$0x73625140]
  %v1641 = vld.sshfl [vmem:[#allocation1 + $0x38] sm:$0xff pattern:$0x73625140]
  %1644 = vst [vmem:[#allocation1] ss:$4 sm:$0xff] %v1619
  %v1645 = vld.sshfl [vmem:[#allocation1] sm:$0xff pattern:$0x73625140]
  %v1647 = vld.sshfl [vmem:[#allocation1 + $0x8] sm:$0xff pattern:$0x73625140]
  %v1649 = vld.sshfl [vmem:[#allocation1 + $0x10] sm:$0xff pattern:$0x73625140]
  %1651 = vrot.lane.b32.xlu0 %v1627, 57
  %v1652 = vpop.permute.xlu0 %1651
  %1653 = vrot.lane.b32.xlu0 %v1629, 57
  %v1654 = vpop.permute.xlu0 %1653
  %1655 = vrot.lane.b32.xlu0 %v1631, 57
  %v1656 = vpop.permute.xlu0 %1655
  %1657 = vrot.lane.b32.xlu0 %v1633, 57
  %v1658 = vpop.permute.xlu0 %1657
  %1659 = vrot.lane.b32.xlu0 %v1635, 57
  %v1660 = vpop.permute.xlu0 %1659
  %1661 = vrot.lane.b32.xlu0 %v1637, 57
  %v1662 = vpop.permute.xlu0 %1661
  %1663 = vrot.lane.b32.xlu0 %v1639, 57
  %v1664 = vpop.permute.xlu0 %1663
  %1665 = vrot.lane.b32.xlu0 %v1641, 57
  %v1666 = vpop.permute.xlu0 %1665
  %1667 = vrot.lane.b32.xlu0 %v1645, 57
  %v1668 = vpop.permute.xlu0 %1667
  %1669 = vrot.lane.b32.xlu0 %v1647, 57
  %v1670 = vpop.permute.xlu0 %1669
  %1671 = vrot.lane.b32.xlu0 %v1649, 57
  %v1672 = vpop.permute.xlu0 %1671
  %vm1673 = vcmask 465920
  %v1674 = vsel %vm1673, %v1652, %v1654
  %v1675 = vsel %vm1673, %v1654, %v1656
  %v1676 = vsel %vm1673, %v1656, %v1658
  %v1677 = vsel %vm1673, %v1658, %v1660
  %v1678 = vsel %vm1673, %v1660, %v1662
  %v1679 = vsel %vm1673, %v1662, %v1664
  %v1680 = vsel %vm1673, %v1664, %v1666
  %v1681 = vsel %vm1673, %v1666, %v1668
  %v1682 = vsel %vm1673, %v1668, %v1670
  %v1683 = vsel %vm1673, %v1670, %v1672
  %v1685 = vsel %vm84, %v1621, 0
  %v1688 = vsel %vm88, %v1674, 0
  %v1691 = vsel %vm88, %v1675, 0
  %v1694 = vsel %vm88, %v1676, 0
  %v1697 = vsel %vm88, %v1677, 0
  %v1700 = vsel %vm88, %v1678, 0
  %v1703 = vsel %vm88, %v1679, 0
  %v1706 = vsel %vm88, %v1680, 0
  %v1709 = vsel %vm88, %v1681, 0
  %v1712 = vsel %vm88, %v1682, 0
  %v1715 = vsel %vm88, %v1683, 0
  %1717 = vmatpush.bf16.msra.mxu0 0
  %1718 = vmatpush.bf16.msra.mxu0 0
  %1719 = vmatpush.bf16.msra.mxu0 0
  %1720 = vmatpush.bf16.msra.mxu0 0
  %1721 = vmatpush.bf16.msra.mxu0 0
  %1722 = vmatpush.bf16.msra.mxu0 0
  %1723 = vmatpush.bf16.msra.mxu0 0
  %1724 = vmatpush.bf16.msra.mxu0 %v1688
  %1725 = vmatmul.bf16.gmra.mxu0 %v1685
  %v1726 = vpop.f32.mrf.mxu0
  %v1727 = vadd.f32 0.0, %v1726
  %v1728 = vpop.f32.mrf.mxu0
  %1729 = vdwg.mxu0
  %1730 = vmatpush.bf16.msra.mxu0 0
  %1731 = vmatpush.bf16.msra.mxu0 0
  %1732 = vmatpush.bf16.msra.mxu0 0
  %1733 = vmatpush.bf16.msra.mxu0 0
  %1734 = vmatpush.bf16.msra.mxu0 0
  %1735 = vmatpush.bf16.msra.mxu0 0
  %1736 = vmatpush.bf16.msra.mxu0 0
  %1737 = vmatpush.bf16.msra.mxu0 %v1691
  %1738 = vmatmul.bf16.gmra.mxu0 %v1685
  %v1739 = vpop.f32.mrf.mxu0
  %v1740 = vadd.f32 0.0, %v1739
  %v1741 = vpop.f32.mrf.mxu0
  %1742 = vdwg.mxu0
  %1743 = vmatpush.bf16.msra.mxu0 0
  %1744 = vmatpush.bf16.msra.mxu0 0
  %1745 = vmatpush.bf16.msra.mxu0 0
  %1746 = vmatpush.bf16.msra.mxu0 0
  %1747 = vmatpush.bf16.msra.mxu0 0
  %1748 = vmatpush.bf16.msra.mxu0 0
  %1749 = vmatpush.bf16.msra.mxu0 0
  %1750 = vmatpush.bf16.msra.mxu0 %v1694
  %1751 = vmatmul.bf16.gmra.mxu0 %v1685
  %v1752 = vpop.f32.mrf.mxu0
  %v1753 = vadd.f32 0.0, %v1752
  %v1754 = vpop.f32.mrf.mxu0
  %1755 = vdwg.mxu0
  %1756 = vmatpush.bf16.msra.mxu0 0
  %1757 = vmatpush.bf16.msra.mxu0 0
  %1758 = vmatpush.bf16.msra.mxu0 0
  %1759 = vmatpush.bf16.msra.mxu0 0
  %1760 = vmatpush.bf16.msra.mxu0 0
  %1761 = vmatpush.bf16.msra.mxu0 0
  %1762 = vmatpush.bf16.msra.mxu0 0
  %1763 = vmatpush.bf16.msra.mxu0 %v1697
  %1764 = vmatmul.bf16.gmra.mxu0 %v1685
  %v1765 = vpop.f32.mrf.mxu0
  %v1766 = vadd.f32 0.0, %v1765
  %v1767 = vpop.f32.mrf.mxu0
  %1768 = vdwg.mxu0
  %1769 = vmatpush.bf16.msra.mxu0 0
  %1770 = vmatpush.bf16.msra.mxu0 0
  %1771 = vmatpush.bf16.msra.mxu0 0
  %1772 = vmatpush.bf16.msra.mxu0 0
  %1773 = vmatpush.bf16.msra.mxu0 0
  %1774 = vmatpush.bf16.msra.mxu0 0
  %1775 = vmatpush.bf16.msra.mxu0 0
  %1776 = vmatpush.bf16.msra.mxu0 %v1700
  %1777 = vmatmul.bf16.gmra.mxu0 %v1685
  %v1778 = vpop.f32.mrf.mxu0
  %v1779 = vadd.f32 0.0, %v1778
  %v1780 = vpop.f32.mrf.mxu0
  %1781 = vdwg.mxu0
  %1782 = vmatpush.bf16.msra.mxu0 0
  %1783 = vmatpush.bf16.msra.mxu0 0
  %1784 = vmatpush.bf16.msra.mxu0 0
  %1785 = vmatpush.bf16.msra.mxu0 0
  %1786 = vmatpush.bf16.msra.mxu0 0
  %1787 = vmatpush.bf16.msra.mxu0 0
  %1788 = vmatpush.bf16.msra.mxu0 0
  %1789 = vmatpush.bf16.msra.mxu0 %v1703
  %1790 = vmatmul.bf16.gmra.mxu0 %v1685
  %v1791 = vpop.f32.mrf.mxu0
  %v1792 = vadd.f32 0.0, %v1791
  %v1793 = vpop.f32.mrf.mxu0
  %1794 = vdwg.mxu0
  %1795 = vmatpush.bf16.msra.mxu0 0
  %1796 = vmatpush.bf16.msra.mxu0 0
  %1797 = vmatpush.bf16.msra.mxu0 0
  %1798 = vmatpush.bf16.msra.mxu0 0
  %1799 = vmatpush.bf16.msra.mxu0 0
  %1800 = vmatpush.bf16.msra.mxu0 0
  %1801 = vmatpush.bf16.msra.mxu0 0
  %1802 = vmatpush.bf16.msra.mxu0 %v1706
  %1803 = vmatmul.bf16.gmra.mxu0 %v1685
  %v1804 = vpop.f32.mrf.mxu0
  %v1805 = vadd.f32 0.0, %v1804
  %v1806 = vpop.f32.mrf.mxu0
  %1807 = vdwg.mxu0
  %1808 = vmatpush.bf16.msra.mxu0 0
  %1809 = vmatpush.bf16.msra.mxu0 0
  %1810 = vmatpush.bf16.msra.mxu0 0
  %1811 = vmatpush.bf16.msra.mxu0 0
  %1812 = vmatpush.bf16.msra.mxu0 0
  %1813 = vmatpush.bf16.msra.mxu0 0
  %1814 = vmatpush.bf16.msra.mxu0 0
  %1815 = vmatpush.bf16.msra.mxu0 %v1709
  %1816 = vmatmul.bf16.gmra.mxu0 %v1685
  %v1817 = vpop.f32.mrf.mxu0
  %v1818 = vadd.f32 0.0, %v1817
  %v1819 = vpop.f32.mrf.mxu0
  %1820 = vdwg.mxu0
  %1821 = vmatpush.bf16.msra.mxu0 0
  %1822 = vmatpush.bf16.msra.mxu0 0
  %1823 = vmatpush.bf16.msra.mxu0 0
  %1824 = vmatpush.bf16.msra.mxu0 0
  %1825 = vmatpush.bf16.msra.mxu0 0
  %1826 = vmatpush.bf16.msra.mxu0 0
  %1827 = vmatpush.bf16.msra.mxu0 0
  %1828 = vmatpush.bf16.msra.mxu0 %v1712
  %1829 = vmatmul.bf16.gmra.mxu0 %v1685
  %v1830 = vpop.f32.mrf.mxu0
  %v1831 = vadd.f32 0.0, %v1830
  %v1832 = vpop.f32.mrf.mxu0
  %1833 = vdwg.mxu0
  %1834 = vmatpush.bf16.msra.mxu0 0
  %1835 = vmatpush.bf16.msra.mxu0 0
  %1836 = vmatpush.bf16.msra.mxu0 0
  %1837 = vmatpush.bf16.msra.mxu0 0
  %1838 = vmatpush.bf16.msra.mxu0 0
  %1839 = vmatpush.bf16.msra.mxu0 0
  %1840 = vmatpush.bf16.msra.mxu0 0
  %1841 = vmatpush.bf16.msra.mxu0 %v1715
  %1842 = vmatmul.bf16.gmra.mxu0 %v1685
  %v1843 = vpop.f32.mrf.mxu0
  %v1844 = vadd.f32 0.0, %v1843
  %v1845 = vpop.f32.mrf.mxu0
  %1846 = vdwg.mxu0
  %v1847 = vadd.f32 %v1607, %v1727
  %v1848 = vadd.f32 %v1608, %v1740
  %v1849 = vadd.f32 %v1609, %v1753
  %v1850 = vadd.f32 %v1610, %v1766
  %v1851 = vadd.f32 %v1611, %v1779
  %v1852 = vadd.f32 %v1612, %v1792
  %v1853 = vadd.f32 %v1613, %v1805
  %v1854 = vadd.f32 %v1614, %v1818
  %v1855 = vadd.f32 %v1615, %v1831
  %v1856 = vadd.f32 %v1616, %v1844
  %v1857 = vld [vmem:[%s0] sm:$0xff]
  %v1858 = vld [vmem:[%s0 + $0x8] sm:$0xff]
  %v1859 = vld [vmem:[%s0 + $0x10] sm:$0x3f]
  %s1860 = scalar_lea.vmem %s1, 32
  %v1861 = vld [vmem:[%s1860] sm:$0xf]
  %1863 = vst [vmem:[#allocation1] ss:$4 sm:$0xff] %v1857
  %s1865 = scalar_lea.vmem [#allocation1], 32
  %1866 = vst [vmem:[%s1865] ss:$4 sm:$0xff] %v1858
  %v1867 = vld.sshfl [vmem:[#allocation1] sm:$0xff pattern:$0x73625140]
  %v1869 = vld.sshfl [vmem:[#allocation1 + $0x8] sm:$0xff pattern:$0x73625140]
  %v1871 = vld.sshfl [vmem:[#allocation1 + $0x10] sm:$0xff pattern:$0x73625140]
  %v1873 = vld.sshfl [vmem:[#allocation1 + $0x18] sm:$0xff pattern:$0x73625140]
  %v1875 = vld.sshfl [vmem:[#allocation1 + $0x20] sm:$0xff pattern:$0x73625140]
  %v1877 = vld.sshfl [vmem:[#allocation1 + $0x28] sm:$0xff pattern:$0x73625140]
  %v1879 = vld.sshfl [vmem:[#allocation1 + $0x30] sm:$0xff pattern:$0x73625140]
  %v1881 = vld.sshfl [vmem:[#allocation1 + $0x38] sm:$0xff pattern:$0x73625140]
  %1884 = vst [vmem:[#allocation1] ss:$4 sm:$0xff] %v1859
  %v1885 = vld.sshfl [vmem:[#allocation1] sm:$0xff pattern:$0x73625140]
  %v1887 = vld.sshfl [vmem:[#allocation1 + $0x8] sm:$0xff pattern:$0x73625140]
  %v1889 = vld.sshfl [vmem:[#allocation1 + $0x10] sm:$0xff pattern:$0x73625140]
  %1891 = vrot.lane.b32.xlu0 %v1867, 56
  %v1892 = vpop.permute.xlu0 %1891
  %1893 = vrot.lane.b32.xlu0 %v1869, 56
  %v1894 = vpop.permute.xlu0 %1893
  %1895 = vrot.lane.b32.xlu0 %v1871, 56
  %v1896 = vpop.permute.xlu0 %1895
  %1897 = vrot.lane.b32.xlu0 %v1873, 56
  %v1898 = vpop.permute.xlu0 %1897
  %1899 = vrot.lane.b32.xlu0 %v1875, 56
  %v1900 = vpop.permute.xlu0 %1899
  %1901 = vrot.lane.b32.xlu0 %v1877, 56
  %v1902 = vpop.permute.xlu0 %1901
  %1903 = vrot.lane.b32.xlu0 %v1879, 56
  %v1904 = vpop.permute.xlu0 %1903
  %1905 = vrot.lane.b32.xlu0 %v1881, 56
  %v1906 = vpop.permute.xlu0 %1905
  %1907 = vrot.lane.b32.xlu0 %v1885, 56
  %v1908 = vpop.permute.xlu0 %1907
  %1909 = vrot.lane.b32.xlu0 %v1887, 56
  %v1910 = vpop.permute.xlu0 %1909
  %1911 = vrot.lane.b32.xlu0 %v1889, 56
  %v1912 = vpop.permute.xlu0 %1911
  %vm1913 = vcmask 457728
  %v1914 = vsel %vm1913, %v1892, %v1894
  %v1915 = vsel %vm1913, %v1894, %v1896
  %v1916 = vsel %vm1913, %v1896, %v1898
  %v1917 = vsel %vm1913, %v1898, %v1900
  %v1918 = vsel %vm1913, %v1900, %v1902
  %v1919 = vsel %vm1913, %v1902, %v1904
  %v1920 = vsel %vm1913, %v1904, %v1906
  %v1921 = vsel %vm1913, %v1906, %v1908
  %v1922 = vsel %vm1913, %v1908, %v1910
  %v1923 = vsel %vm1913, %v1910, %v1912
  %v1925 = vsel %vm84, %v1861, 0
  %v1928 = vsel %vm88, %v1914, 0
  %v1931 = vsel %vm88, %v1915, 0
  %v1934 = vsel %vm88, %v1916, 0
  %v1937 = vsel %vm88, %v1917, 0
  %v1940 = vsel %vm88, %v1918, 0
  %v1943 = vsel %vm88, %v1919, 0
  %v1946 = vsel %vm88, %v1920, 0
  %v1949 = vsel %vm88, %v1921, 0
  %v1952 = vsel %vm88, %v1922, 0
  %v1955 = vsel %vm88, %v1923, 0
  %1957 = vmatpush.bf16.msra.mxu0 0
  %1958 = vmatpush.bf16.msra.mxu0 0
  %1959 = vmatpush.bf16.msra.mxu0 0
  %1960 = vmatpush.bf16.msra.mxu0 0
  %1961 = vmatpush.bf16.msra.mxu0 0
  %1962 = vmatpush.bf16.msra.mxu0 0
  %1963 = vmatpush.bf16.msra.mxu0 0
  %1964 = vmatpush.bf16.msra.mxu0 %v1928
  %1965 = vmatmul.bf16.gmra.mxu0 %v1925
  %v1966 = vpop.f32.mrf.mxu0
  %v1967 = vadd.f32 0.0, %v1966
  %v1968 = vpop.f32.mrf.mxu0
  %1969 = vdwg.mxu0
  %1970 = vmatpush.bf16.msra.mxu0 0
  %1971 = vmatpush.bf16.msra.mxu0 0
  %1972 = vmatpush.bf16.msra.mxu0 0
  %1973 = vmatpush.bf16.msra.mxu0 0
  %1974 = vmatpush.bf16.msra.mxu0 0
  %1975 = vmatpush.bf16.msra.mxu0 0
  %1976 = vmatpush.bf16.msra.mxu0 0
  %1977 = vmatpush.bf16.msra.mxu0 %v1931
  %1978 = vmatmul.bf16.gmra.mxu0 %v1925
  %v1979 = vpop.f32.mrf.mxu0
  %v1980 = vadd.f32 0.0, %v1979
  %v1981 = vpop.f32.mrf.mxu0
  %1982 = vdwg.mxu0
  %1983 = vmatpush.bf16.msra.mxu0 0
  %1984 = vmatpush.bf16.msra.mxu0 0
  %1985 = vmatpush.bf16.msra.mxu0 0
  %1986 = vmatpush.bf16.msra.mxu0 0
  %1987 = vmatpush.bf16.msra.mxu0 0
  %1988 = vmatpush.bf16.msra.mxu0 0
  %1989 = vmatpush.bf16.msra.mxu0 0
  %1990 = vmatpush.bf16.msra.mxu0 %v1934
  %1991 = vmatmul.bf16.gmra.mxu0 %v1925
  %v1992 = vpop.f32.mrf.mxu0
  %v1993 = vadd.f32 0.0, %v1992
  %v1994 = vpop.f32.mrf.mxu0
  %1995 = vdwg.mxu0
  %1996 = vmatpush.bf16.msra.mxu0 0
  %1997 = vmatpush.bf16.msra.mxu0 0
  %1998 = vmatpush.bf16.msra.mxu0 0
  %1999 = vmatpush.bf16.msra.mxu0 0
  %2000 = vmatpush.bf16.msra.mxu0 0
  %2001 = vmatpush.bf16.msra.mxu0 0
  %2002 = vmatpush.bf16.msra.mxu0 0
  %2003 = vmatpush.bf16.msra.mxu0 %v1937
  %2004 = vmatmul.bf16.gmra.mxu0 %v1925
  %v2005 = vpop.f32.mrf.mxu0
  %v2006 = vadd.f32 0.0, %v2005
  %v2007 = vpop.f32.mrf.mxu0
  %2008 = vdwg.mxu0
  %2009 = vmatpush.bf16.msra.mxu0 0
  %2010 = vmatpush.bf16.msra.mxu0 0
  %2011 = vmatpush.bf16.msra.mxu0 0
  %2012 = vmatpush.bf16.msra.mxu0 0
  %2013 = vmatpush.bf16.msra.mxu0 0
  %2014 = vmatpush.bf16.msra.mxu0 0
  %2015 = vmatpush.bf16.msra.mxu0 0
  %2016 = vmatpush.bf16.msra.mxu0 %v1940
  %2017 = vmatmul.bf16.gmra.mxu0 %v1925
  %v2018 = vpop.f32.mrf.mxu0
  %v2019 = vadd.f32 0.0, %v2018
  %v2020 = vpop.f32.mrf.mxu0
  %2021 = vdwg.mxu0
  %2022 = vmatpush.bf16.msra.mxu0 0
  %2023 = vmatpush.bf16.msra.mxu0 0
  %2024 = vmatpush.bf16.msra.mxu0 0
  %2025 = vmatpush.bf16.msra.mxu0 0
  %2026 = vmatpush.bf16.msra.mxu0 0
  %2027 = vmatpush.bf16.msra.mxu0 0
  %2028 = vmatpush.bf16.msra.mxu0 0
  %2029 = vmatpush.bf16.msra.mxu0 %v1943
  %2030 = vmatmul.bf16.gmra.mxu0 %v1925
  %v2031 = vpop.f32.mrf.mxu0
  %v2032 = vadd.f32 0.0, %v2031
  %v2033 = vpop.f32.mrf.mxu0
  %2034 = vdwg.mxu0
  %2035 = vmatpush.bf16.msra.mxu0 0
  %2036 = vmatpush.bf16.msra.mxu0 0
  %2037 = vmatpush.bf16.msra.mxu0 0
  %2038 = vmatpush.bf16.msra.mxu0 0
  %2039 = vmatpush.bf16.msra.mxu0 0
  %2040 = vmatpush.bf16.msra.mxu0 0
  %2041 = vmatpush.bf16.msra.mxu0 0
  %2042 = vmatpush.bf16.msra.mxu0 %v1946
  %2043 = vmatmul.bf16.gmra.mxu0 %v1925
  %v2044 = vpop.f32.mrf.mxu0
  %v2045 = vadd.f32 0.0, %v2044
  %v2046 = vpop.f32.mrf.mxu0
  %2047 = vdwg.mxu0
  %2048 = vmatpush.bf16.msra.mxu0 0
  %2049 = vmatpush.bf16.msra.mxu0 0
  %2050 = vmatpush.bf16.msra.mxu0 0
  %2051 = vmatpush.bf16.msra.mxu0 0
  %2052 = vmatpush.bf16.msra.mxu0 0
  %2053 = vmatpush.bf16.msra.mxu0 0
  %2054 = vmatpush.bf16.msra.mxu0 0
  %2055 = vmatpush.bf16.msra.mxu0 %v1949
  %2056 = vmatmul.bf16.gmra.mxu0 %v1925
  %v2057 = vpop.f32.mrf.mxu0
  %v2058 = vadd.f32 0.0, %v2057
  %v2059 = vpop.f32.mrf.mxu0
  %2060 = vdwg.mxu0
  %2061 = vmatpush.bf16.msra.mxu0 0
  %2062 = vmatpush.bf16.msra.mxu0 0
  %2063 = vmatpush.bf16.msra.mxu0 0
  %2064 = vmatpush.bf16.msra.mxu0 0
  %2065 = vmatpush.bf16.msra.mxu0 0
  %2066 = vmatpush.bf16.msra.mxu0 0
  %2067 = vmatpush.bf16.msra.mxu0 0
  %2068 = vmatpush.bf16.msra.mxu0 %v1952
  %2069 = vmatmul.bf16.gmra.mxu0 %v1925
  %v2070 = vpop.f32.mrf.mxu0
  %v2071 = vadd.f32 0.0, %v2070
  %v2072 = vpop.f32.mrf.mxu0
  %2073 = vdwg.mxu0
  %2074 = vmatpush.bf16.msra.mxu0 0
  %2075 = vmatpush.bf16.msra.mxu0 0
  %2076 = vmatpush.bf16.msra.mxu0 0
  %2077 = vmatpush.bf16.msra.mxu0 0
  %2078 = vmatpush.bf16.msra.mxu0 0
  %2079 = vmatpush.bf16.msra.mxu0 0
  %2080 = vmatpush.bf16.msra.mxu0 0
  %2081 = vmatpush.bf16.msra.mxu0 %v1955
  %2082 = vmatmul.bf16.gmra.mxu0 %v1925
  %v2083 = vpop.f32.mrf.mxu0
  %v2084 = vadd.f32 0.0, %v2083
  %v2085 = vpop.f32.mrf.mxu0
  %2086 = vdwg.mxu0
  %v2087 = vadd.f32 %v1847, %v1967
  %v2088 = vadd.f32 %v1848, %v1980
  %v2089 = vadd.f32 %v1849, %v1993
  %v2090 = vadd.f32 %v1850, %v2006
  %v2091 = vadd.f32 %v1851, %v2019
  %v2092 = vadd.f32 %v1852, %v2032
  %v2093 = vadd.f32 %v1853, %v2045
  %v2094 = vadd.f32 %v1854, %v2058
  %v2095 = vadd.f32 %v1855, %v2071
  %v2096 = vadd.f32 %v1856, %v2084
  %v2097 = vld [vmem:[%s2] sm:$0xff]
  %2099 = vset.pattern.permute.xlu0 0
  %2100 = vperm.xlu0 %2099, %v2097
  %v2101 = vpop.permute.xlu0 %2100
  %v2103 = vadd.f32 %v2087, %v2101
  %v2104 = vadd.f32 %v2088, %v2101
  %v2105 = vadd.f32 %v2089, %v2101
  %v2106 = vadd.f32 %v2090, %v2101
  %v2107 = vadd.f32 %v2091, %v2101
  %v2108 = vadd.f32 %v2092, %v2101
  %v2109 = vadd.f32 %v2093, %v2101
  %v2110 = vadd.f32 %v2094, %v2101
  %v2111 = vadd.f32 %v2095, %v2101
  %v2112 = vadd.f32 %v2096, %v2101
  %2113 = vst [vmem:[%s3] sm:$0xff] %v2103
  %2114 = vst [vmem:[%s3 + $0x8] sm:$0xff] %v2104
  %2115 = vst [vmem:[%s3 + $0x10] sm:$0xff] %v2105
  %2116 = vst [vmem:[%s3 + $0x18] sm:$0xff] %v2106
  %2117 = vst [vmem:[%s3 + $0x20] sm:$0xff] %v2107
  %2118 = vst [vmem:[%s3 + $0x28] sm:$0xff] %v2108
  %2119 = vst [vmem:[%s3 + $0x30] sm:$0xff] %v2109
  %2120 = vst [vmem:[%s3 + $0x38] sm:$0xff] %v2110
  %2121 = vst [vmem:[%s3 + $0x40] sm:$0xff] %v2111
  %2122 = vst [vmem:[%s3 + $0x48] sm:$0xff] %v2112
  %s2123 = scalar_lea.vmem %s0, 22
  %v2124 = vld [vmem:[%s2123] sm:$0xff]
  %v2125 = vld [vmem:[%s2123 + $0x8] sm:$0xff]
  %v2126 = vld [vmem:[%s2123 + $0x10] sm:$0xf]
  %v2127 = vld [vmem:[%s1] sm:$0xf]
  %v2128 = vld [vmem:[%s2123 + $0x10] sm:$0x3f]
  %v2129 = vld [vmem:[%s20] sm:$0xf]
  %2131 = vst [vmem:[#allocation1] ss:$4 sm:$0xff] %v2124
  %s2133 = scalar_lea.vmem [#allocation1], 32
  %2134 = vst [vmem:[%s2133] ss:$4 sm:$0xff] %v2125
  %v2135 = vld.sshfl [vmem:[#allocation1] sm:$0xff pattern:$0x73625140]
  %v2137 = vld.sshfl [vmem:[#allocation1 + $0x8] sm:$0xff pattern:$0x73625140]
  %v2139 = vld.sshfl [vmem:[#allocation1 + $0x10] sm:$0xff pattern:$0x73625140]
  %v2141 = vld.sshfl [vmem:[#allocation1 + $0x18] sm:$0xff pattern:$0x73625140]
  %v2143 = vld.sshfl [vmem:[#allocation1 + $0x20] sm:$0xff pattern:$0x73625140]
  %v2145 = vld.sshfl [vmem:[#allocation1 + $0x28] sm:$0xff pattern:$0x73625140]
  %v2147 = vld.sshfl [vmem:[#allocation1 + $0x30] sm:$0xff pattern:$0x73625140]
  %v2149 = vld.sshfl [vmem:[#allocation1 + $0x38] sm:$0xff pattern:$0x73625140]
  %2152 = vst [vmem:[#allocation1] ss:$4 sm:$0xff] %v2128
  %v2153 = vld.sshfl [vmem:[#allocation1] sm:$0xff pattern:$0x73625140]
  %v2155 = vld.sshfl [vmem:[#allocation1 + $0x8] sm:$0xff pattern:$0x73625140]
  %v2157 = vld.sshfl [vmem:[#allocation1 + $0x10] sm:$0xff pattern:$0x73625140]
  %2159 = vrot.lane.b32.xlu0 %v2135, 127
  %v2160 = vpop.permute.xlu0 %2159
  %2161 = vrot.lane.b32.xlu0 %v2137, 127
  %v2162 = vpop.permute.xlu0 %2161
  %2163 = vrot.lane.b32.xlu0 %v2139, 127
  %v2164 = vpop.permute.xlu0 %2163
  %2165 = vrot.lane.b32.xlu0 %v2141, 127
  %v2166 = vpop.permute.xlu0 %2165
  %2167 = vrot.lane.b32.xlu0 %v2143, 127
  %v2168 = vpop.permute.xlu0 %2167
  %2169 = vrot.lane.b32.xlu0 %v2145, 127
  %v2170 = vpop.permute.xlu0 %2169
  %2171 = vrot.lane.b32.xlu0 %v2147, 127
  %v2172 = vpop.permute.xlu0 %2171
  %2173 = vrot.lane.b32.xlu0 %v2149, 127
  %v2174 = vpop.permute.xlu0 %2173
  %2175 = vrot.lane.b32.xlu0 %v2153, 127
  %v2176 = vpop.permute.xlu0 %2175
  %2177 = vrot.lane.b32.xlu0 %v2155, 127
  %v2178 = vpop.permute.xlu0 %2177
  %2179 = vrot.lane.b32.xlu0 %v2157, 127
  %v2180 = vpop.permute.xlu0 %2179
  %v2181 = vsel %vm73, %v2160, %v2162
  %v2182 = vsel %vm73, %v2162, %v2164
  %v2183 = vsel %vm73, %v2164, %v2166
  %v2184 = vsel %vm73, %v2166, %v2168
  %v2185 = vsel %vm73, %v2168, %v2170
  %v2186 = vsel %vm73, %v2170, %v2172
  %v2187 = vsel %vm73, %v2172, %v2174
  %v2188 = vsel %vm73, %v2174, %v2176
  %v2189 = vsel %vm73, %v2176, %v2178
  %v2190 = vsel %vm73, %v2178, %v2180
  %v2192 = vsel %vm84, %v2129, 0
  %v2195 = vsel %vm88, %v2181, 0
  %v2198 = vsel %vm88, %v2182, 0
  %v2201 = vsel %vm88, %v2183, 0
  %v2204 = vsel %vm88, %v2184, 0
  %v2207 = vsel %vm88, %v2185, 0
  %v2210 = vsel %vm88, %v2186, 0
  %v2213 = vsel %vm88, %v2187, 0
  %v2216 = vsel %vm88, %v2188, 0
  %v2219 = vsel %vm88, %v2189, 0
  %v2222 = vsel %vm88, %v2190, 0
  %2224 = vmatpush.bf16.msra.mxu0 0
  %2225 = vmatpush.bf16.msra.mxu0 0
  %2226 = vmatpush.bf16.msra.mxu0 0
  %2227 = vmatpush.bf16.msra.mxu0 0
  %2228 = vmatpush.bf16.msra.mxu0 0
  %2229 = vmatpush.bf16.msra.mxu0 0
  %2230 = vmatpush.bf16.msra.mxu0 0
  %2231 = vmatpush.bf16.msra.mxu0 %v2195
  %2232 = vmatmul.bf16.gmra.mxu0 %v2192
  %v2233 = vpop.f32.mrf.mxu0
  %v2234 = vadd.f32 0.0, %v2233
  %v2235 = vpop.f32.mrf.mxu0
  %2236 = vdwg.mxu0
  %2237 = vmatpush.bf16.msra.mxu0 0
  %2238 = vmatpush.bf16.msra.mxu0 0
  %2239 = vmatpush.bf16.msra.mxu0 0
  %2240 = vmatpush.bf16.msra.mxu0 0
  %2241 = vmatpush.bf16.msra.mxu0 0
  %2242 = vmatpush.bf16.msra.mxu0 0
  %2243 = vmatpush.bf16.msra.mxu0 0
  %2244 = vmatpush.bf16.msra.mxu0 %v2198
  %2245 = vmatmul.bf16.gmra.mxu0 %v2192
  %v2246 = vpop.f32.mrf.mxu0
  %v2247 = vadd.f32 0.0, %v2246
  %v2248 = vpop.f32.mrf.mxu0
  %2249 = vdwg.mxu0
  %2250 = vmatpush.bf16.msra.mxu0 0
  %2251 = vmatpush.bf16.msra.mxu0 0
  %2252 = vmatpush.bf16.msra.mxu0 0
  %2253 = vmatpush.bf16.msra.mxu0 0
  %2254 = vmatpush.bf16.msra.mxu0 0
  %2255 = vmatpush.bf16.msra.mxu0 0
  %2256 = vmatpush.bf16.msra.mxu0 0
  %2257 = vmatpush.bf16.msra.mxu0 %v2201
  %2258 = vmatmul.bf16.gmra.mxu0 %v2192
  %v2259 = vpop.f32.mrf.mxu0
  %v2260 = vadd.f32 0.0, %v2259
  %v2261 = vpop.f32.mrf.mxu0
  %2262 = vdwg.mxu0
  %2263 = vmatpush.bf16.msra.mxu0 0
  %2264 = vmatpush.bf16.msra.mxu0 0
  %2265 = vmatpush.bf16.msra.mxu0 0
  %2266 = vmatpush.bf16.msra.mxu0 0
  %2267 = vmatpush.bf16.msra.mxu0 0
  %2268 = vmatpush.bf16.msra.mxu0 0
  %2269 = vmatpush.bf16.msra.mxu0 0
  %2270 = vmatpush.bf16.msra.mxu0 %v2204
  %2271 = vmatmul.bf16.gmra.mxu0 %v2192
  %v2272 = vpop.f32.mrf.mxu0
  %v2273 = vadd.f32 0.0, %v2272
  %v2274 = vpop.f32.mrf.mxu0
  %2275 = vdwg.mxu0
  %2276 = vmatpush.bf16.msra.mxu0 0
  %2277 = vmatpush.bf16.msra.mxu0 0
  %2278 = vmatpush.bf16.msra.mxu0 0
  %2279 = vmatpush.bf16.msra.mxu0 0
  %2280 = vmatpush.bf16.msra.mxu0 0
  %2281 = vmatpush.bf16.msra.mxu0 0
  %2282 = vmatpush.bf16.msra.mxu0 0
  %2283 = vmatpush.bf16.msra.mxu0 %v2207
  %2284 = vmatmul.bf16.gmra.mxu0 %v2192
  %v2285 = vpop.f32.mrf.mxu0
  %v2286 = vadd.f32 0.0, %v2285
  %v2287 = vpop.f32.mrf.mxu0
  %2288 = vdwg.mxu0
  %2289 = vmatpush.bf16.msra.mxu0 0
  %2290 = vmatpush.bf16.msra.mxu0 0
  %2291 = vmatpush.bf16.msra.mxu0 0
  %2292 = vmatpush.bf16.msra.mxu0 0
  %2293 = vmatpush.bf16.msra.mxu0 0
  %2294 = vmatpush.bf16.msra.mxu0 0
  %2295 = vmatpush.bf16.msra.mxu0 0
  %2296 = vmatpush.bf16.msra.mxu0 %v2210
  %2297 = vmatmul.bf16.gmra.mxu0 %v2192
  %v2298 = vpop.f32.mrf.mxu0
  %v2299 = vadd.f32 0.0, %v2298
  %v2300 = vpop.f32.mrf.mxu0
  %2301 = vdwg.mxu0
  %2302 = vmatpush.bf16.msra.mxu0 0
  %2303 = vmatpush.bf16.msra.mxu0 0
  %2304 = vmatpush.bf16.msra.mxu0 0
  %2305 = vmatpush.bf16.msra.mxu0 0
  %2306 = vmatpush.bf16.msra.mxu0 0
  %2307 = vmatpush.bf16.msra.mxu0 0
  %2308 = vmatpush.bf16.msra.mxu0 0
  %2309 = vmatpush.bf16.msra.mxu0 %v2213
  %2310 = vmatmul.bf16.gmra.mxu0 %v2192
  %v2311 = vpop.f32.mrf.mxu0
  %v2312 = vadd.f32 0.0, %v2311
  %v2313 = vpop.f32.mrf.mxu0
  %2314 = vdwg.mxu0
  %2315 = vmatpush.bf16.msra.mxu0 0
  %2316 = vmatpush.bf16.msra.mxu0 0
  %2317 = vmatpush.bf16.msra.mxu0 0
  %2318 = vmatpush.bf16.msra.mxu0 0
  %2319 = vmatpush.bf16.msra.mxu0 0
  %2320 = vmatpush.bf16.msra.mxu0 0
  %2321 = vmatpush.bf16.msra.mxu0 0
  %2322 = vmatpush.bf16.msra.mxu0 %v2216
  %2323 = vmatmul.bf16.gmra.mxu0 %v2192
  %v2324 = vpop.f32.mrf.mxu0
  %v2325 = vadd.f32 0.0, %v2324
  %v2326 = vpop.f32.mrf.mxu0
  %2327 = vdwg.mxu0
  %2328 = vmatpush.bf16.msra.mxu0 0
  %2329 = vmatpush.bf16.msra.mxu0 0
  %2330 = vmatpush.bf16.msra.mxu0 0
  %2331 = vmatpush.bf16.msra.mxu0 0
  %2332 = vmatpush.bf16.msra.mxu0 0
  %2333 = vmatpush.bf16.msra.mxu0 0
  %2334 = vmatpush.bf16.msra.mxu0 0
  %2335 = vmatpush.bf16.msra.mxu0 %v2219
  %2336 = vmatmul.bf16.gmra.mxu0 %v2192
  %v2337 = vpop.f32.mrf.mxu0
  %v2338 = vadd.f32 0.0, %v2337
  %v2339 = vpop.f32.mrf.mxu0
  %2340 = vdwg.mxu0
  %2341 = vmatpush.bf16.msra.mxu0 0
  %2342 = vmatpush.bf16.msra.mxu0 0
  %2343 = vmatpush.bf16.msra.mxu0 0
  %2344 = vmatpush.bf16.msra.mxu0 0
  %2345 = vmatpush.bf16.msra.mxu0 0
  %2346 = vmatpush.bf16.msra.mxu0 0
  %2347 = vmatpush.bf16.msra.mxu0 0
  %2348 = vmatpush.bf16.msra.mxu0 %v2222
  %2349 = vmatmul.bf16.gmra.mxu0 %v2192
  %v2350 = vpop.f32.mrf.mxu0
  %v2351 = vadd.f32 0.0, %v2350
  %v2352 = vpop.f32.mrf.mxu0
  %2353 = vdwg.mxu0
  %2354 = vst [vmem:[#allocation1] ss:$4 sm:$0xff] %v2124
  %s2355 = scalar_lea.vmem [#allocation1], 32
  %2356 = vst [vmem:[%s2355] ss:$4 sm:$0xff] %v2125
  %v2357 = vld.sshfl [vmem:[#allocation1] sm:$0xff pattern:$0x73625140]
  %v2358 = vld.sshfl [vmem:[#allocation1 + $0x8] sm:$0xff pattern:$0x73625140]
  %v2359 = vld.sshfl [vmem:[#allocation1 + $0x10] sm:$0xff pattern:$0x73625140]
  %v2360 = vld.sshfl [vmem:[#allocation1 + $0x18] sm:$0xff pattern:$0x73625140]
  %v2361 = vld.sshfl [vmem:[#allocation1 + $0x20] sm:$0xff pattern:$0x73625140]
  %v2362 = vld.sshfl [vmem:[#allocation1 + $0x28] sm:$0xff pattern:$0x73625140]
  %v2363 = vld.sshfl [vmem:[#allocation1 + $0x30] sm:$0xff pattern:$0x73625140]
  %v2364 = vld.sshfl [vmem:[#allocation1 + $0x38] sm:$0xff pattern:$0x73625140]
  %2366 = vst [vmem:[#allocation1] ss:$4 sm:$0xff] %v2126
  %v2367 = vld.sshfl [vmem:[#allocation1] sm:$0xff pattern:$0x73625140]
  %v2368 = vld.sshfl [vmem:[#allocation1 + $0x8] sm:$0xff pattern:$0x73625140]
  %v2370 = vsel %vm84, %v2127, 0
  %v2372 = vsel %vm88, %v2357, 0
  %v2374 = vsel %vm88, %v2358, 0
  %v2376 = vsel %vm88, %v2359, 0
  %v2378 = vsel %vm88, %v2360, 0
  %v2380 = vsel %vm88, %v2361, 0
  %v2382 = vsel %vm88, %v2362, 0
  %v2384 = vsel %vm88, %v2363, 0
  %v2386 = vsel %vm88, %v2364, 0
  %v2388 = vsel %vm88, %v2367, 0
  %v2390 = vsel %vm88, %v2368, 0
  %2392 = vmatpush.bf16.msra.mxu0 0
  %2393 = vmatpush.bf16.msra.mxu0 0
  %2394 = vmatpush.bf16.msra.mxu0 0
  %2395 = vmatpush.bf16.msra.mxu0 0
  %2396 = vmatpush.bf16.msra.mxu0 0
  %2397 = vmatpush.bf16.msra.mxu0 0
  %2398 = vmatpush.bf16.msra.mxu0 0
  %2399 = vmatpush.bf16.msra.mxu0 %v2372
  %2400 = vmatmul.bf16.gmra.mxu0 %v2370
  %v2401 = vpop.f32.mrf.mxu0
  %v2402 = vadd.f32 %v2234, %v2401
  %v2403 = vpop.f32.mrf.mxu0
  %2404 = vdwg.mxu0
  %2405 = vmatpush.bf16.msra.mxu0 0
  %2406 = vmatpush.bf16.msra.mxu0 0
  %2407 = vmatpush.bf16.msra.mxu0 0
  %2408 = vmatpush.bf16.msra.mxu0 0
  %2409 = vmatpush.bf16.msra.mxu0 0
  %2410 = vmatpush.bf16.msra.mxu0 0
  %2411 = vmatpush.bf16.msra.mxu0 0
  %2412 = vmatpush.bf16.msra.mxu0 %v2374
  %2413 = vmatmul.bf16.gmra.mxu0 %v2370
  %v2414 = vpop.f32.mrf.mxu0
  %v2415 = vadd.f32 %v2247, %v2414
  %v2416 = vpop.f32.mrf.mxu0
  %2417 = vdwg.mxu0
  %2418 = vmatpush.bf16.msra.mxu0 0
  %2419 = vmatpush.bf16.msra.mxu0 0
  %2420 = vmatpush.bf16.msra.mxu0 0
  %2421 = vmatpush.bf16.msra.mxu0 0
  %2422 = vmatpush.bf16.msra.mxu0 0
  %2423 = vmatpush.bf16.msra.mxu0 0
  %2424 = vmatpush.bf16.msra.mxu0 0
  %2425 = vmatpush.bf16.msra.mxu0 %v2376
  %2426 = vmatmul.bf16.gmra.mxu0 %v2370
  %v2427 = vpop.f32.mrf.mxu0
  %v2428 = vadd.f32 %v2260, %v2427
  %v2429 = vpop.f32.mrf.mxu0
  %2430 = vdwg.mxu0
  %2431 = vmatpush.bf16.msra.mxu0 0
  %2432 = vmatpush.bf16.msra.mxu0 0
  %2433 = vmatpush.bf16.msra.mxu0 0
  %2434 = vmatpush.bf16.msra.mxu0 0
  %2435 = vmatpush.bf16.msra.mxu0 0
  %2436 = vmatpush.bf16.msra.mxu0 0
  %2437 = vmatpush.bf16.msra.mxu0 0
  %2438 = vmatpush.bf16.msra.mxu0 %v2378
  %2439 = vmatmul.bf16.gmra.mxu0 %v2370
  %v2440 = vpop.f32.mrf.mxu0
  %v2441 = vadd.f32 %v2273, %v2440
  %v2442 = vpop.f32.mrf.mxu0
  %2443 = vdwg.mxu0
  %2444 = vmatpush.bf16.msra.mxu0 0
  %2445 = vmatpush.bf16.msra.mxu0 0
  %2446 = vmatpush.bf16.msra.mxu0 0
  %2447 = vmatpush.bf16.msra.mxu0 0
  %2448 = vmatpush.bf16.msra.mxu0 0
  %2449 = vmatpush.bf16.msra.mxu0 0
  %2450 = vmatpush.bf16.msra.mxu0 0
  %2451 = vmatpush.bf16.msra.mxu0 %v2380
  %2452 = vmatmul.bf16.gmra.mxu0 %v2370
  %v2453 = vpop.f32.mrf.mxu0
  %v2454 = vadd.f32 %v2286, %v2453
  %v2455 = vpop.f32.mrf.mxu0
  %2456 = vdwg.mxu0
  %2457 = vmatpush.bf16.msra.mxu0 0
  %2458 = vmatpush.bf16.msra.mxu0 0
  %2459 = vmatpush.bf16.msra.mxu0 0
  %2460 = vmatpush.bf16.msra.mxu0 0
  %2461 = vmatpush.bf16.msra.mxu0 0
  %2462 = vmatpush.bf16.msra.mxu0 0
  %2463 = vmatpush.bf16.msra.mxu0 0
  %2464 = vmatpush.bf16.msra.mxu0 %v2382
  %2465 = vmatmul.bf16.gmra.mxu0 %v2370
  %v2466 = vpop.f32.mrf.mxu0
  %v2467 = vadd.f32 %v2299, %v2466
  %v2468 = vpop.f32.mrf.mxu0
  %2469 = vdwg.mxu0
  %2470 = vmatpush.bf16.msra.mxu0 0
  %2471 = vmatpush.bf16.msra.mxu0 0
  %2472 = vmatpush.bf16.msra.mxu0 0
  %2473 = vmatpush.bf16.msra.mxu0 0
  %2474 = vmatpush.bf16.msra.mxu0 0
  %2475 = vmatpush.bf16.msra.mxu0 0
  %2476 = vmatpush.bf16.msra.mxu0 0
  %2477 = vmatpush.bf16.msra.mxu0 %v2384
  %2478 = vmatmul.bf16.gmra.mxu0 %v2370
  %v2479 = vpop.f32.mrf.mxu0
  %v2480 = vadd.f32 %v2312, %v2479
  %v2481 = vpop.f32.mrf.mxu0
  %2482 = vdwg.mxu0
  %2483 = vmatpush.bf16.msra.mxu0 0
  %2484 = vmatpush.bf16.msra.mxu0 0
  %2485 = vmatpush.bf16.msra.mxu0 0
  %2486 = vmatpush.bf16.msra.mxu0 0
  %2487 = vmatpush.bf16.msra.mxu0 0
  %2488 = vmatpush.bf16.msra.mxu0 0
  %2489 = vmatpush.bf16.msra.mxu0 0
  %2490 = vmatpush.bf16.msra.mxu0 %v2386
  %2491 = vmatmul.bf16.gmra.mxu0 %v2370
  %v2492 = vpop.f32.mrf.mxu0
  %v2493 = vadd.f32 %v2325, %v2492
  %v2494 = vpop.f32.mrf.mxu0
  %2495 = vdwg.mxu0
  %2496 = vmatpush.bf16.msra.mxu0 0
  %2497 = vmatpush.bf16.msra.mxu0 0
  %2498 = vmatpush.bf16.msra.mxu0 0
  %2499 = vmatpush.bf16.msra.mxu0 0
  %2500 = vmatpush.bf16.msra.mxu0 0
  %2501 = vmatpush.bf16.msra.mxu0 0
  %2502 = vmatpush.bf16.msra.mxu0 0
  %2503 = vmatpush.bf16.msra.mxu0 %v2388
  %2504 = vmatmul.bf16.gmra.mxu0 %v2370
  %v2505 = vpop.f32.mrf.mxu0
  %v2506 = vadd.f32 %v2338, %v2505
  %v2507 = vpop.f32.mrf.mxu0
  %2508 = vdwg.mxu0
  %2509 = vmatpush.bf16.msra.mxu0 0
  %2510 = vmatpush.bf16.msra.mxu0 0
  %2511 = vmatpush.bf16.msra.mxu0 0
  %2512 = vmatpush.bf16.msra.mxu0 0
  %2513 = vmatpush.bf16.msra.mxu0 0
  %2514 = vmatpush.bf16.msra.mxu0 0
  %2515 = vmatpush.bf16.msra.mxu0 0
  %2516 = vmatpush.bf16.msra.mxu0 %v2390
  %2517 = vmatmul.bf16.gmra.mxu0 %v2370
  %v2518 = vpop.f32.mrf.mxu0
  %v2519 = vadd.f32 %v2351, %v2518
  %v2520 = vpop.f32.mrf.mxu0
  %2521 = vdwg.mxu0
  %v2522 = vld [vmem:[%s2123] sm:$0xff]
  %v2523 = vld [vmem:[%s2123 + $0x8] sm:$0xff]
  %v2524 = vld [vmem:[%s2123 + $0x10] sm:$0x3f]
  %v2525 = vld [vmem:[%s420] sm:$0xf]
  %2527 = vst [vmem:[#allocation1] ss:$4 sm:$0xff] %v2522
  %s2529 = scalar_lea.vmem [#allocation1], 32
  %2530 = vst [vmem:[%s2529] ss:$4 sm:$0xff] %v2523
  %v2531 = vld.sshfl [vmem:[#allocation1] sm:$0xff pattern:$0x73625140]
  %v2533 = vld.sshfl [vmem:[#allocation1 + $0x8] sm:$0xff pattern:$0x73625140]
  %v2535 = vld.sshfl [vmem:[#allocation1 + $0x10] sm:$0xff pattern:$0x73625140]
  %v2537 = vld.sshfl [vmem:[#allocation1 + $0x18] sm:$0xff pattern:$0x73625140]
  %v2539 = vld.sshfl [vmem:[#allocation1 + $0x20] sm:$0xff pattern:$0x73625140]
  %v2541 = vld.sshfl [vmem:[#allocation1 + $0x28] sm:$0xff pattern:$0x73625140]
  %v2543 = vld.sshfl [vmem:[#allocation1 + $0x30] sm:$0xff pattern:$0x73625140]
  %v2545 = vld.sshfl [vmem:[#allocation1 + $0x38] sm:$0xff pattern:$0x73625140]
  %2548 = vst [vmem:[#allocation1] ss:$4 sm:$0xff] %v2524
  %v2549 = vld.sshfl [vmem:[#allocation1] sm:$0xff pattern:$0x73625140]
  %v2551 = vld.sshfl [vmem:[#allocation1 + $0x8] sm:$0xff pattern:$0x73625140]
  %v2553 = vld.sshfl [vmem:[#allocation1 + $0x10] sm:$0xff pattern:$0x73625140]
  %2555 = vrot.lane.b32.xlu0 %v2531, 126
  %v2556 = vpop.permute.xlu0 %2555
  %2557 = vrot.lane.b32.xlu0 %v2533, 126
  %v2558 = vpop.permute.xlu0 %2557
  %2559 = vrot.lane.b32.xlu0 %v2535, 126
  %v2560 = vpop.permute.xlu0 %2559
  %2561 = vrot.lane.b32.xlu0 %v2537, 126
  %v2562 = vpop.permute.xlu0 %2561
  %2563 = vrot.lane.b32.xlu0 %v2539, 126
  %v2564 = vpop.permute.xlu0 %2563
  %2565 = vrot.lane.b32.xlu0 %v2541, 126
  %v2566 = vpop.permute.xlu0 %2565
  %2567 = vrot.lane.b32.xlu0 %v2543, 126
  %v2568 = vpop.permute.xlu0 %2567
  %2569 = vrot.lane.b32.xlu0 %v2545, 126
  %v2570 = vpop.permute.xlu0 %2569
  %2571 = vrot.lane.b32.xlu0 %v2549, 126
  %v2572 = vpop.permute.xlu0 %2571
  %2573 = vrot.lane.b32.xlu0 %v2551, 126
  %v2574 = vpop.permute.xlu0 %2573
  %2575 = vrot.lane.b32.xlu0 %v2553, 126
  %v2576 = vpop.permute.xlu0 %2575
  %v2577 = vsel %vm473, %v2556, %v2558
  %v2578 = vsel %vm473, %v2558, %v2560
  %v2579 = vsel %vm473, %v2560, %v2562
  %v2580 = vsel %vm473, %v2562, %v2564
  %v2581 = vsel %vm473, %v2564, %v2566
  %v2582 = vsel %vm473, %v2566, %v2568
  %v2583 = vsel %vm473, %v2568, %v2570
  %v2584 = vsel %vm473, %v2570, %v2572
  %v2585 = vsel %vm473, %v2572, %v2574
  %v2586 = vsel %vm473, %v2574, %v2576
  %v2588 = vsel %vm84, %v2525, 0
  %v2591 = vsel %vm88, %v2577, 0
  %v2594 = vsel %vm88, %v2578, 0
  %v2597 = vsel %vm88, %v2579, 0
  %v2600 = vsel %vm88, %v2580, 0
  %v2603 = vsel %vm88, %v2581, 0
  %v2606 = vsel %vm88, %v2582, 0
  %v2609 = vsel %vm88, %v2583, 0
  %v2612 = vsel %vm88, %v2584, 0
  %v2615 = vsel %vm88, %v2585, 0
  %v2618 = vsel %vm88, %v2586, 0
  %2620 = vmatpush.bf16.msra.mxu0 0
  %2621 = vmatpush.bf16.msra.mxu0 0
  %2622 = vmatpush.bf16.msra.mxu0 0
  %2623 = vmatpush.bf16.msra.mxu0 0
  %2624 = vmatpush.bf16.msra.mxu0 0
  %2625 = vmatpush.bf16.msra.mxu0 0
  %2626 = vmatpush.bf16.msra.mxu0 0
  %2627 = vmatpush.bf16.msra.mxu0 %v2591
  %2628 = vmatmul.bf16.gmra.mxu0 %v2588
  %v2629 = vpop.f32.mrf.mxu0
  %v2630 = vadd.f32 0.0, %v2629
  %v2631 = vpop.f32.mrf.mxu0
  %2632 = vdwg.mxu0
  %2633 = vmatpush.bf16.msra.mxu0 0
  %2634 = vmatpush.bf16.msra.mxu0 0
  %2635 = vmatpush.bf16.msra.mxu0 0
  %2636 = vmatpush.bf16.msra.mxu0 0
  %2637 = vmatpush.bf16.msra.mxu0 0
  %2638 = vmatpush.bf16.msra.mxu0 0
  %2639 = vmatpush.bf16.msra.mxu0 0
  %2640 = vmatpush.bf16.msra.mxu0 %v2594
  %2641 = vmatmul.bf16.gmra.mxu0 %v2588
  %v2642 = vpop.f32.mrf.mxu0
  %v2643 = vadd.f32 0.0, %v2642
  %v2644 = vpop.f32.mrf.mxu0
  %2645 = vdwg.mxu0
  %2646 = vmatpush.bf16.msra.mxu0 0
  %2647 = vmatpush.bf16.msra.mxu0 0
  %2648 = vmatpush.bf16.msra.mxu0 0
  %2649 = vmatpush.bf16.msra.mxu0 0
  %2650 = vmatpush.bf16.msra.mxu0 0
  %2651 = vmatpush.bf16.msra.mxu0 0
  %2652 = vmatpush.bf16.msra.mxu0 0
  %2653 = vmatpush.bf16.msra.mxu0 %v2597
  %2654 = vmatmul.bf16.gmra.mxu0 %v2588
  %v2655 = vpop.f32.mrf.mxu0
  %v2656 = vadd.f32 0.0, %v2655
  %v2657 = vpop.f32.mrf.mxu0
  %2658 = vdwg.mxu0
  %2659 = vmatpush.bf16.msra.mxu0 0
  %2660 = vmatpush.bf16.msra.mxu0 0
  %2661 = vmatpush.bf16.msra.mxu0 0
  %2662 = vmatpush.bf16.msra.mxu0 0
  %2663 = vmatpush.bf16.msra.mxu0 0
  %2664 = vmatpush.bf16.msra.mxu0 0
  %2665 = vmatpush.bf16.msra.mxu0 0
  %2666 = vmatpush.bf16.msra.mxu0 %v2600
  %2667 = vmatmul.bf16.gmra.mxu0 %v2588
  %v2668 = vpop.f32.mrf.mxu0
  %v2669 = vadd.f32 0.0, %v2668
  %v2670 = vpop.f32.mrf.mxu0
  %2671 = vdwg.mxu0
  %2672 = vmatpush.bf16.msra.mxu0 0
  %2673 = vmatpush.bf16.msra.mxu0 0
  %2674 = vmatpush.bf16.msra.mxu0 0
  %2675 = vmatpush.bf16.msra.mxu0 0
  %2676 = vmatpush.bf16.msra.mxu0 0
  %2677 = vmatpush.bf16.msra.mxu0 0
  %2678 = vmatpush.bf16.msra.mxu0 0
  %2679 = vmatpush.bf16.msra.mxu0 %v2603
  %2680 = vmatmul.bf16.gmra.mxu0 %v2588
  %v2681 = vpop.f32.mrf.mxu0
  %v2682 = vadd.f32 0.0, %v2681
  %v2683 = vpop.f32.mrf.mxu0
  %2684 = vdwg.mxu0
  %2685 = vmatpush.bf16.msra.mxu0 0
  %2686 = vmatpush.bf16.msra.mxu0 0
  %2687 = vmatpush.bf16.msra.mxu0 0
  %2688 = vmatpush.bf16.msra.mxu0 0
  %2689 = vmatpush.bf16.msra.mxu0 0
  %2690 = vmatpush.bf16.msra.mxu0 0
  %2691 = vmatpush.bf16.msra.mxu0 0
  %2692 = vmatpush.bf16.msra.mxu0 %v2606
  %2693 = vmatmul.bf16.gmra.mxu0 %v2588
  %v2694 = vpop.f32.mrf.mxu0
  %v2695 = vadd.f32 0.0, %v2694
  %v2696 = vpop.f32.mrf.mxu0
  %2697 = vdwg.mxu0
  %2698 = vmatpush.bf16.msra.mxu0 0
  %2699 = vmatpush.bf16.msra.mxu0 0
  %2700 = vmatpush.bf16.msra.mxu0 0
  %2701 = vmatpush.bf16.msra.mxu0 0
  %2702 = vmatpush.bf16.msra.mxu0 0
  %2703 = vmatpush.bf16.msra.mxu0 0
  %2704 = vmatpush.bf16.msra.mxu0 0
  %2705 = vmatpush.bf16.msra.mxu0 %v2609
  %2706 = vmatmul.bf16.gmra.mxu0 %v2588
  %v2707 = vpop.f32.mrf.mxu0
  %v2708 = vadd.f32 0.0, %v2707
  %v2709 = vpop.f32.mrf.mxu0
  %2710 = vdwg.mxu0
  %2711 = vmatpush.bf16.msra.mxu0 0
  %2712 = vmatpush.bf16.msra.mxu0 0
  %2713 = vmatpush.bf16.msra.mxu0 0
  %2714 = vmatpush.bf16.msra.mxu0 0
  %2715 = vmatpush.bf16.msra.mxu0 0
  %2716 = vmatpush.bf16.msra.mxu0 0
  %2717 = vmatpush.bf16.msra.mxu0 0
  %2718 = vmatpush.bf16.msra.mxu0 %v2612
  %2719 = vmatmul.bf16.gmra.mxu0 %v2588
  %v2720 = vpop.f32.mrf.mxu0
  %v2721 = vadd.f32 0.0, %v2720
  %v2722 = vpop.f32.mrf.mxu0
  %2723 = vdwg.mxu0
  %2724 = vmatpush.bf16.msra.mxu0 0
  %2725 = vmatpush.bf16.msra.mxu0 0
  %2726 = vmatpush.bf16.msra.mxu0 0
  %2727 = vmatpush.bf16.msra.mxu0 0
  %2728 = vmatpush.bf16.msra.mxu0 0
  %2729 = vmatpush.bf16.msra.mxu0 0
  %2730 = vmatpush.bf16.msra.mxu0 0
  %2731 = vmatpush.bf16.msra.mxu0 %v2615
  %2732 = vmatmul.bf16.gmra.mxu0 %v2588
  %v2733 = vpop.f32.mrf.mxu0
  %v2734 = vadd.f32 0.0, %v2733
  %v2735 = vpop.f32.mrf.mxu0
  %2736 = vdwg.mxu0
  %2737 = vmatpush.bf16.msra.mxu0 0
  %2738 = vmatpush.bf16.msra.mxu0 0
  %2739 = vmatpush.bf16.msra.mxu0 0
  %2740 = vmatpush.bf16.msra.mxu0 0
  %2741 = vmatpush.bf16.msra.mxu0 0
  %2742 = vmatpush.bf16.msra.mxu0 0
  %2743 = vmatpush.bf16.msra.mxu0 0
  %2744 = vmatpush.bf16.msra.mxu0 %v2618
  %2745 = vmatmul.bf16.gmra.mxu0 %v2588
  %v2746 = vpop.f32.mrf.mxu0
  %v2747 = vadd.f32 0.0, %v2746
  %v2748 = vpop.f32.mrf.mxu0
  %2749 = vdwg.mxu0
  %v2750 = vadd.f32 %v2402, %v2630
  %v2751 = vadd.f32 %v2415, %v2643
  %v2752 = vadd.f32 %v2428, %v2656
  %v2753 = vadd.f32 %v2441, %v2669
  %v2754 = vadd.f32 %v2454, %v2682
  %v2755 = vadd.f32 %v2467, %v2695
  %v2756 = vadd.f32 %v2480, %v2708
  %v2757 = vadd.f32 %v2493, %v2721
  %v2758 = vadd.f32 %v2506, %v2734
  %v2759 = vadd.f32 %v2519, %v2747
  %v2760 = vld [vmem:[%s2123] sm:$0xff]
  %v2761 = vld [vmem:[%s2123 + $0x8] sm:$0xff]
  %v2762 = vld [vmem:[%s2123 + $0x10] sm:$0x3f]
  %v2763 = vld [vmem:[%s660] sm:$0xf]
  %2765 = vst [vmem:[#allocation1] ss:$4 sm:$0xff] %v2760
  %s2767 = scalar_lea.vmem [#allocation1], 32
  %2768 = vst [vmem:[%s2767] ss:$4 sm:$0xff] %v2761
  %v2769 = vld.sshfl [vmem:[#allocation1] sm:$0xff pattern:$0x73625140]
  %v2771 = vld.sshfl [vmem:[#allocation1 + $0x8] sm:$0xff pattern:$0x73625140]
  %v2773 = vld.sshfl [vmem:[#allocation1 + $0x10] sm:$0xff pattern:$0x73625140]
  %v2775 = vld.sshfl [vmem:[#allocation1 + $0x18] sm:$0xff pattern:$0x73625140]
  %v2777 = vld.sshfl [vmem:[#allocation1 + $0x20] sm:$0xff pattern:$0x73625140]
  %v2779 = vld.sshfl [vmem:[#allocation1 + $0x28] sm:$0xff pattern:$0x73625140]
  %v2781 = vld.sshfl [vmem:[#allocation1 + $0x30] sm:$0xff pattern:$0x73625140]
  %v2783 = vld.sshfl [vmem:[#allocation1 + $0x38] sm:$0xff pattern:$0x73625140]
  %2786 = vst [vmem:[#allocation1] ss:$4 sm:$0xff] %v2762
  %v2787 = vld.sshfl [vmem:[#allocation1] sm:$0xff pattern:$0x73625140]
  %v2789 = vld.sshfl [vmem:[#allocation1 + $0x8] sm:$0xff pattern:$0x73625140]
  %v2791 = vld.sshfl [vmem:[#allocation1 + $0x10] sm:$0xff pattern:$0x73625140]
  %2793 = vrot.lane.b32.xlu0 %v2769, 93
  %v2794 = vpop.permute.xlu0 %2793
  %2795 = vrot.lane.b32.xlu0 %v2771, 93
  %v2796 = vpop.permute.xlu0 %2795
  %2797 = vrot.lane.b32.xlu0 %v2773, 93
  %v2798 = vpop.permute.xlu0 %2797
  %2799 = vrot.lane.b32.xlu0 %v2775, 93
  %v2800 = vpop.permute.xlu0 %2799
  %2801 = vrot.lane.b32.xlu0 %v2777, 93
  %v2802 = vpop.permute.xlu0 %2801
  %2803 = vrot.lane.b32.xlu0 %v2779, 93
  %v2804 = vpop.permute.xlu0 %2803
  %2805 = vrot.lane.b32.xlu0 %v2781, 93
  %v2806 = vpop.permute.xlu0 %2805
  %2807 = vrot.lane.b32.xlu0 %v2783, 93
  %v2808 = vpop.permute.xlu0 %2807
  %2809 = vrot.lane.b32.xlu0 %v2787, 93
  %v2810 = vpop.permute.xlu0 %2809
  %2811 = vrot.lane.b32.xlu0 %v2789, 93
  %v2812 = vpop.permute.xlu0 %2811
  %2813 = vrot.lane.b32.xlu0 %v2791, 93
  %v2814 = vpop.permute.xlu0 %2813
  %v2815 = vsel %vm713, %v2794, %v2796
  %v2816 = vsel %vm713, %v2796, %v2798
  %v2817 = vsel %vm713, %v2798, %v2800
  %v2818 = vsel %vm713, %v2800, %v2802
  %v2819 = vsel %vm713, %v2802, %v2804
  %v2820 = vsel %vm713, %v2804, %v2806
  %v2821 = vsel %vm713, %v2806, %v2808
  %v2822 = vsel %vm713, %v2808, %v2810
  %v2823 = vsel %vm713, %v2810, %v2812
  %v2824 = vsel %vm713, %v2812, %v2814
  %v2826 = vsel %vm84, %v2763, 0
  %v2829 = vsel %vm88, %v2815, 0
  %v2832 = vsel %vm88, %v2816, 0
  %v2835 = vsel %vm88, %v2817, 0
  %v2838 = vsel %vm88, %v2818, 0
  %v2841 = vsel %vm88, %v2819, 0
  %v2844 = vsel %vm88, %v2820, 0
  %v2847 = vsel %vm88, %v2821, 0
  %v2850 = vsel %vm88, %v2822, 0
  %v2853 = vsel %vm88, %v2823, 0
  %v2856 = vsel %vm88, %v2824, 0
  %2858 = vmatpush.bf16.msra.mxu0 0
  %2859 = vmatpush.bf16.msra.mxu0 0
  %2860 = vmatpush.bf16.msra.mxu0 0
  %2861 = vmatpush.bf16.msra.mxu0 0
  %2862 = vmatpush.bf16.msra.mxu0 0
  %2863 = vmatpush.bf16.msra.mxu0 0
  %2864 = vmatpush.bf16.msra.mxu0 0
  %2865 = vmatpush.bf16.msra.mxu0 %v2829
  %2866 = vmatmul.bf16.gmra.mxu0 %v2826
  %v2867 = vpop.f32.mrf.mxu0
  %v2868 = vadd.f32 0.0, %v2867
  %v2869 = vpop.f32.mrf.mxu0
  %2870 = vdwg.mxu0
  %2871 = vmatpush.bf16.msra.mxu0 0
  %2872 = vmatpush.bf16.msra.mxu0 0
  %2873 = vmatpush.bf16.msra.mxu0 0
  %2874 = vmatpush.bf16.msra.mxu0 0
  %2875 = vmatpush.bf16.msra.mxu0 0
  %2876 = vmatpush.bf16.msra.mxu0 0
  %2877 = vmatpush.bf16.msra.mxu0 0
  %2878 = vmatpush.bf16.msra.mxu0 %v2832
  %2879 = vmatmul.bf16.gmra.mxu0 %v2826
  %v2880 = vpop.f32.mrf.mxu0
  %v2881 = vadd.f32 0.0, %v2880
  %v2882 = vpop.f32.mrf.mxu0
  %2883 = vdwg.mxu0
  %2884 = vmatpush.bf16.msra.mxu0 0
  %2885 = vmatpush.bf16.msra.mxu0 0
  %2886 = vmatpush.bf16.msra.mxu0 0
  %2887 = vmatpush.bf16.msra.mxu0 0
  %2888 = vmatpush.bf16.msra.mxu0 0
  %2889 = vmatpush.bf16.msra.mxu0 0
  %2890 = vmatpush.bf16.msra.mxu0 0
  %2891 = vmatpush.bf16.msra.mxu0 %v2835
  %2892 = vmatmul.bf16.gmra.mxu0 %v2826
  %v2893 = vpop.f32.mrf.mxu0
  %v2894 = vadd.f32 0.0, %v2893
  %v2895 = vpop.f32.mrf.mxu0
  %2896 = vdwg.mxu0
  %2897 = vmatpush.bf16.msra.mxu0 0
  %2898 = vmatpush.bf16.msra.mxu0 0
  %2899 = vmatpush.bf16.msra.mxu0 0
  %2900 = vmatpush.bf16.msra.mxu0 0
  %2901 = vmatpush.bf16.msra.mxu0 0
  %2902 = vmatpush.bf16.msra.mxu0 0
  %2903 = vmatpush.bf16.msra.mxu0 0
  %2904 = vmatpush.bf16.msra.mxu0 %v2838
  %2905 = vmatmul.bf16.gmra.mxu0 %v2826
  %v2906 = vpop.f32.mrf.mxu0
  %v2907 = vadd.f32 0.0, %v2906
  %v2908 = vpop.f32.mrf.mxu0
  %2909 = vdwg.mxu0
  %2910 = vmatpush.bf16.msra.mxu0 0
  %2911 = vmatpush.bf16.msra.mxu0 0
  %2912 = vmatpush.bf16.msra.mxu0 0
  %2913 = vmatpush.bf16.msra.mxu0 0
  %2914 = vmatpush.bf16.msra.mxu0 0
  %2915 = vmatpush.bf16.msra.mxu0 0
  %2916 = vmatpush.bf16.msra.mxu0 0
  %2917 = vmatpush.bf16.msra.mxu0 %v2841
  %2918 = vmatmul.bf16.gmra.mxu0 %v2826
  %v2919 = vpop.f32.mrf.mxu0
  %v2920 = vadd.f32 0.0, %v2919
  %v2921 = vpop.f32.mrf.mxu0
  %2922 = vdwg.mxu0
  %2923 = vmatpush.bf16.msra.mxu0 0
  %2924 = vmatpush.bf16.msra.mxu0 0
  %2925 = vmatpush.bf16.msra.mxu0 0
  %2926 = vmatpush.bf16.msra.mxu0 0
  %2927 = vmatpush.bf16.msra.mxu0 0
  %2928 = vmatpush.bf16.msra.mxu0 0
  %2929 = vmatpush.bf16.msra.mxu0 0
  %2930 = vmatpush.bf16.msra.mxu0 %v2844
  %2931 = vmatmul.bf16.gmra.mxu0 %v2826
  %v2932 = vpop.f32.mrf.mxu0
  %v2933 = vadd.f32 0.0, %v2932
  %v2934 = vpop.f32.mrf.mxu0
  %2935 = vdwg.mxu0
  %2936 = vmatpush.bf16.msra.mxu0 0
  %2937 = vmatpush.bf16.msra.mxu0 0
  %2938 = vmatpush.bf16.msra.mxu0 0
  %2939 = vmatpush.bf16.msra.mxu0 0
  %2940 = vmatpush.bf16.msra.mxu0 0
  %2941 = vmatpush.bf16.msra.mxu0 0
  %2942 = vmatpush.bf16.msra.mxu0 0
  %2943 = vmatpush.bf16.msra.mxu0 %v2847
  %2944 = vmatmul.bf16.gmra.mxu0 %v2826
  %v2945 = vpop.f32.mrf.mxu0
  %v2946 = vadd.f32 0.0, %v2945
  %v2947 = vpop.f32.mrf.mxu0
  %2948 = vdwg.mxu0
  %2949 = vmatpush.bf16.msra.mxu0 0
  %2950 = vmatpush.bf16.msra.mxu0 0
  %2951 = vmatpush.bf16.msra.mxu0 0
  %2952 = vmatpush.bf16.msra.mxu0 0
  %2953 = vmatpush.bf16.msra.mxu0 0
  %2954 = vmatpush.bf16.msra.mxu0 0
  %2955 = vmatpush.bf16.msra.mxu0 0
  %2956 = vmatpush.bf16.msra.mxu0 %v2850
  %2957 = vmatmul.bf16.gmra.mxu0 %v2826
  %v2958 = vpop.f32.mrf.mxu0
  %v2959 = vadd.f32 0.0, %v2958
  %v2960 = vpop.f32.mrf.mxu0
  %2961 = vdwg.mxu0
  %2962 = vmatpush.bf16.msra.mxu0 0
  %2963 = vmatpush.bf16.msra.mxu0 0
  %2964 = vmatpush.bf16.msra.mxu0 0
  %2965 = vmatpush.bf16.msra.mxu0 0
  %2966 = vmatpush.bf16.msra.mxu0 0
  %2967 = vmatpush.bf16.msra.mxu0 0
  %2968 = vmatpush.bf16.msra.mxu0 0
  %2969 = vmatpush.bf16.msra.mxu0 %v2853
  %2970 = vmatmul.bf16.gmra.mxu0 %v2826
  %v2971 = vpop.f32.mrf.mxu0
  %v2972 = vadd.f32 0.0, %v2971
  %v2973 = vpop.f32.mrf.mxu0
  %2974 = vdwg.mxu0
  %2975 = vmatpush.bf16.msra.mxu0 0
  %2976 = vmatpush.bf16.msra.mxu0 0
  %2977 = vmatpush.bf16.msra.mxu0 0
  %2978 = vmatpush.bf16.msra.mxu0 0
  %2979 = vmatpush.bf16.msra.mxu0 0
  %2980 = vmatpush.bf16.msra.mxu0 0
  %2981 = vmatpush.bf16.msra.mxu0 0
  %2982 = vmatpush.bf16.msra.mxu0 %v2856
  %2983 = vmatmul.bf16.gmra.mxu0 %v2826
  %v2984 = vpop.f32.mrf.mxu0
  %v2985 = vadd.f32 0.0, %v2984
  %v2986 = vpop.f32.mrf.mxu0
  %2987 = vdwg.mxu0
  %v2988 = vadd.f32 %v2750, %v2868
  %v2989 = vadd.f32 %v2751, %v2881
  %v2990 = vadd.f32 %v2752, %v2894
  %v2991 = vadd.f32 %v2753, %v2907
  %v2992 = vadd.f32 %v2754, %v2920
  %v2993 = vadd.f32 %v2755, %v2933
  %v2994 = vadd.f32 %v2756, %v2946
  %v2995 = vadd.f32 %v2757, %v2959
  %v2996 = vadd.f32 %v2758, %v2972
  %v2997 = vadd.f32 %v2759, %v2985
  %v2998 = vld [vmem:[%s2123] sm:$0xff]
  %v2999 = vld [vmem:[%s2123 + $0x8] sm:$0xff]
  %v3000 = vld [vmem:[%s2123 + $0x10] sm:$0x3f]
  %v3001 = vld [vmem:[%s900] sm:$0xf]
  %3003 = vst [vmem:[#allocation1] ss:$4 sm:$0xff] %v2998
  %s3005 = scalar_lea.vmem [#allocation1], 32
  %3006 = vst [vmem:[%s3005] ss:$4 sm:$0xff] %v2999
  %v3007 = vld.sshfl [vmem:[#allocation1] sm:$0xff pattern:$0x73625140]
  %v3009 = vld.sshfl [vmem:[#allocation1 + $0x8] sm:$0xff pattern:$0x73625140]
  %v3011 = vld.sshfl [vmem:[#allocation1 + $0x10] sm:$0xff pattern:$0x73625140]
  %v3013 = vld.sshfl [vmem:[#allocation1 + $0x18] sm:$0xff pattern:$0x73625140]
  %v3015 = vld.sshfl [vmem:[#allocation1 + $0x20] sm:$0xff pattern:$0x73625140]
  %v3017 = vld.sshfl [vmem:[#allocation1 + $0x28] sm:$0xff pattern:$0x73625140]
  %v3019 = vld.sshfl [vmem:[#allocation1 + $0x30] sm:$0xff pattern:$0x73625140]
  %v3021 = vld.sshfl [vmem:[#allocation1 + $0x38] sm:$0xff pattern:$0x73625140]
  %3024 = vst [vmem:[#allocation1] ss:$4 sm:$0xff] %v3000
  %v3025 = vld.sshfl [vmem:[#allocation1] sm:$0xff pattern:$0x73625140]
  %v3027 = vld.sshfl [vmem:[#allocation1 + $0x8] sm:$0xff pattern:$0x73625140]
  %v3029 = vld.sshfl [vmem:[#allocation1 + $0x10] sm:$0xff pattern:$0x73625140]
  %3031 = vrot.lane.b32.xlu0 %v3007, 92
  %v3032 = vpop.permute.xlu0 %3031
  %3033 = vrot.lane.b32.xlu0 %v3009, 92
  %v3034 = vpop.permute.xlu0 %3033
  %3035 = vrot.lane.b32.xlu0 %v3011, 92
  %v3036 = vpop.permute.xlu0 %3035
  %3037 = vrot.lane.b32.xlu0 %v3013, 92
  %v3038 = vpop.permute.xlu0 %3037
  %3039 = vrot.lane.b32.xlu0 %v3015, 92
  %v3040 = vpop.permute.xlu0 %3039
  %3041 = vrot.lane.b32.xlu0 %v3017, 92
  %v3042 = vpop.permute.xlu0 %3041
  %3043 = vrot.lane.b32.xlu0 %v3019, 92
  %v3044 = vpop.permute.xlu0 %3043
  %3045 = vrot.lane.b32.xlu0 %v3021, 92
  %v3046 = vpop.permute.xlu0 %3045
  %3047 = vrot.lane.b32.xlu0 %v3025, 92
  %v3048 = vpop.permute.xlu0 %3047
  %3049 = vrot.lane.b32.xlu0 %v3027, 92
  %v3050 = vpop.permute.xlu0 %3049
  %3051 = vrot.lane.b32.xlu0 %v3029, 92
  %v3052 = vpop.permute.xlu0 %3051
  %v3053 = vsel %vm953, %v3032, %v3034
  %v3054 = vsel %vm953, %v3034, %v3036
  %v3055 = vsel %vm953, %v3036, %v3038
  %v3056 = vsel %vm953, %v3038, %v3040
  %v3057 = vsel %vm953, %v3040, %v3042
  %v3058 = vsel %vm953, %v3042, %v3044
  %v3059 = vsel %vm953, %v3044, %v3046
  %v3060 = vsel %vm953, %v3046, %v3048
  %v3061 = vsel %vm953, %v3048, %v3050
  %v3062 = vsel %vm953, %v3050, %v3052
  %v3064 = vsel %vm84, %v3001, 0
  %v3067 = vsel %vm88, %v3053, 0
  %v3070 = vsel %vm88, %v3054, 0
  %v3073 = vsel %vm88, %v3055, 0
  %v3076 = vsel %vm88, %v3056, 0
  %v3079 = vsel %vm88, %v3057, 0
  %v3082 = vsel %vm88, %v3058, 0
  %v3085 = vsel %vm88, %v3059, 0
  %v3088 = vsel %vm88, %v3060, 0
  %v3091 = vsel %vm88, %v3061, 0
  %v3094 = vsel %vm88, %v3062, 0
  %3096 = vmatpush.bf16.msra.mxu0 0
  %3097 = vmatpush.bf16.msra.mxu0 0
  %3098 = vmatpush.bf16.msra.mxu0 0
  %3099 = vmatpush.bf16.msra.mxu0 0
  %3100 = vmatpush.bf16.msra.mxu0 0
  %3101 = vmatpush.bf16.msra.mxu0 0
  %3102 = vmatpush.bf16.msra.mxu0 0
  %3103 = vmatpush.bf16.msra.mxu0 %v3067
  %3104 = vmatmul.bf16.gmra.mxu0 %v3064
  %v3105 = vpop.f32.mrf.mxu0
  %v3106 = vadd.f32 0.0, %v3105
  %v3107 = vpop.f32.mrf.mxu0
  %3108 = vdwg.mxu0
  %3109 = vmatpush.bf16.msra.mxu0 0
  %3110 = vmatpush.bf16.msra.mxu0 0
  %3111 = vmatpush.bf16.msra.mxu0 0
  %3112 = vmatpush.bf16.msra.mxu0 0
  %3113 = vmatpush.bf16.msra.mxu0 0
  %3114 = vmatpush.bf16.msra.mxu0 0
  %3115 = vmatpush.bf16.msra.mxu0 0
  %3116 = vmatpush.bf16.msra.mxu0 %v3070
  %3117 = vmatmul.bf16.gmra.mxu0 %v3064
  %v3118 = vpop.f32.mrf.mxu0
  %v3119 = vadd.f32 0.0, %v3118
  %v3120 = vpop.f32.mrf.mxu0
  %3121 = vdwg.mxu0
  %3122 = vmatpush.bf16.msra.mxu0 0
  %3123 = vmatpush.bf16.msra.mxu0 0
  %3124 = vmatpush.bf16.msra.mxu0 0
  %3125 = vmatpush.bf16.msra.mxu0 0
  %3126 = vmatpush.bf16.msra.mxu0 0
  %3127 = vmatpush.bf16.msra.mxu0 0
  %3128 = vmatpush.bf16.msra.mxu0 0
  %3129 = vmatpush.bf16.msra.mxu0 %v3073
  %3130 = vmatmul.bf16.gmra.mxu0 %v3064
  %v3131 = vpop.f32.mrf.mxu0
  %v3132 = vadd.f32 0.0, %v3131
  %v3133 = vpop.f32.mrf.mxu0
  %3134 = vdwg.mxu0
  %3135 = vmatpush.bf16.msra.mxu0 0
  %3136 = vmatpush.bf16.msra.mxu0 0
  %3137 = vmatpush.bf16.msra.mxu0 0
  %3138 = vmatpush.bf16.msra.mxu0 0
  %3139 = vmatpush.bf16.msra.mxu0 0
  %3140 = vmatpush.bf16.msra.mxu0 0
  %3141 = vmatpush.bf16.msra.mxu0 0
  %3142 = vmatpush.bf16.msra.mxu0 %v3076
  %3143 = vmatmul.bf16.gmra.mxu0 %v3064
  %v3144 = vpop.f32.mrf.mxu0
  %v3145 = vadd.f32 0.0, %v3144
  %v3146 = vpop.f32.mrf.mxu0
  %3147 = vdwg.mxu0
  %3148 = vmatpush.bf16.msra.mxu0 0
  %3149 = vmatpush.bf16.msra.mxu0 0
  %3150 = vmatpush.bf16.msra.mxu0 0
  %3151 = vmatpush.bf16.msra.mxu0 0
  %3152 = vmatpush.bf16.msra.mxu0 0
  %3153 = vmatpush.bf16.msra.mxu0 0
  %3154 = vmatpush.bf16.msra.mxu0 0
  %3155 = vmatpush.bf16.msra.mxu0 %v3079
  %3156 = vmatmul.bf16.gmra.mxu0 %v3064
  %v3157 = vpop.f32.mrf.mxu0
  %v3158 = vadd.f32 0.0, %v3157
  %v3159 = vpop.f32.mrf.mxu0
  %3160 = vdwg.mxu0
  %3161 = vmatpush.bf16.msra.mxu0 0
  %3162 = vmatpush.bf16.msra.mxu0 0
  %3163 = vmatpush.bf16.msra.mxu0 0
  %3164 = vmatpush.bf16.msra.mxu0 0
  %3165 = vmatpush.bf16.msra.mxu0 0
  %3166 = vmatpush.bf16.msra.mxu0 0
  %3167 = vmatpush.bf16.msra.mxu0 0
  %3168 = vmatpush.bf16.msra.mxu0 %v3082
  %3169 = vmatmul.bf16.gmra.mxu0 %v3064
  %v3170 = vpop.f32.mrf.mxu0
  %v3171 = vadd.f32 0.0, %v3170
  %v3172 = vpop.f32.mrf.mxu0
  %3173 = vdwg.mxu0
  %3174 = vmatpush.bf16.msra.mxu0 0
  %3175 = vmatpush.bf16.msra.mxu0 0
  %3176 = vmatpush.bf16.msra.mxu0 0
  %3177 = vmatpush.bf16.msra.mxu0 0
  %3178 = vmatpush.bf16.msra.mxu0 0
  %3179 = vmatpush.bf16.msra.mxu0 0
  %3180 = vmatpush.bf16.msra.mxu0 0
  %3181 = vmatpush.bf16.msra.mxu0 %v3085
  %3182 = vmatmul.bf16.gmra.mxu0 %v3064
  %v3183 = vpop.f32.mrf.mxu0
  %v3184 = vadd.f32 0.0, %v3183
  %v3185 = vpop.f32.mrf.mxu0
  %3186 = vdwg.mxu0
  %3187 = vmatpush.bf16.msra.mxu0 0
  %3188 = vmatpush.bf16.msra.mxu0 0
  %3189 = vmatpush.bf16.msra.mxu0 0
  %3190 = vmatpush.bf16.msra.mxu0 0
  %3191 = vmatpush.bf16.msra.mxu0 0
  %3192 = vmatpush.bf16.msra.mxu0 0
  %3193 = vmatpush.bf16.msra.mxu0 0
  %3194 = vmatpush.bf16.msra.mxu0 %v3088
  %3195 = vmatmul.bf16.gmra.mxu0 %v3064
  %v3196 = vpop.f32.mrf.mxu0
  %v3197 = vadd.f32 0.0, %v3196
  %v3198 = vpop.f32.mrf.mxu0
  %3199 = vdwg.mxu0
  %3200 = vmatpush.bf16.msra.mxu0 0
  %3201 = vmatpush.bf16.msra.mxu0 0
  %3202 = vmatpush.bf16.msra.mxu0 0
  %3203 = vmatpush.bf16.msra.mxu0 0
  %3204 = vmatpush.bf16.msra.mxu0 0
  %3205 = vmatpush.bf16.msra.mxu0 0
  %3206 = vmatpush.bf16.msra.mxu0 0
  %3207 = vmatpush.bf16.msra.mxu0 %v3091
  %3208 = vmatmul.bf16.gmra.mxu0 %v3064
  %v3209 = vpop.f32.mrf.mxu0
  %v3210 = vadd.f32 0.0, %v3209
  %v3211 = vpop.f32.mrf.mxu0
  %3212 = vdwg.mxu0
  %3213 = vmatpush.bf16.msra.mxu0 0
  %3214 = vmatpush.bf16.msra.mxu0 0
  %3215 = vmatpush.bf16.msra.mxu0 0
  %3216 = vmatpush.bf16.msra.mxu0 0
  %3217 = vmatpush.bf16.msra.mxu0 0
  %3218 = vmatpush.bf16.msra.mxu0 0
  %3219 = vmatpush.bf16.msra.mxu0 0
  %3220 = vmatpush.bf16.msra.mxu0 %v3094
  %3221 = vmatmul.bf16.gmra.mxu0 %v3064
  %v3222 = vpop.f32.mrf.mxu0
  %v3223 = vadd.f32 0.0, %v3222
  %v3224 = vpop.f32.mrf.mxu0
  %3225 = vdwg.mxu0
  %v3226 = vadd.f32 %v2988, %v3106
  %v3227 = vadd.f32 %v2989, %v3119
  %v3228 = vadd.f32 %v2990, %v3132
  %v3229 = vadd.f32 %v2991, %v3145
  %v3230 = vadd.f32 %v2992, %v3158
  %v3231 = vadd.f32 %v2993, %v3171
  %v3232 = vadd.f32 %v2994, %v3184
  %v3233 = vadd.f32 %v2995, %v3197
  %v3234 = vadd.f32 %v2996, %v3210
  %v3235 = vadd.f32 %v2997, %v3223
  %v3236 = vld [vmem:[%s2123] sm:$0xff]
  %v3237 = vld [vmem:[%s2123 + $0x8] sm:$0xff]
  %v3238 = vld [vmem:[%s2123 + $0x10] sm:$0x3f]
  %v3239 = vld [vmem:[%s1140] sm:$0xf]
  %3241 = vst [vmem:[#allocation1] ss:$4 sm:$0xff] %v3236
  %s3243 = scalar_lea.vmem [#allocation1], 32
  %3244 = vst [vmem:[%s3243] ss:$4 sm:$0xff] %v3237
  %v3245 = vld.sshfl [vmem:[#allocation1] sm:$0xff pattern:$0x73625140]
  %v3247 = vld.sshfl [vmem:[#allocation1 + $0x8] sm:$0xff pattern:$0x73625140]
  %v3249 = vld.sshfl [vmem:[#allocation1 + $0x10] sm:$0xff pattern:$0x73625140]
  %v3251 = vld.sshfl [vmem:[#allocation1 + $0x18] sm:$0xff pattern:$0x73625140]
  %v3253 = vld.sshfl [vmem:[#allocation1 + $0x20] sm:$0xff pattern:$0x73625140]
  %v3255 = vld.sshfl [vmem:[#allocation1 + $0x28] sm:$0xff pattern:$0x73625140]
  %v3257 = vld.sshfl [vmem:[#allocation1 + $0x30] sm:$0xff pattern:$0x73625140]
  %v3259 = vld.sshfl [vmem:[#allocation1 + $0x38] sm:$0xff pattern:$0x73625140]
  %3262 = vst [vmem:[#allocation1] ss:$4 sm:$0xff] %v3238
  %v3263 = vld.sshfl [vmem:[#allocation1] sm:$0xff pattern:$0x73625140]
  %v3265 = vld.sshfl [vmem:[#allocation1 + $0x8] sm:$0xff pattern:$0x73625140]
  %v3267 = vld.sshfl [vmem:[#allocation1 + $0x10] sm:$0xff pattern:$0x73625140]
  %3269 = vrot.lane.b32.xlu0 %v3245, 91
  %v3270 = vpop.permute.xlu0 %3269
  %3271 = vrot.lane.b32.xlu0 %v3247, 91
  %v3272 = vpop.permute.xlu0 %3271
  %3273 = vrot.lane.b32.xlu0 %v3249, 91
  %v3274 = vpop.permute.xlu0 %3273
  %3275 = vrot.lane.b32.xlu0 %v3251, 91
  %v3276 = vpop.permute.xlu0 %3275
  %3277 = vrot.lane.b32.xlu0 %v3253, 91
  %v3278 = vpop.permute.xlu0 %3277
  %3279 = vrot.lane.b32.xlu0 %v3255, 91
  %v3280 = vpop.permute.xlu0 %3279
  %3281 = vrot.lane.b32.xlu0 %v3257, 91
  %v3282 = vpop.permute.xlu0 %3281
  %3283 = vrot.lane.b32.xlu0 %v3259, 91
  %v3284 = vpop.permute.xlu0 %3283
  %3285 = vrot.lane.b32.xlu0 %v3263, 91
  %v3286 = vpop.permute.xlu0 %3285
  %3287 = vrot.lane.b32.xlu0 %v3265, 91
  %v3288 = vpop.permute.xlu0 %3287
  %3289 = vrot.lane.b32.xlu0 %v3267, 91
  %v3290 = vpop.permute.xlu0 %3289
  %v3291 = vsel %vm1193, %v3270, %v3272
  %v3292 = vsel %vm1193, %v3272, %v3274
  %v3293 = vsel %vm1193, %v3274, %v3276
  %v3294 = vsel %vm1193, %v3276, %v3278
  %v3295 = vsel %vm1193, %v3278, %v3280
  %v3296 = vsel %vm1193, %v3280, %v3282
  %v3297 = vsel %vm1193, %v3282, %v3284
  %v3298 = vsel %vm1193, %v3284, %v3286
  %v3299 = vsel %vm1193, %v3286, %v3288
  %v3300 = vsel %vm1193, %v3288, %v3290
  %v3302 = vsel %vm84, %v3239, 0
  %v3305 = vsel %vm88, %v3291, 0
  %v3308 = vsel %vm88, %v3292, 0
  %v3311 = vsel %vm88, %v3293, 0
  %v3314 = vsel %vm88, %v3294, 0
  %v3317 = vsel %vm88, %v3295, 0
  %v3320 = vsel %vm88, %v3296, 0
  %v3323 = vsel %vm88, %v3297, 0
  %v3326 = vsel %vm88, %v3298, 0
  %v3329 = vsel %vm88, %v3299, 0
  %v3332 = vsel %vm88, %v3300, 0
  %3334 = vmatpush.bf16.msra.mxu0 0
  %3335 = vmatpush.bf16.msra.mxu0 0
  %3336 = vmatpush.bf16.msra.mxu0 0
  %3337 = vmatpush.bf16.msra.mxu0 0
  %3338 = vmatpush.bf16.msra.mxu0 0
  %3339 = vmatpush.bf16.msra.mxu0 0
  %3340 = vmatpush.bf16.msra.mxu0 0
  %3341 = vmatpush.bf16.msra.mxu0 %v3305
  %3342 = vmatmul.bf16.gmra.mxu0 %v3302
  %v3343 = vpop.f32.mrf.mxu0
  %v3344 = vadd.f32 0.0, %v3343
  %v3345 = vpop.f32.mrf.mxu0
  %3346 = vdwg.mxu0
  %3347 = vmatpush.bf16.msra.mxu0 0
  %3348 = vmatpush.bf16.msra.mxu0 0
  %3349 = vmatpush.bf16.msra.mxu0 0
  %3350 = vmatpush.bf16.msra.mxu0 0
  %3351 = vmatpush.bf16.msra.mxu0 0
  %3352 = vmatpush.bf16.msra.mxu0 0
  %3353 = vmatpush.bf16.msra.mxu0 0
  %3354 = vmatpush.bf16.msra.mxu0 %v3308
  %3355 = vmatmul.bf16.gmra.mxu0 %v3302
  %v3356 = vpop.f32.mrf.mxu0
  %v3357 = vadd.f32 0.0, %v3356
  %v3358 = vpop.f32.mrf.mxu0
  %3359 = vdwg.mxu0
  %3360 = vmatpush.bf16.msra.mxu0 0
  %3361 = vmatpush.bf16.msra.mxu0 0
  %3362 = vmatpush.bf16.msra.mxu0 0
  %3363 = vmatpush.bf16.msra.mxu0 0
  %3364 = vmatpush.bf16.msra.mxu0 0
  %3365 = vmatpush.bf16.msra.mxu0 0
  %3366 = vmatpush.bf16.msra.mxu0 0
  %3367 = vmatpush.bf16.msra.mxu0 %v3311
  %3368 = vmatmul.bf16.gmra.mxu0 %v3302
  %v3369 = vpop.f32.mrf.mxu0
  %v3370 = vadd.f32 0.0, %v3369
  %v3371 = vpop.f32.mrf.mxu0
  %3372 = vdwg.mxu0
  %3373 = vmatpush.bf16.msra.mxu0 0
  %3374 = vmatpush.bf16.msra.mxu0 0
  %3375 = vmatpush.bf16.msra.mxu0 0
  %3376 = vmatpush.bf16.msra.mxu0 0
  %3377 = vmatpush.bf16.msra.mxu0 0
  %3378 = vmatpush.bf16.msra.mxu0 0
  %3379 = vmatpush.bf16.msra.mxu0 0
  %3380 = vmatpush.bf16.msra.mxu0 %v3314
  %3381 = vmatmul.bf16.gmra.mxu0 %v3302
  %v3382 = vpop.f32.mrf.mxu0
  %v3383 = vadd.f32 0.0, %v3382
  %v3384 = vpop.f32.mrf.mxu0
  %3385 = vdwg.mxu0
  %3386 = vmatpush.bf16.msra.mxu0 0
  %3387 = vmatpush.bf16.msra.mxu0 0
  %3388 = vmatpush.bf16.msra.mxu0 0
  %3389 = vmatpush.bf16.msra.mxu0 0
  %3390 = vmatpush.bf16.msra.mxu0 0
  %3391 = vmatpush.bf16.msra.mxu0 0
  %3392 = vmatpush.bf16.msra.mxu0 0
  %3393 = vmatpush.bf16.msra.mxu0 %v3317
  %3394 = vmatmul.bf16.gmra.mxu0 %v3302
  %v3395 = vpop.f32.mrf.mxu0
  %v3396 = vadd.f32 0.0, %v3395
  %v3397 = vpop.f32.mrf.mxu0
  %3398 = vdwg.mxu0
  %3399 = vmatpush.bf16.msra.mxu0 0
  %3400 = vmatpush.bf16.msra.mxu0 0
  %3401 = vmatpush.bf16.msra.mxu0 0
  %3402 = vmatpush.bf16.msra.mxu0 0
  %3403 = vmatpush.bf16.msra.mxu0 0
  %3404 = vmatpush.bf16.msra.mxu0 0
  %3405 = vmatpush.bf16.msra.mxu0 0
  %3406 = vmatpush.bf16.msra.mxu0 %v3320
  %3407 = vmatmul.bf16.gmra.mxu0 %v3302
  %v3408 = vpop.f32.mrf.mxu0
  %v3409 = vadd.f32 0.0, %v3408
  %v3410 = vpop.f32.mrf.mxu0
  %3411 = vdwg.mxu0
  %3412 = vmatpush.bf16.msra.mxu0 0
  %3413 = vmatpush.bf16.msra.mxu0 0
  %3414 = vmatpush.bf16.msra.mxu0 0
  %3415 = vmatpush.bf16.msra.mxu0 0
  %3416 = vmatpush.bf16.msra.mxu0 0
  %3417 = vmatpush.bf16.msra.mxu0 0
  %3418 = vmatpush.bf16.msra.mxu0 0
  %3419 = vmatpush.bf16.msra.mxu0 %v3323
  %3420 = vmatmul.bf16.gmra.mxu0 %v3302
  %v3421 = vpop.f32.mrf.mxu0
  %v3422 = vadd.f32 0.0, %v3421
  %v3423 = vpop.f32.mrf.mxu0
  %3424 = vdwg.mxu0
  %3425 = vmatpush.bf16.msra.mxu0 0
  %3426 = vmatpush.bf16.msra.mxu0 0
  %3427 = vmatpush.bf16.msra.mxu0 0
  %3428 = vmatpush.bf16.msra.mxu0 0
  %3429 = vmatpush.bf16.msra.mxu0 0
  %3430 = vmatpush.bf16.msra.mxu0 0
  %3431 = vmatpush.bf16.msra.mxu0 0
  %3432 = vmatpush.bf16.msra.mxu0 %v3326
  %3433 = vmatmul.bf16.gmra.mxu0 %v3302
  %v3434 = vpop.f32.mrf.mxu0
  %v3435 = vadd.f32 0.0, %v3434
  %v3436 = vpop.f32.mrf.mxu0
  %3437 = vdwg.mxu0
  %3438 = vmatpush.bf16.msra.mxu0 0
  %3439 = vmatpush.bf16.msra.mxu0 0
  %3440 = vmatpush.bf16.msra.mxu0 0
  %3441 = vmatpush.bf16.msra.mxu0 0
  %3442 = vmatpush.bf16.msra.mxu0 0
  %3443 = vmatpush.bf16.msra.mxu0 0
  %3444 = vmatpush.bf16.msra.mxu0 0
  %3445 = vmatpush.bf16.msra.mxu0 %v3329
  %3446 = vmatmul.bf16.gmra.mxu0 %v3302
  %v3447 = vpop.f32.mrf.mxu0
  %v3448 = vadd.f32 0.0, %v3447
  %v3449 = vpop.f32.mrf.mxu0
  %3450 = vdwg.mxu0
  %3451 = vmatpush.bf16.msra.mxu0 0
  %3452 = vmatpush.bf16.msra.mxu0 0
  %3453 = vmatpush.bf16.msra.mxu0 0
  %3454 = vmatpush.bf16.msra.mxu0 0
  %3455 = vmatpush.bf16.msra.mxu0 0
  %3456 = vmatpush.bf16.msra.mxu0 0
  %3457 = vmatpush.bf16.msra.mxu0 0
  %3458 = vmatpush.bf16.msra.mxu0 %v3332
  %3459 = vmatmul.bf16.gmra.mxu0 %v3302
  %v3460 = vpop.f32.mrf.mxu0
  %v3461 = vadd.f32 0.0, %v3460
  %v3462 = vpop.f32.mrf.mxu0
  %3463 = vdwg.mxu0
  %v3464 = vadd.f32 %v3226, %v3344
  %v3465 = vadd.f32 %v3227, %v3357
  %v3466 = vadd.f32 %v3228, %v3370
  %v3467 = vadd.f32 %v3229, %v3383
  %v3468 = vadd.f32 %v3230, %v3396
  %v3469 = vadd.f32 %v3231, %v3409
  %v3470 = vadd.f32 %v3232, %v3422
  %v3471 = vadd.f32 %v3233, %v3435
  %v3472 = vadd.f32 %v3234, %v3448
  %v3473 = vadd.f32 %v3235, %v3461
  %v3474 = vld [vmem:[%s2123] sm:$0xff]
  %v3475 = vld [vmem:[%s2123 + $0x8] sm:$0xff]
  %v3476 = vld [vmem:[%s2123 + $0x10] sm:$0x3f]
  %v3477 = vld [vmem:[%s1380] sm:$0xf]
  %3479 = vst [vmem:[#allocation1] ss:$4 sm:$0xff] %v3474
  %s3481 = scalar_lea.vmem [#allocation1], 32
  %3482 = vst [vmem:[%s3481] ss:$4 sm:$0xff] %v3475
  %v3483 = vld.sshfl [vmem:[#allocation1] sm:$0xff pattern:$0x73625140]
  %v3485 = vld.sshfl [vmem:[#allocation1 + $0x8] sm:$0xff pattern:$0x73625140]
  %v3487 = vld.sshfl [vmem:[#allocation1 + $0x10] sm:$0xff pattern:$0x73625140]
  %v3489 = vld.sshfl [vmem:[#allocation1 + $0x18] sm:$0xff pattern:$0x73625140]
  %v3491 = vld.sshfl [vmem:[#allocation1 + $0x20] sm:$0xff pattern:$0x73625140]
  %v3493 = vld.sshfl [vmem:[#allocation1 + $0x28] sm:$0xff pattern:$0x73625140]
  %v3495 = vld.sshfl [vmem:[#allocation1 + $0x30] sm:$0xff pattern:$0x73625140]
  %v3497 = vld.sshfl [vmem:[#allocation1 + $0x38] sm:$0xff pattern:$0x73625140]
  %3500 = vst [vmem:[#allocation1] ss:$4 sm:$0xff] %v3476
  %v3501 = vld.sshfl [vmem:[#allocation1] sm:$0xff pattern:$0x73625140]
  %v3503 = vld.sshfl [vmem:[#allocation1 + $0x8] sm:$0xff pattern:$0x73625140]
  %v3505 = vld.sshfl [vmem:[#allocation1 + $0x10] sm:$0xff pattern:$0x73625140]
  %3507 = vrot.lane.b32.xlu0 %v3483, 58
  %v3508 = vpop.permute.xlu0 %3507
  %3509 = vrot.lane.b32.xlu0 %v3485, 58
  %v3510 = vpop.permute.xlu0 %3509
  %3511 = vrot.lane.b32.xlu0 %v3487, 58
  %v3512 = vpop.permute.xlu0 %3511
  %3513 = vrot.lane.b32.xlu0 %v3489, 58
  %v3514 = vpop.permute.xlu0 %3513
  %3515 = vrot.lane.b32.xlu0 %v3491, 58
  %v3516 = vpop.permute.xlu0 %3515
  %3517 = vrot.lane.b32.xlu0 %v3493, 58
  %v3518 = vpop.permute.xlu0 %3517
  %3519 = vrot.lane.b32.xlu0 %v3495, 58
  %v3520 = vpop.permute.xlu0 %3519
  %3521 = vrot.lane.b32.xlu0 %v3497, 58
  %v3522 = vpop.permute.xlu0 %3521
  %3523 = vrot.lane.b32.xlu0 %v3501, 58
  %v3524 = vpop.permute.xlu0 %3523
  %3525 = vrot.lane.b32.xlu0 %v3503, 58
  %v3526 = vpop.permute.xlu0 %3525
  %3527 = vrot.lane.b32.xlu0 %v3505, 58
  %v3528 = vpop.permute.xlu0 %3527
  %v3529 = vsel %vm1433, %v3508, %v3510
  %v3530 = vsel %vm1433, %v3510, %v3512
  %v3531 = vsel %vm1433, %v3512, %v3514
  %v3532 = vsel %vm1433, %v3514, %v3516
  %v3533 = vsel %vm1433, %v3516, %v3518
  %v3534 = vsel %vm1433, %v3518, %v3520
  %v3535 = vsel %vm1433, %v3520, %v3522
  %v3536 = vsel %vm1433, %v3522, %v3524
  %v3537 = vsel %vm1433, %v3524, %v3526
  %v3538 = vsel %vm1433, %v3526, %v3528
  %v3540 = vsel %vm84, %v3477, 0
  %v3543 = vsel %vm88, %v3529, 0
  %v3546 = vsel %vm88, %v3530, 0
  %v3549 = vsel %vm88, %v3531, 0
  %v3552 = vsel %vm88, %v3532, 0
  %v3555 = vsel %vm88, %v3533, 0
  %v3558 = vsel %vm88, %v3534, 0
  %v3561 = vsel %vm88, %v3535, 0
  %v3564 = vsel %vm88, %v3536, 0
  %v3567 = vsel %vm88, %v3537, 0
  %v3570 = vsel %vm88, %v3538, 0
  %3572 = vmatpush.bf16.msra.mxu0 0
  %3573 = vmatpush.bf16.msra.mxu0 0
  %3574 = vmatpush.bf16.msra.mxu0 0
  %3575 = vmatpush.bf16.msra.mxu0 0
  %3576 = vmatpush.bf16.msra.mxu0 0
  %3577 = vmatpush.bf16.msra.mxu0 0
  %3578 = vmatpush.bf16.msra.mxu0 0
  %3579 = vmatpush.bf16.msra.mxu0 %v3543
  %3580 = vmatmul.bf16.gmra.mxu0 %v3540
  %v3581 = vpop.f32.mrf.mxu0
  %v3582 = vadd.f32 0.0, %v3581
  %v3583 = vpop.f32.mrf.mxu0
  %3584 = vdwg.mxu0
  %3585 = vmatpush.bf16.msra.mxu0 0
  %3586 = vmatpush.bf16.msra.mxu0 0
  %3587 = vmatpush.bf16.msra.mxu0 0
  %3588 = vmatpush.bf16.msra.mxu0 0
  %3589 = vmatpush.bf16.msra.mxu0 0
  %3590 = vmatpush.bf16.msra.mxu0 0
  %3591 = vmatpush.bf16.msra.mxu0 0
  %3592 = vmatpush.bf16.msra.mxu0 %v3546
  %3593 = vmatmul.bf16.gmra.mxu0 %v3540
  %v3594 = vpop.f32.mrf.mxu0
  %v3595 = vadd.f32 0.0, %v3594
  %v3596 = vpop.f32.mrf.mxu0
  %3597 = vdwg.mxu0
  %3598 = vmatpush.bf16.msra.mxu0 0
  %3599 = vmatpush.bf16.msra.mxu0 0
  %3600 = vmatpush.bf16.msra.mxu0 0
  %3601 = vmatpush.bf16.msra.mxu0 0
  %3602 = vmatpush.bf16.msra.mxu0 0
  %3603 = vmatpush.bf16.msra.mxu0 0
  %3604 = vmatpush.bf16.msra.mxu0 0
  %3605 = vmatpush.bf16.msra.mxu0 %v3549
  %3606 = vmatmul.bf16.gmra.mxu0 %v3540
  %v3607 = vpop.f32.mrf.mxu0
  %v3608 = vadd.f32 0.0, %v3607
  %v3609 = vpop.f32.mrf.mxu0
  %3610 = vdwg.mxu0
  %3611 = vmatpush.bf16.msra.mxu0 0
  %3612 = vmatpush.bf16.msra.mxu0 0
  %3613 = vmatpush.bf16.msra.mxu0 0
  %3614 = vmatpush.bf16.msra.mxu0 0
  %3615 = vmatpush.bf16.msra.mxu0 0
  %3616 = vmatpush.bf16.msra.mxu0 0
  %3617 = vmatpush.bf16.msra.mxu0 0
  %3618 = vmatpush.bf16.msra.mxu0 %v3552
  %3619 = vmatmul.bf16.gmra.mxu0 %v3540
  %v3620 = vpop.f32.mrf.mxu0
  %v3621 = vadd.f32 0.0, %v3620
  %v3622 = vpop.f32.mrf.mxu0
  %3623 = vdwg.mxu0
  %3624 = vmatpush.bf16.msra.mxu0 0
  %3625 = vmatpush.bf16.msra.mxu0 0
  %3626 = vmatpush.bf16.msra.mxu0 0
  %3627 = vmatpush.bf16.msra.mxu0 0
  %3628 = vmatpush.bf16.msra.mxu0 0
  %3629 = vmatpush.bf16.msra.mxu0 0
  %3630 = vmatpush.bf16.msra.mxu0 0
  %3631 = vmatpush.bf16.msra.mxu0 %v3555
  %3632 = vmatmul.bf16.gmra.mxu0 %v3540
  %v3633 = vpop.f32.mrf.mxu0
  %v3634 = vadd.f32 0.0, %v3633
  %v3635 = vpop.f32.mrf.mxu0
  %3636 = vdwg.mxu0
  %3637 = vmatpush.bf16.msra.mxu0 0
  %3638 = vmatpush.bf16.msra.mxu0 0
  %3639 = vmatpush.bf16.msra.mxu0 0
  %3640 = vmatpush.bf16.msra.mxu0 0
  %3641 = vmatpush.bf16.msra.mxu0 0
  %3642 = vmatpush.bf16.msra.mxu0 0
  %3643 = vmatpush.bf16.msra.mxu0 0
  %3644 = vmatpush.bf16.msra.mxu0 %v3558
  %3645 = vmatmul.bf16.gmra.mxu0 %v3540
  %v3646 = vpop.f32.mrf.mxu0
  %v3647 = vadd.f32 0.0, %v3646
  %v3648 = vpop.f32.mrf.mxu0
  %3649 = vdwg.mxu0
  %3650 = vmatpush.bf16.msra.mxu0 0
  %3651 = vmatpush.bf16.msra.mxu0 0
  %3652 = vmatpush.bf16.msra.mxu0 0
  %3653 = vmatpush.bf16.msra.mxu0 0
  %3654 = vmatpush.bf16.msra.mxu0 0
  %3655 = vmatpush.bf16.msra.mxu0 0
  %3656 = vmatpush.bf16.msra.mxu0 0
  %3657 = vmatpush.bf16.msra.mxu0 %v3561
  %3658 = vmatmul.bf16.gmra.mxu0 %v3540
  %v3659 = vpop.f32.mrf.mxu0
  %v3660 = vadd.f32 0.0, %v3659
  %v3661 = vpop.f32.mrf.mxu0
  %3662 = vdwg.mxu0
  %3663 = vmatpush.bf16.msra.mxu0 0
  %3664 = vmatpush.bf16.msra.mxu0 0
  %3665 = vmatpush.bf16.msra.mxu0 0
  %3666 = vmatpush.bf16.msra.mxu0 0
  %3667 = vmatpush.bf16.msra.mxu0 0
  %3668 = vmatpush.bf16.msra.mxu0 0
  %3669 = vmatpush.bf16.msra.mxu0 0
  %3670 = vmatpush.bf16.msra.mxu0 %v3564
  %3671 = vmatmul.bf16.gmra.mxu0 %v3540
  %v3672 = vpop.f32.mrf.mxu0
  %v3673 = vadd.f32 0.0, %v3672
  %v3674 = vpop.f32.mrf.mxu0
  %3675 = vdwg.mxu0
  %3676 = vmatpush.bf16.msra.mxu0 0
  %3677 = vmatpush.bf16.msra.mxu0 0
  %3678 = vmatpush.bf16.msra.mxu0 0
  %3679 = vmatpush.bf16.msra.mxu0 0
  %3680 = vmatpush.bf16.msra.mxu0 0
  %3681 = vmatpush.bf16.msra.mxu0 0
  %3682 = vmatpush.bf16.msra.mxu0 0
  %3683 = vmatpush.bf16.msra.mxu0 %v3567
  %3684 = vmatmul.bf16.gmra.mxu0 %v3540
  %v3685 = vpop.f32.mrf.mxu0
  %v3686 = vadd.f32 0.0, %v3685
  %v3687 = vpop.f32.mrf.mxu0
  %3688 = vdwg.mxu0
  %3689 = vmatpush.bf16.msra.mxu0 0
  %3690 = vmatpush.bf16.msra.mxu0 0
  %3691 = vmatpush.bf16.msra.mxu0 0
  %3692 = vmatpush.bf16.msra.mxu0 0
  %3693 = vmatpush.bf16.msra.mxu0 0
  %3694 = vmatpush.bf16.msra.mxu0 0
  %3695 = vmatpush.bf16.msra.mxu0 0
  %3696 = vmatpush.bf16.msra.mxu0 %v3570
  %3697 = vmatmul.bf16.gmra.mxu0 %v3540
  %v3698 = vpop.f32.mrf.mxu0
  %v3699 = vadd.f32 0.0, %v3698
  %v3700 = vpop.f32.mrf.mxu0
  %3701 = vdwg.mxu0
  %v3702 = vadd.f32 %v3464, %v3582
  %v3703 = vadd.f32 %v3465, %v3595
  %v3704 = vadd.f32 %v3466, %v3608
  %v3705 = vadd.f32 %v3467, %v3621
  %v3706 = vadd.f32 %v3468, %v3634
  %v3707 = vadd.f32 %v3469, %v3647
  %v3708 = vadd.f32 %v3470, %v3660
  %v3709 = vadd.f32 %v3471, %v3673
  %v3710 = vadd.f32 %v3472, %v3686
  %v3711 = vadd.f32 %v3473, %v3699
  %v3712 = vld [vmem:[%s2123] sm:$0xff]
  %v3713 = vld [vmem:[%s2123 + $0x8] sm:$0xff]
  %v3714 = vld [vmem:[%s2123 + $0x10] sm:$0x3f]
  %v3715 = vld [vmem:[%s1620] sm:$0xf]
  %3717 = vst [vmem:[#allocation1] ss:$4 sm:$0xff] %v3712
  %s3719 = scalar_lea.vmem [#allocation1], 32
  %3720 = vst [vmem:[%s3719] ss:$4 sm:$0xff] %v3713
  %v3721 = vld.sshfl [vmem:[#allocation1] sm:$0xff pattern:$0x73625140]
  %v3723 = vld.sshfl [vmem:[#allocation1 + $0x8] sm:$0xff pattern:$0x73625140]
  %v3725 = vld.sshfl [vmem:[#allocation1 + $0x10] sm:$0xff pattern:$0x73625140]
  %v3727 = vld.sshfl [vmem:[#allocation1 + $0x18] sm:$0xff pattern:$0x73625140]
  %v3729 = vld.sshfl [vmem:[#allocation1 + $0x20] sm:$0xff pattern:$0x73625140]
  %v3731 = vld.sshfl [vmem:[#allocation1 + $0x28] sm:$0xff pattern:$0x73625140]
  %v3733 = vld.sshfl [vmem:[#allocation1 + $0x30] sm:$0xff pattern:$0x73625140]
  %v3735 = vld.sshfl [vmem:[#allocation1 + $0x38] sm:$0xff pattern:$0x73625140]
  %3738 = vst [vmem:[#allocation1] ss:$4 sm:$0xff] %v3714
  %v3739 = vld.sshfl [vmem:[#allocation1] sm:$0xff pattern:$0x73625140]
  %v3741 = vld.sshfl [vmem:[#allocation1 + $0x8] sm:$0xff pattern:$0x73625140]
  %v3743 = vld.sshfl [vmem:[#allocation1 + $0x10] sm:$0xff pattern:$0x73625140]
  %3745 = vrot.lane.b32.xlu0 %v3721, 57
  %v3746 = vpop.permute.xlu0 %3745
  %3747 = vrot.lane.b32.xlu0 %v3723, 57
  %v3748 = vpop.permute.xlu0 %3747
  %3749 = vrot.lane.b32.xlu0 %v3725, 57
  %v3750 = vpop.permute.xlu0 %3749
  %3751 = vrot.lane.b32.xlu0 %v3727, 57
  %v3752 = vpop.permute.xlu0 %3751
  %3753 = vrot.lane.b32.xlu0 %v3729, 57
  %v3754 = vpop.permute.xlu0 %3753
  %3755 = vrot.lane.b32.xlu0 %v3731, 57
  %v3756 = vpop.permute.xlu0 %3755
  %3757 = vrot.lane.b32.xlu0 %v3733, 57
  %v3758 = vpop.permute.xlu0 %3757
  %3759 = vrot.lane.b32.xlu0 %v3735, 57
  %v3760 = vpop.permute.xlu0 %3759
  %3761 = vrot.lane.b32.xlu0 %v3739, 57
  %v3762 = vpop.permute.xlu0 %3761
  %3763 = vrot.lane.b32.xlu0 %v3741, 57
  %v3764 = vpop.permute.xlu0 %3763
  %3765 = vrot.lane.b32.xlu0 %v3743, 57
  %v3766 = vpop.permute.xlu0 %3765
  %v3767 = vsel %vm1673, %v3746, %v3748
  %v3768 = vsel %vm1673, %v3748, %v3750
  %v3769 = vsel %vm1673, %v3750, %v3752
  %v3770 = vsel %vm1673, %v3752, %v3754
  %v3771 = vsel %vm1673, %v3754, %v3756
  %v3772 = vsel %vm1673, %v3756, %v3758
  %v3773 = vsel %vm1673, %v3758, %v3760
  %v3774 = vsel %vm1673, %v3760, %v3762
  %v3775 = vsel %vm1673, %v3762, %v3764
  %v3776 = vsel %vm1673, %v3764, %v3766
  %v3778 = vsel %vm84, %v3715, 0
  %v3781 = vsel %vm88, %v3767, 0
  %v3784 = vsel %vm88, %v3768, 0
  %v3787 = vsel %vm88, %v3769, 0
  %v3790 = vsel %vm88, %v3770, 0
  %v3793 = vsel %vm88, %v3771, 0
  %v3796 = vsel %vm88, %v3772, 0
  %v3799 = vsel %vm88, %v3773, 0
  %v3802 = vsel %vm88, %v3774, 0
  %v3805 = vsel %vm88, %v3775, 0
  %v3808 = vsel %vm88, %v3776, 0
  %3810 = vmatpush.bf16.msra.mxu0 0
  %3811 = vmatpush.bf16.msra.mxu0 0
  %3812 = vmatpush.bf16.msra.mxu0 0
  %3813 = vmatpush.bf16.msra.mxu0 0
  %3814 = vmatpush.bf16.msra.mxu0 0
  %3815 = vmatpush.bf16.msra.mxu0 0
  %3816 = vmatpush.bf16.msra.mxu0 0
  %3817 = vmatpush.bf16.msra.mxu0 %v3781
  %3818 = vmatmul.bf16.gmra.mxu0 %v3778
  %v3819 = vpop.f32.mrf.mxu0
  %v3820 = vadd.f32 0.0, %v3819
  %v3821 = vpop.f32.mrf.mxu0
  %3822 = vdwg.mxu0
  %3823 = vmatpush.bf16.msra.mxu0 0
  %3824 = vmatpush.bf16.msra.mxu0 0
  %3825 = vmatpush.bf16.msra.mxu0 0
  %3826 = vmatpush.bf16.msra.mxu0 0
  %3827 = vmatpush.bf16.msra.mxu0 0
  %3828 = vmatpush.bf16.msra.mxu0 0
  %3829 = vmatpush.bf16.msra.mxu0 0
  %3830 = vmatpush.bf16.msra.mxu0 %v3784
  %3831 = vmatmul.bf16.gmra.mxu0 %v3778
  %v3832 = vpop.f32.mrf.mxu0
  %v3833 = vadd.f32 0.0, %v3832
  %v3834 = vpop.f32.mrf.mxu0
  %3835 = vdwg.mxu0
  %3836 = vmatpush.bf16.msra.mxu0 0
  %3837 = vmatpush.bf16.msra.mxu0 0
  %3838 = vmatpush.bf16.msra.mxu0 0
  %3839 = vmatpush.bf16.msra.mxu0 0
  %3840 = vmatpush.bf16.msra.mxu0 0
  %3841 = vmatpush.bf16.msra.mxu0 0
  %3842 = vmatpush.bf16.msra.mxu0 0
  %3843 = vmatpush.bf16.msra.mxu0 %v3787
  %3844 = vmatmul.bf16.gmra.mxu0 %v3778
  %v3845 = vpop.f32.mrf.mxu0
  %v3846 = vadd.f32 0.0, %v3845
  %v3847 = vpop.f32.mrf.mxu0
  %3848 = vdwg.mxu0
  %3849 = vmatpush.bf16.msra.mxu0 0
  %3850 = vmatpush.bf16.msra.mxu0 0
  %3851 = vmatpush.bf16.msra.mxu0 0
  %3852 = vmatpush.bf16.msra.mxu0 0
  %3853 = vmatpush.bf16.msra.mxu0 0
  %3854 = vmatpush.bf16.msra.mxu0 0
  %3855 = vmatpush.bf16.msra.mxu0 0
  %3856 = vmatpush.bf16.msra.mxu0 %v3790
  %3857 = vmatmul.bf16.gmra.mxu0 %v3778
  %v3858 = vpop.f32.mrf.mxu0
  %v3859 = vadd.f32 0.0, %v3858
  %v3860 = vpop.f32.mrf.mxu0
  %3861 = vdwg.mxu0
  %3862 = vmatpush.bf16.msra.mxu0 0
  %3863 = vmatpush.bf16.msra.mxu0 0
  %3864 = vmatpush.bf16.msra.mxu0 0
  %3865 = vmatpush.bf16.msra.mxu0 0
  %3866 = vmatpush.bf16.msra.mxu0 0
  %3867 = vmatpush.bf16.msra.mxu0 0
  %3868 = vmatpush.bf16.msra.mxu0 0
  %3869 = vmatpush.bf16.msra.mxu0 %v3793
  %3870 = vmatmul.bf16.gmra.mxu0 %v3778
  %v3871 = vpop.f32.mrf.mxu0
  %v3872 = vadd.f32 0.0, %v3871
  %v3873 = vpop.f32.mrf.mxu0
  %3874 = vdwg.mxu0
  %3875 = vmatpush.bf16.msra.mxu0 0
  %3876 = vmatpush.bf16.msra.mxu0 0
  %3877 = vmatpush.bf16.msra.mxu0 0
  %3878 = vmatpush.bf16.msra.mxu0 0
  %3879 = vmatpush.bf16.msra.mxu0 0
  %3880 = vmatpush.bf16.msra.mxu0 0
  %3881 = vmatpush.bf16.msra.mxu0 0
  %3882 = vmatpush.bf16.msra.mxu0 %v3796
  %3883 = vmatmul.bf16.gmra.mxu0 %v3778
  %v3884 = vpop.f32.mrf.mxu0
  %v3885 = vadd.f32 0.0, %v3884
  %v3886 = vpop.f32.mrf.mxu0
  %3887 = vdwg.mxu0
  %3888 = vmatpush.bf16.msra.mxu0 0
  %3889 = vmatpush.bf16.msra.mxu0 0
  %3890 = vmatpush.bf16.msra.mxu0 0
  %3891 = vmatpush.bf16.msra.mxu0 0
  %3892 = vmatpush.bf16.msra.mxu0 0
  %3893 = vmatpush.bf16.msra.mxu0 0
  %3894 = vmatpush.bf16.msra.mxu0 0
  %3895 = vmatpush.bf16.msra.mxu0 %v3799
  %3896 = vmatmul.bf16.gmra.mxu0 %v3778
  %v3897 = vpop.f32.mrf.mxu0
  %v3898 = vadd.f32 0.0, %v3897
  %v3899 = vpop.f32.mrf.mxu0
  %3900 = vdwg.mxu0
  %3901 = vmatpush.bf16.msra.mxu0 0
  %3902 = vmatpush.bf16.msra.mxu0 0
  %3903 = vmatpush.bf16.msra.mxu0 0
  %3904 = vmatpush.bf16.msra.mxu0 0
  %3905 = vmatpush.bf16.msra.mxu0 0
  %3906 = vmatpush.bf16.msra.mxu0 0
  %3907 = vmatpush.bf16.msra.mxu0 0
  %3908 = vmatpush.bf16.msra.mxu0 %v3802
  %3909 = vmatmul.bf16.gmra.mxu0 %v3778
  %v3910 = vpop.f32.mrf.mxu0
  %v3911 = vadd.f32 0.0, %v3910
  %v3912 = vpop.f32.mrf.mxu0
  %3913 = vdwg.mxu0
  %3914 = vmatpush.bf16.msra.mxu0 0
  %3915 = vmatpush.bf16.msra.mxu0 0
  %3916 = vmatpush.bf16.msra.mxu0 0
  %3917 = vmatpush.bf16.msra.mxu0 0
  %3918 = vmatpush.bf16.msra.mxu0 0
  %3919 = vmatpush.bf16.msra.mxu0 0
  %3920 = vmatpush.bf16.msra.mxu0 0
  %3921 = vmatpush.bf16.msra.mxu0 %v3805
  %3922 = vmatmul.bf16.gmra.mxu0 %v3778
  %v3923 = vpop.f32.mrf.mxu0
  %v3924 = vadd.f32 0.0, %v3923
  %v3925 = vpop.f32.mrf.mxu0
  %3926 = vdwg.mxu0
  %3927 = vmatpush.bf16.msra.mxu0 0
  %3928 = vmatpush.bf16.msra.mxu0 0
  %3929 = vmatpush.bf16.msra.mxu0 0
  %3930 = vmatpush.bf16.msra.mxu0 0
  %3931 = vmatpush.bf16.msra.mxu0 0
  %3932 = vmatpush.bf16.msra.mxu0 0
  %3933 = vmatpush.bf16.msra.mxu0 0
  %3934 = vmatpush.bf16.msra.mxu0 %v3808
  %3935 = vmatmul.bf16.gmra.mxu0 %v3778
  %v3936 = vpop.f32.mrf.mxu0
  %v3937 = vadd.f32 0.0, %v3936
  %v3938 = vpop.f32.mrf.mxu0
  %3939 = vdwg.mxu0
  %v3940 = vadd.f32 %v3702, %v3820
  %v3941 = vadd.f32 %v3703, %v3833
  %v3942 = vadd.f32 %v3704, %v3846
  %v3943 = vadd.f32 %v3705, %v3859
  %v3944 = vadd.f32 %v3706, %v3872
  %v3945 = vadd.f32 %v3707, %v3885
  %v3946 = vadd.f32 %v3708, %v3898
  %v3947 = vadd.f32 %v3709, %v3911
  %v3948 = vadd.f32 %v3710, %v3924
  %v3949 = vadd.f32 %v3711, %v3937
  %v3950 = vld [vmem:[%s2123] sm:$0xff]
  %v3951 = vld [vmem:[%s2123 + $0x8] sm:$0xff]
  %v3952 = vld [vmem:[%s2123 + $0x10] sm:$0x3f]
  %v3953 = vld [vmem:[%s1860] sm:$0xf]
  %3955 = vst [vmem:[#allocation1] ss:$4 sm:$0xff] %v3950
  %s3957 = scalar_lea.vmem [#allocation1], 32
  %3958 = vst [vmem:[%s3957] ss:$4 sm:$0xff] %v3951
  %v3959 = vld.sshfl [vmem:[#allocation1] sm:$0xff pattern:$0x73625140]
  %v3961 = vld.sshfl [vmem:[#allocation1 + $0x8] sm:$0xff pattern:$0x73625140]
  %v3963 = vld.sshfl [vmem:[#allocation1 + $0x10] sm:$0xff pattern:$0x73625140]
  %v3965 = vld.sshfl [vmem:[#allocation1 + $0x18] sm:$0xff pattern:$0x73625140]
  %v3967 = vld.sshfl [vmem:[#allocation1 + $0x20] sm:$0xff pattern:$0x73625140]
  %v3969 = vld.sshfl [vmem:[#allocation1 + $0x28] sm:$0xff pattern:$0x73625140]
  %v3971 = vld.sshfl [vmem:[#allocation1 + $0x30] sm:$0xff pattern:$0x73625140]
  %v3973 = vld.sshfl [vmem:[#allocation1 + $0x38] sm:$0xff pattern:$0x73625140]
  %3976 = vst [vmem:[#allocation1] ss:$4 sm:$0xff] %v3952
  %v3977 = vld.sshfl [vmem:[#allocation1] sm:$0xff pattern:$0x73625140]
  %v3979 = vld.sshfl [vmem:[#allocation1 + $0x8] sm:$0xff pattern:$0x73625140]
  %v3981 = vld.sshfl [vmem:[#allocation1 + $0x10] sm:$0xff pattern:$0x73625140]
  %3983 = vrot.lane.b32.xlu0 %v3959, 56
  %v3984 = vpop.permute.xlu0 %3983
  %3985 = vrot.lane.b32.xlu0 %v3961, 56
  %v3986 = vpop.permute.xlu0 %3985
  %3987 = vrot.lane.b32.xlu0 %v3963, 56
  %v3988 = vpop.permute.xlu0 %3987
  %3989 = vrot.lane.b32.xlu0 %v3965, 56
  %v3990 = vpop.permute.xlu0 %3989
  %3991 = vrot.lane.b32.xlu0 %v3967, 56
  %v3992 = vpop.permute.xlu0 %3991
  %3993 = vrot.lane.b32.xlu0 %v3969, 56
  %v3994 = vpop.permute.xlu0 %3993
  %3995 = vrot.lane.b32.xlu0 %v3971, 56
  %v3996 = vpop.permute.xlu0 %3995
  %3997 = vrot.lane.b32.xlu0 %v3973, 56
  %v3998 = vpop.permute.xlu0 %3997
  %3999 = vrot.lane.b32.xlu0 %v3977, 56
  %v4000 = vpop.permute.xlu0 %3999
  %4001 = vrot.lane.b32.xlu0 %v3979, 56
  %v4002 = vpop.permute.xlu0 %4001
  %4003 = vrot.lane.b32.xlu0 %v3981, 56
  %v4004 = vpop.permute.xlu0 %4003
  %v4005 = vsel %vm1913, %v3984, %v3986
  %v4006 = vsel %vm1913, %v3986, %v3988
  %v4007 = vsel %vm1913, %v3988, %v3990
  %v4008 = vsel %vm1913, %v3990, %v3992
  %v4009 = vsel %vm1913, %v3992, %v3994
  %v4010 = vsel %vm1913, %v3994, %v3996
  %v4011 = vsel %vm1913, %v3996, %v3998
  %v4012 = vsel %vm1913, %v3998, %v4000
  %v4013 = vsel %vm1913, %v4000, %v4002
  %v4014 = vsel %vm1913, %v4002, %v4004
  %v4016 = vsel %vm84, %v3953, 0
  %v4019 = vsel %vm88, %v4005, 0
  %v4022 = vsel %vm88, %v4006, 0
  %v4025 = vsel %vm88, %v4007, 0
  %v4028 = vsel %vm88, %v4008, 0
  %v4031 = vsel %vm88, %v4009, 0
  %v4034 = vsel %vm88, %v4010, 0
  %v4037 = vsel %vm88, %v4011, 0
  %v4040 = vsel %vm88, %v4012, 0
  %v4043 = vsel %vm88, %v4013, 0
  %v4046 = vsel %vm88, %v4014, 0
  %4048 = vmatpush.bf16.msra.mxu0 0
  %4049 = vmatpush.bf16.msra.mxu0 0
  %4050 = vmatpush.bf16.msra.mxu0 0
  %4051 = vmatpush.bf16.msra.mxu0 0
  %4052 = vmatpush.bf16.msra.mxu0 0
  %4053 = vmatpush.bf16.msra.mxu0 0
  %4054 = vmatpush.bf16.msra.mxu0 0
  %4055 = vmatpush.bf16.msra.mxu0 %v4019
  %4056 = vmatmul.bf16.gmra.mxu0 %v4016
  %v4057 = vpop.f32.mrf.mxu0
  %v4058 = vadd.f32 0.0, %v4057
  %v4059 = vpop.f32.mrf.mxu0
  %4060 = vdwg.mxu0
  %4061 = vmatpush.bf16.msra.mxu0 0
  %4062 = vmatpush.bf16.msra.mxu0 0
  %4063 = vmatpush.bf16.msra.mxu0 0
  %4064 = vmatpush.bf16.msra.mxu0 0
  %4065 = vmatpush.bf16.msra.mxu0 0
  %4066 = vmatpush.bf16.msra.mxu0 0
  %4067 = vmatpush.bf16.msra.mxu0 0
  %4068 = vmatpush.bf16.msra.mxu0 %v4022
  %4069 = vmatmul.bf16.gmra.mxu0 %v4016
  %v4070 = vpop.f32.mrf.mxu0
  %v4071 = vadd.f32 0.0, %v4070
  %v4072 = vpop.f32.mrf.mxu0
  %4073 = vdwg.mxu0
  %4074 = vmatpush.bf16.msra.mxu0 0
  %4075 = vmatpush.bf16.msra.mxu0 0
  %4076 = vmatpush.bf16.msra.mxu0 0
  %4077 = vmatpush.bf16.msra.mxu0 0
  %4078 = vmatpush.bf16.msra.mxu0 0
  %4079 = vmatpush.bf16.msra.mxu0 0
  %4080 = vmatpush.bf16.msra.mxu0 0
  %4081 = vmatpush.bf16.msra.mxu0 %v4025
  %4082 = vmatmul.bf16.gmra.mxu0 %v4016
  %v4083 = vpop.f32.mrf.mxu0
  %v4084 = vadd.f32 0.0, %v4083
  %v4085 = vpop.f32.mrf.mxu0
  %4086 = vdwg.mxu0
  %4087 = vmatpush.bf16.msra.mxu0 0
  %4088 = vmatpush.bf16.msra.mxu0 0
  %4089 = vmatpush.bf16.msra.mxu0 0
  %4090 = vmatpush.bf16.msra.mxu0 0
  %4091 = vmatpush.bf16.msra.mxu0 0
  %4092 = vmatpush.bf16.msra.mxu0 0
  %4093 = vmatpush.bf16.msra.mxu0 0
  %4094 = vmatpush.bf16.msra.mxu0 %v4028
  %4095 = vmatmul.bf16.gmra.mxu0 %v4016
  %v4096 = vpop.f32.mrf.mxu0
  %v4097 = vadd.f32 0.0, %v4096
  %v4098 = vpop.f32.mrf.mxu0
  %4099 = vdwg.mxu0
  %4100 = vmatpush.bf16.msra.mxu0 0
  %4101 = vmatpush.bf16.msra.mxu0 0
  %4102 = vmatpush.bf16.msra.mxu0 0
  %4103 = vmatpush.bf16.msra.mxu0 0
  %4104 = vmatpush.bf16.msra.mxu0 0
  %4105 = vmatpush.bf16.msra.mxu0 0
  %4106 = vmatpush.bf16.msra.mxu0 0
  %4107 = vmatpush.bf16.msra.mxu0 %v4031
  %4108 = vmatmul.bf16.gmra.mxu0 %v4016
  %v4109 = vpop.f32.mrf.mxu0
  %v4110 = vadd.f32 0.0, %v4109
  %v4111 = vpop.f32.mrf.mxu0
  %4112 = vdwg.mxu0
  %4113 = vmatpush.bf16.msra.mxu0 0
  %4114 = vmatpush.bf16.msra.mxu0 0
  %4115 = vmatpush.bf16.msra.mxu0 0
  %4116 = vmatpush.bf16.msra.mxu0 0
  %4117 = vmatpush.bf16.msra.mxu0 0
  %4118 = vmatpush.bf16.msra.mxu0 0
  %4119 = vmatpush.bf16.msra.mxu0 0
  %4120 = vmatpush.bf16.msra.mxu0 %v4034
  %4121 = vmatmul.bf16.gmra.mxu0 %v4016
  %v4122 = vpop.f32.mrf.mxu0
  %v4123 = vadd.f32 0.0, %v4122
  %v4124 = vpop.f32.mrf.mxu0
  %4125 = vdwg.mxu0
  %4126 = vmatpush.bf16.msra.mxu0 0
  %4127 = vmatpush.bf16.msra.mxu0 0
  %4128 = vmatpush.bf16.msra.mxu0 0
  %4129 = vmatpush.bf16.msra.mxu0 0
  %4130 = vmatpush.bf16.msra.mxu0 0
  %4131 = vmatpush.bf16.msra.mxu0 0
  %4132 = vmatpush.bf16.msra.mxu0 0
  %4133 = vmatpush.bf16.msra.mxu0 %v4037
  %4134 = vmatmul.bf16.gmra.mxu0 %v4016
  %v4135 = vpop.f32.mrf.mxu0
  %v4136 = vadd.f32 0.0, %v4135
  %v4137 = vpop.f32.mrf.mxu0
  %4138 = vdwg.mxu0
  %4139 = vmatpush.bf16.msra.mxu0 0
  %4140 = vmatpush.bf16.msra.mxu0 0
  %4141 = vmatpush.bf16.msra.mxu0 0
  %4142 = vmatpush.bf16.msra.mxu0 0
  %4143 = vmatpush.bf16.msra.mxu0 0
  %4144 = vmatpush.bf16.msra.mxu0 0
  %4145 = vmatpush.bf16.msra.mxu0 0
  %4146 = vmatpush.bf16.msra.mxu0 %v4040
  %4147 = vmatmul.bf16.gmra.mxu0 %v4016
  %v4148 = vpop.f32.mrf.mxu0
  %v4149 = vadd.f32 0.0, %v4148
  %v4150 = vpop.f32.mrf.mxu0
  %4151 = vdwg.mxu0
  %4152 = vmatpush.bf16.msra.mxu0 0
  %4153 = vmatpush.bf16.msra.mxu0 0
  %4154 = vmatpush.bf16.msra.mxu0 0
  %4155 = vmatpush.bf16.msra.mxu0 0
  %4156 = vmatpush.bf16.msra.mxu0 0
  %4157 = vmatpush.bf16.msra.mxu0 0
  %4158 = vmatpush.bf16.msra.mxu0 0
  %4159 = vmatpush.bf16.msra.mxu0 %v4043
  %4160 = vmatmul.bf16.gmra.mxu0 %v4016
  %v4161 = vpop.f32.mrf.mxu0
  %v4162 = vadd.f32 0.0, %v4161
  %v4163 = vpop.f32.mrf.mxu0
  %4164 = vdwg.mxu0
  %4165 = vmatpush.bf16.msra.mxu0 0
  %4166 = vmatpush.bf16.msra.mxu0 0
  %4167 = vmatpush.bf16.msra.mxu0 0
  %4168 = vmatpush.bf16.msra.mxu0 0
  %4169 = vmatpush.bf16.msra.mxu0 0
  %4170 = vmatpush.bf16.msra.mxu0 0
  %4171 = vmatpush.bf16.msra.mxu0 0
  %4172 = vmatpush.bf16.msra.mxu0 %v4046
  %4173 = vmatmul.bf16.gmra.mxu0 %v4016
  %v4174 = vpop.f32.mrf.mxu0
  %v4175 = vadd.f32 0.0, %v4174
  %v4176 = vpop.f32.mrf.mxu0
  %4177 = vdwg.mxu0
  %v4178 = vadd.f32 %v3940, %v4058
  %v4179 = vadd.f32 %v3941, %v4071
  %v4180 = vadd.f32 %v3942, %v4084
  %v4181 = vadd.f32 %v3943, %v4097
  %v4182 = vadd.f32 %v3944, %v4110
  %v4183 = vadd.f32 %v3945, %v4123
  %v4184 = vadd.f32 %v3946, %v4136
  %v4185 = vadd.f32 %v3947, %v4149
  %v4186 = vadd.f32 %v3948, %v4162
  %v4187 = vadd.f32 %v3949, %v4175
  %v4188 = vld [vmem:[%s2] sm:$0xff]
  %4190 = vset.pattern.permute.xlu0 0
  %4191 = vperm.xlu0 %4190, %v4188
  %v4192 = vpop.permute.xlu0 %4191
  %v4194 = vadd.f32 %v4178, %v4192
  %v4195 = vadd.f32 %v4179, %v4192
  %v4196 = vadd.f32 %v4180, %v4192
  %v4197 = vadd.f32 %v4181, %v4192
  %v4198 = vadd.f32 %v4182, %v4192
  %v4199 = vadd.f32 %v4183, %v4192
  %v4200 = vadd.f32 %v4184, %v4192
  %v4201 = vadd.f32 %v4185, %v4192
  %v4202 = vadd.f32 %v4186, %v4192
  %v4203 = vadd.f32 %v4187, %v4192
  %s4204 = scalar_lea.vmem %s3, 80
  %4205 = vst [vmem:[%s4204] sm:$0xff] %v4194
  %4206 = vst [vmem:[%s4204 + $0x8] sm:$0xff] %v4195
  %4207 = vst [vmem:[%s4204 + $0x10] sm:$0xff] %v4196
  %4208 = vst [vmem:[%s4204 + $0x18] sm:$0xff] %v4197
  %4209 = vst [vmem:[%s4204 + $0x20] sm:$0xff] %v4198
  %4210 = vst [vmem:[%s4204 + $0x28] sm:$0xff] %v4199
  %4211 = vst [vmem:[%s4204 + $0x30] sm:$0xff] %v4200
  %4212 = vst [vmem:[%s4204 + $0x38] sm:$0xff] %v4201
  %4213 = vst [vmem:[%s4204 + $0x40] sm:$0xff] %v4202
  %4214 = vst [vmem:[%s4204 + $0x48] sm:$0xff] %v4203
  // Predicated region
  $region14: #{conv_transpose2d_forward.1} parent=0 // pred_check
    _
  $region15: #{conv_transpose2d_forward.1} parent=0 // pred_check_branch
    %4216 = sbr.rel (0) target = $region17
  $region16: #{conv_transpose2d_forward.1} parent=0 // pred_region
    _
  $region17: #{conv_transpose2d_forward.1} parent=0 // pred_fallthru
    _
  // Predicated region
  $region18: #{conv_transpose2d_forward.1} parent=0 // pred_check
    _
  $region19: #{conv_transpose2d_forward.1} parent=0 // pred_check_branch
    %4218 = sbr.rel (0) target = $region21
  $region20: #{conv_transpose2d_forward.1} parent=0 // pred_region
    _
  $region21: #{conv_transpose2d_forward.1} parent=0 // pred_fallthru
    _

</llo_original>
